<compile_context>
chip_gen: v7x
topology: tpu7x:2x2x1
jax: 0.10.0
libtpu: 0.0.40
codegen_flags: <defaults>
</compile_context>

<pallas_src>
import jax
import jax.numpy as jnp
import numpy as np
from jax import lax
from jax.experimental import pallas as pl
from jax.experimental.pallas import tpu as pltpu

COL0 = 8  # sublane-aligned column offset of the image interior inside the pad scratch


# ----------------------------- Pallas kernel --------------------------------

def _fused_reconstruction_kernel(x_ref, w0_ref, b0_ref, w1_ref, b1_ref,
                                 w2_ref, b2_ref, o_ref, pad_ref, patch_ref):
    # x_ref:   (1, H, W, C)          one NHWC image (unpadded)
    # w0_ref:  (9*C, C)              conv0 weights, rows ordered (dy, dx, cin)
    # b0_ref:  (1, C)
    # w1_ref:  (9*C, C1)             conv1 weights
    # b1_ref:  (1, C1)
    # w2_ref:  (C1, 1)               conv2 (1x1) weights
    # b2_ref:  (1, 1)
    # o_ref:   (1, H*W, 1)
    # pad_ref:   (H+2, COL0+W+8, C)  zero-bordered scratch (reused for out0)
    # patch_ref: (H*W, 9*C)          im2col scratch (reused by both 3x3 convs)
    H, W, C = x_ref.shape[1], x_ref.shape[2], x_ref.shape[3]
    HW = H * W

    def im2col():
        # One-time copies of the 9 shifted views into the patch matrix.
        for dy in range(3):
            for dx in range(3):
                col = (dy * 3 + dx) * C
                patch_ref[:, col:col + C] = (
                    pad_ref[dy:dy + H, COL0 - 1 + dx:COL0 - 1 + dx + W, :]
                    .reshape(HW, C))

    # ---- conv0: 3x3 "same", C -> C ------------------------------------------
    pad_ref[...] = jnp.zeros_like(pad_ref)             # zero border / margins
    pad_ref[1:H + 1, COL0:COL0 + W, :] = x_ref[0]      # tile-aligned interior store
    im2col()
    out0 = jnp.dot(patch_ref[...], w0_ref[...],
                   preferred_element_type=jnp.float32) + b0_ref[...]

    # ---- conv1: 3x3 "same", C -> C1 (reuse pad/patch scratch; border stays 0)
    pad_ref[1:H + 1, COL0:COL0 + W, :] = out0.reshape(H, W, C)
    im2col()
    out1 = jnp.dot(patch_ref[...], w1_ref[...],
                   preferred_element_type=jnp.float32) + b1_ref[...]

    # ---- conv2: 1x1, C1 -> 1 --------------------------------------------------
    out2 = jnp.dot(out1, w2_ref[...],
                   preferred_element_type=jnp.float32) + b2_ref[...]
    o_ref[...] = out2.reshape(1, HW, 1).astype(o_ref.dtype)


# ------------------------------ Wrapper --------------------------------------

def image_reconstruction_forward(x_nchw, params):
    """Pallas-fused equivalent of ImageReconstruction.forward. NCHW in / NCHW out."""
    N, C, H, W = x_nchw.shape
    C1 = params["w1"].shape[3]                 # 32
    assert params["w0"].shape[3] == C          # conv0 is channel preserving (64 -> 64)

    x = jnp.transpose(x_nchw, (0, 2, 3, 1))    # NCHW -> NHWC
    w0f = params["w0"].reshape(9 * C, C)       # (576, 64)  rows ordered (dy, dx, cin)
    w1f = params["w1"].reshape(9 * C, C1)      # (576, 32)
    w2 = params["w2"].reshape(C1, 1)           # (32, 1)
    b0 = params["b0"].reshape(1, C)
    b1 = params["b1"].reshape(1, C1)
    b2 = params["b2"].reshape(1, 1)

    out = pl.pallas_call(
        _fused_reconstruction_kernel,
        out_shape=jax.ShapeDtypeStruct((N, H * W, 1), jnp.float32),
        grid=(N,),
        in_specs=[
            pl.BlockSpec((1, H, W, C), lambda n: (n, 0, 0, 0)),
            pl.BlockSpec((9 * C, C), lambda n: (0, 0)),
            pl.BlockSpec((1, C), lambda n: (0, 0)),
            pl.BlockSpec((9 * C, C1), lambda n: (0, 0)),
            pl.BlockSpec((1, C1), lambda n: (0, 0)),
            pl.BlockSpec((C1, 1), lambda n: (0, 0)),
            pl.BlockSpec((1, 1), lambda n: (0, 0)),
        ],
        out_specs=pl.BlockSpec((1, H * W, 1), lambda n: (n, 0, 0)),
        scratch_shapes=[
            pltpu.VMEM((H + 2, COL0 + W + 8, C), jnp.float32),   # padded image / out0
            pltpu.VMEM((H * W, 9 * C), jnp.float32),             # im2col patch matrix
        ],
        compiler_params=pltpu.CompilerParams(
            dimension_semantics=("parallel",),   # images independent -> v7x megacore
        ),
    )(x, w0f, b0, w1f, b1, w2, b2)

    return out.reshape(N, H, W)[:, None, :, :]   # (N, H*W, 1) -> (N, 1, H, W)


# ------------------------------ Reference ------------------------------------

def _conv_ref(x_nhwc, w_hwio, b, pad):
    y = lax.conv_general_dilated(
        x_nhwc, w_hwio, window_strides=(1, 1),
        padding=[(pad, pad), (pad, pad)],
        dimension_numbers=("NHWC", "HWIO", "NHWC"))
    return y + b.reshape(1, 1, 1, -1)


def reference_forward(x_nchw, params):
    x = jnp.transpose(x_nchw, (0, 2, 3, 1))
    out0 = _conv_ref(x, params["w0"], params["b0"], 1)
    out1 = _conv_ref(out0, params["w1"], params["b1"], 1)
    out2 = _conv_ref(out1, params["w2"], params["b2"], 0)
    return jnp.transpose(out2, (0, 3, 1, 2))


# -------------------------------- Main ----------------------------------------

def init_params(key):
    ks = jax.random.split(key, 6)
    # Weights stored in HWIO; equivalent to PyTorch OIHW shapes
    # (64,64,3,3), (32,64,3,3), (1,32,1,1) with deterministic random values.
    return {
        "w0": 0.05 * jax.random.normal(ks[0], (3, 3, 64, 64), jnp.float32),
        "b0": 0.05 * jax.random.normal(ks[1], (64,), jnp.float32),
        "w1": 0.05 * jax.random.normal(ks[2], (3, 3, 64, 32), jnp.float32),
        "b1": 0.05 * jax.random.normal(ks[3], (32,), jnp.float32),
        "w2": 0.05 * jax.random.normal(ks[4], (1, 1, 32, 1), jnp.float32),
        "b2": 0.05 * jax.random.normal(ks[5], (1,), jnp.float32),
    }


if __name__ == "__main__":
    key = jax.random.PRNGKey(0)
    k_x, k_p = jax.random.split(key)

    N, C, H, W = 2, 64, 16, 16           # module requires 64 input channels
    x = jax.random.normal(k_x, (N, C, H, W), jnp.float32)
    params = init_params(k_p)

    out = jax.block_until_ready(image_reconstruction_forward(x, params))
    assert out.shape == (N, 1, H, W), out.shape

    ref = jax.block_until_ready(reference_forward(x, params))
    np.testing.assert_allclose(np.asarray(out), np.asarray(ref),
                               rtol=1e-4, atol=1e-4)

    print("KERNEL_OK")
</pallas_src>

<mosaic_0001>
module attributes {stable_mosaic.version = 11 : i64} {
  func.func @_fused_reconstruction_kernel(%arg0: i32, %arg1: memref<1x16x16x64xf32, #tpu.memory_space<vmem>>, %arg2: memref<576x64xf32, #tpu.memory_space<vmem>>, %arg3: memref<1x64xf32, #tpu.memory_space<vmem>>, %arg4: memref<576x32xf32, #tpu.memory_space<vmem>>, %arg5: memref<1x32xf32, #tpu.memory_space<vmem>>, %arg6: memref<32x1xf32, #tpu.memory_space<vmem>>, %arg7: memref<1x1xf32, #tpu.memory_space<vmem>>, %arg8: memref<1x256x1xf32, #tpu.memory_space<vmem>>, %arg9: memref<18x32x64xf32, #tpu.memory_space<vmem>>, %arg10: memref<256x576xf32, #tpu.memory_space<vmem>>) attributes {dimension_semantics = [#tpu.dimension_semantics<parallel>], iteration_bounds = array<i64: 2>, scalar_prefetch = 0 : i64, scratch_operands = 2 : i64, tpu.core_type = #tpu.core_type<tc>, window_params = [{transform_indices = @transform_0, window_bounds = array<i64: 1, 16, 16, 64>}, {pipeline_mode = #tpu.pipeline_mode<synchronous>, transform_indices = @transform_1, window_bounds = array<i64: 576, 64>}, {pipeline_mode = #tpu.pipeline_mode<synchronous>, transform_indices = @transform_2, window_bounds = array<i64: 1, 64>}, {pipeline_mode = #tpu.pipeline_mode<synchronous>, transform_indices = @transform_3, window_bounds = array<i64: 576, 32>}, {pipeline_mode = #tpu.pipeline_mode<synchronous>, transform_indices = @transform_4, window_bounds = array<i64: 1, 32>}, {pipeline_mode = #tpu.pipeline_mode<synchronous>, transform_indices = @transform_5, window_bounds = array<i64: 32, 1>}, {pipeline_mode = #tpu.pipeline_mode<synchronous>, transform_indices = @transform_6, window_bounds = array<i64: 1, 1>}, {transform_indices = @transform_7, window_bounds = array<i64: 1, 256, 1>}]} {
    %cst = arith.constant 0.000000e+00 : f32
    %0 = vector.broadcast %cst : f32 to vector<18x32x64xf32>
    %c0 = arith.constant 0 : index
    %c0_0 = arith.constant 0 : index
    %c0_1 = arith.constant 0 : index
    %1 = vector.load %arg9[%c0, %c0_0, %c0_1] : memref<18x32x64xf32, #tpu.memory_space<vmem>>, vector<18x32x64xf32>
    tpu.vector_store %arg9[%c0, %c0_0, %c0_1], %0 {strides = array<i32>} : memref<18x32x64xf32, #tpu.memory_space<vmem>>, vector<18x32x64xf32>,
    %c0_2 = arith.constant 0 : index
    %c0_3 = arith.constant 0 : index
    %c0_4 = arith.constant 0 : index
    %c0_5 = arith.constant 0 : index
    %2 = vector.load %arg1[%c0_2, %c0_3, %c0_4, %c0_5] : memref<1x16x16x64xf32, #tpu.memory_space<vmem>>, vector<1x16x16x64xf32>
    %3 = vector.shape_cast %2 : vector<1x16x16x64xf32> to vector<16x16x64xf32>
    %c1 = arith.constant 1 : index
    %c8 = arith.constant 8 : index
    %c0_6 = arith.constant 0 : index
    %4 = vector.load %arg9[%c1, %c8, %c0_6] : memref<18x32x64xf32, #tpu.memory_space<vmem>>, vector<16x16x64xf32>
    tpu.vector_store %arg9[%c1, %c8, %c0_6], %3 {strides = array<i32>} : memref<18x32x64xf32, #tpu.memory_space<vmem>>, vector<16x16x64xf32>,
    %c0_7 = arith.constant 0 : index
    %c7 = arith.constant 7 : index
    %c0_8 = arith.constant 0 : index
    %5 = vector.load %arg9[%c0_7, %c7, %c0_8] : memref<18x32x64xf32, #tpu.memory_space<vmem>>, vector<16x16x64xf32>
    %6 = vector.shape_cast %5 : vector<16x16x64xf32> to vector<256x64xf32>
    %c0_9 = arith.constant 0 : index
    %c0_10 = arith.constant 0 : index
    %7 = vector.load %arg10[%c0_9, %c0_10] : memref<256x576xf32, #tpu.memory_space<vmem>>, vector<256x64xf32>
    tpu.vector_store %arg10[%c0_9, %c0_10], %6 {strides = array<i32>} : memref<256x576xf32, #tpu.memory_space<vmem>>, vector<256x64xf32>,
    %c0_11 = arith.constant 0 : index
    %c8_12 = arith.constant 8 : index
    %c0_13 = arith.constant 0 : index
    %8 = vector.load %arg9[%c0_11, %c8_12, %c0_13] : memref<18x32x64xf32, #tpu.memory_space<vmem>>, vector<16x16x64xf32>
    %9 = vector.shape_cast %8 : vector<16x16x64xf32> to vector<256x64xf32>
    %c0_14 = arith.constant 0 : index
    %c64 = arith.constant 64 : index
    %10 = vector.load %arg10[%c0_14, %c64] : memref<256x576xf32, #tpu.memory_space<vmem>>, vector<256x64xf32>
    tpu.vector_store %arg10[%c0_14, %c64], %9 {strides = array<i32>} : memref<256x576xf32, #tpu.memory_space<vmem>>, vector<256x64xf32>,
    %c0_15 = arith.constant 0 : index
    %c9 = arith.constant 9 : index
    %c0_16 = arith.constant 0 : index
    %11 = vector.load %arg9[%c0_15, %c9, %c0_16] : memref<18x32x64xf32, #tpu.memory_space<vmem>>, vector<16x16x64xf32>
    %12 = vector.shape_cast %11 : vector<16x16x64xf32> to vector<256x64xf32>
    %c0_17 = arith.constant 0 : index
    %c128 = arith.constant 128 : index
    %13 = vector.load %arg10[%c0_17, %c128] : memref<256x576xf32, #tpu.memory_space<vmem>>, vector<256x64xf32>
    tpu.vector_store %arg10[%c0_17, %c128], %12 {strides = array<i32>} : memref<256x576xf32, #tpu.memory_space<vmem>>, vector<256x64xf32>,
    %c1_18 = arith.constant 1 : index
    %c7_19 = arith.constant 7 : index
    %c0_20 = arith.constant 0 : index
    %14 = vector.load %arg9[%c1_18, %c7_19, %c0_20] : memref<18x32x64xf32, #tpu.memory_space<vmem>>, vector<16x16x64xf32>
    %15 = vector.shape_cast %14 : vector<16x16x64xf32> to vector<256x64xf32>
    %c0_21 = arith.constant 0 : index
    %c192 = arith.constant 192 : index
    %16 = vector.load %arg10[%c0_21, %c192] : memref<256x576xf32, #tpu.memory_space<vmem>>, vector<256x64xf32>
    tpu.vector_store %arg10[%c0_21, %c192], %15 {strides = array<i32>} : memref<256x576xf32, #tpu.memory_space<vmem>>, vector<256x64xf32>,
    %c1_22 = arith.constant 1 : index
    %c8_23 = arith.constant 8 : index
    %c0_24 = arith.constant 0 : index
    %17 = vector.load %arg9[%c1_22, %c8_23, %c0_24] : memref<18x32x64xf32, #tpu.memory_space<vmem>>, vector<16x16x64xf32>
    %18 = vector.shape_cast %17 : vector<16x16x64xf32> to vector<256x64xf32>
    %c0_25 = arith.constant 0 : index
    %c256 = arith.constant 256 : index
    %19 = vector.load %arg10[%c0_25, %c256] : memref<256x576xf32, #tpu.memory_space<vmem>>, vector<256x64xf32>
    tpu.vector_store %arg10[%c0_25, %c256], %18 {strides = array<i32>} : memref<256x576xf32, #tpu.memory_space<vmem>>, vector<256x64xf32>,
    %c1_26 = arith.constant 1 : index
    %c9_27 = arith.constant 9 : index
    %c0_28 = arith.constant 0 : index
    %20 = vector.load %arg9[%c1_26, %c9_27, %c0_28] : memref<18x32x64xf32, #tpu.memory_space<vmem>>, vector<16x16x64xf32>
    %21 = vector.shape_cast %20 : vector<16x16x64xf32> to vector<256x64xf32>
    %c0_29 = arith.constant 0 : index
    %c320 = arith.constant 320 : index
    %22 = vector.load %arg10[%c0_29, %c320] : memref<256x576xf32, #tpu.memory_space<vmem>>, vector<256x64xf32>
    tpu.vector_store %arg10[%c0_29, %c320], %21 {strides = array<i32>} : memref<256x576xf32, #tpu.memory_space<vmem>>, vector<256x64xf32>,
    %c2 = arith.constant 2 : index
    %c7_30 = arith.constant 7 : index
    %c0_31 = arith.constant 0 : index
    %23 = vector.load %arg9[%c2, %c7_30, %c0_31] : memref<18x32x64xf32, #tpu.memory_space<vmem>>, vector<16x16x64xf32>
    %24 = vector.shape_cast %23 : vector<16x16x64xf32> to vector<256x64xf32>
    %c0_32 = arith.constant 0 : index
    %c384 = arith.constant 384 : index
    %25 = vector.load %arg10[%c0_32, %c384] : memref<256x576xf32, #tpu.memory_space<vmem>>, vector<256x64xf32>
    tpu.vector_store %arg10[%c0_32, %c384], %24 {strides = array<i32>} : memref<256x576xf32, #tpu.memory_space<vmem>>, vector<256x64xf32>,
    %c2_33 = arith.constant 2 : index
    %c8_34 = arith.constant 8 : index
    %c0_35 = arith.constant 0 : index
    %26 = vector.load %arg9[%c2_33, %c8_34, %c0_35] : memref<18x32x64xf32, #tpu.memory_space<vmem>>, vector<16x16x64xf32>
    %27 = vector.shape_cast %26 : vector<16x16x64xf32> to vector<256x64xf32>
    %c0_36 = arith.constant 0 : index
    %c448 = arith.constant 448 : index
    %28 = vector.load %arg10[%c0_36, %c448] : memref<256x576xf32, #tpu.memory_space<vmem>>, vector<256x64xf32>
    tpu.vector_store %arg10[%c0_36, %c448], %27 {strides = array<i32>} : memref<256x576xf32, #tpu.memory_space<vmem>>, vector<256x64xf32>,
    %c2_37 = arith.constant 2 : index
    %c9_38 = arith.constant 9 : index
    %c0_39 = arith.constant 0 : index
    %29 = vector.load %arg9[%c2_37, %c9_38, %c0_39] : memref<18x32x64xf32, #tpu.memory_space<vmem>>, vector<16x16x64xf32>
    %30 = vector.shape_cast %29 : vector<16x16x64xf32> to vector<256x64xf32>
    %c0_40 = arith.constant 0 : index
    %c512 = arith.constant 512 : index
    %31 = vector.load %arg10[%c0_40, %c512] : memref<256x576xf32, #tpu.memory_space<vmem>>, vector<256x64xf32>
    tpu.vector_store %arg10[%c0_40, %c512], %30 {strides = array<i32>} : memref<256x576xf32, #tpu.memory_space<vmem>>, vector<256x64xf32>,
    %c0_41 = arith.constant 0 : index
    %c0_42 = arith.constant 0 : index
    %32 = vector.load %arg10[%c0_41, %c0_42] : memref<256x576xf32, #tpu.memory_space<vmem>>, vector<256x576xf32>
    %c0_43 = arith.constant 0 : index
    %c0_44 = arith.constant 0 : index
    %33 = vector.load %arg2[%c0_43, %c0_44] : memref<576x64xf32, #tpu.memory_space<vmem>>, vector<576x64xf32>
    %cst_45 = arith.constant dense<0.000000e+00> : vector<256x64xf32>
    %34 = tpu.matmul %32, %33, %cst_45 {dimension_numbers = #tpu.dot_dimension_numbers<[1], [0], [0], [1], [0, 0, 1, 1], [], []>} : vector<256x576xf32>, vector<576x64xf32>, vector<256x64xf32> -> vector<256x64xf32>
    %c0_46 = arith.constant 0 : index
    %c0_47 = arith.constant 0 : index
    %35 = vector.load %arg3[%c0_46, %c0_47] : memref<1x64xf32, #tpu.memory_space<vmem>>, vector<1x64xf32>
    %36 = vector.broadcast %35 : vector<1x64xf32> to vector<256x64xf32>
    %37 = arith.addf %34, %36 : vector<256x64xf32>
    %38 = vector.shape_cast %37 : vector<256x64xf32> to vector<16x16x64xf32>
    %c1_48 = arith.constant 1 : index
    %c8_49 = arith.constant 8 : index
    %c0_50 = arith.constant 0 : index
    %39 = vector.load %arg9[%c1_48, %c8_49, %c0_50] : memref<18x32x64xf32, #tpu.memory_space<vmem>>, vector<16x16x64xf32>
    tpu.vector_store %arg9[%c1_48, %c8_49, %c0_50], %38 {strides = array<i32>} : memref<18x32x64xf32, #tpu.memory_space<vmem>>, vector<16x16x64xf32>,
    %c0_51 = arith.constant 0 : index
    %c7_52 = arith.constant 7 : index
    %c0_53 = arith.constant 0 : index
    %40 = vector.load %arg9[%c0_51, %c7_52, %c0_53] : memref<18x32x64xf32, #tpu.memory_space<vmem>>, vector<16x16x64xf32>
    %41 = vector.shape_cast %40 : vector<16x16x64xf32> to vector<256x64xf32>
    %c0_54 = arith.constant 0 : index
    %c0_55 = arith.constant 0 : index
    %42 = vector.load %arg10[%c0_54, %c0_55] : memref<256x576xf32, #tpu.memory_space<vmem>>, vector<256x64xf32>
    tpu.vector_store %arg10[%c0_54, %c0_55], %41 {strides = array<i32>} : memref<256x576xf32, #tpu.memory_space<vmem>>, vector<256x64xf32>,
    %c0_56 = arith.constant 0 : index
    %c8_57 = arith.constant 8 : index
    %c0_58 = arith.constant 0 : index
    %43 = vector.load %arg9[%c0_56, %c8_57, %c0_58] : memref<18x32x64xf32, #tpu.memory_space<vmem>>, vector<16x16x64xf32>
    %44 = vector.shape_cast %43 : vector<16x16x64xf32> to vector<256x64xf32>
    %c0_59 = arith.constant 0 : index
    %c64_60 = arith.constant 64 : index
    %45 = vector.load %arg10[%c0_59, %c64_60] : memref<256x576xf32, #tpu.memory_space<vmem>>, vector<256x64xf32>
    tpu.vector_store %arg10[%c0_59, %c64_60], %44 {strides = array<i32>} : memref<256x576xf32, #tpu.memory_space<vmem>>, vector<256x64xf32>,
    %c0_61 = arith.constant 0 : index
    %c9_62 = arith.constant 9 : index
    %c0_63 = arith.constant 0 : index
    %46 = vector.load %arg9[%c0_61, %c9_62, %c0_63] : memref<18x32x64xf32, #tpu.memory_space<vmem>>, vector<16x16x64xf32>
    %47 = vector.shape_cast %46 : vector<16x16x64xf32> to vector<256x64xf32>
    %c0_64 = arith.constant 0 : index
    %c128_65 = arith.constant 128 : index
    %48 = vector.load %arg10[%c0_64, %c128_65] : memref<256x576xf32, #tpu.memory_space<vmem>>, vector<256x64xf32>
    tpu.vector_store %arg10[%c0_64, %c128_65], %47 {strides = array<i32>} : memref<256x576xf32, #tpu.memory_space<vmem>>, vector<256x64xf32>,
    %c1_66 = arith.constant 1 : index
    %c7_67 = arith.constant 7 : index
    %c0_68 = arith.constant 0 : index
    %49 = vector.load %arg9[%c1_66, %c7_67, %c0_68] : memref<18x32x64xf32, #tpu.memory_space<vmem>>, vector<16x16x64xf32>
    %50 = vector.shape_cast %49 : vector<16x16x64xf32> to vector<256x64xf32>
    %c0_69 = arith.constant 0 : index
    %c192_70 = arith.constant 192 : index
    %51 = vector.load %arg10[%c0_69, %c192_70] : memref<256x576xf32, #tpu.memory_space<vmem>>, vector<256x64xf32>
    tpu.vector_store %arg10[%c0_69, %c192_70], %50 {strides = array<i32>} : memref<256x576xf32, #tpu.memory_space<vmem>>, vector<256x64xf32>,
    %c1_71 = arith.constant 1 : index
    %c8_72 = arith.constant 8 : index
    %c0_73 = arith.constant 0 : index
    %52 = vector.load %arg9[%c1_71, %c8_72, %c0_73] : memref<18x32x64xf32, #tpu.memory_space<vmem>>, vector<16x16x64xf32>
    %53 = vector.shape_cast %52 : vector<16x16x64xf32> to vector<256x64xf32>
    %c0_74 = arith.constant 0 : index
    %c256_75 = arith.constant 256 : index
    %54 = vector.load %arg10[%c0_74, %c256_75] : memref<256x576xf32, #tpu.memory_space<vmem>>, vector<256x64xf32>
    tpu.vector_store %arg10[%c0_74, %c256_75], %53 {strides = array<i32>} : memref<256x576xf32, #tpu.memory_space<vmem>>, vector<256x64xf32>,
    %c1_76 = arith.constant 1 : index
    %c9_77 = arith.constant 9 : index
    %c0_78 = arith.constant 0 : index
    %55 = vector.load %arg9[%c1_76, %c9_77, %c0_78] : memref<18x32x64xf32, #tpu.memory_space<vmem>>, vector<16x16x64xf32>
    %56 = vector.shape_cast %55 : vector<16x16x64xf32> to vector<256x64xf32>
    %c0_79 = arith.constant 0 : index
    %c320_80 = arith.constant 320 : index
    %57 = vector.load %arg10[%c0_79, %c320_80] : memref<256x576xf32, #tpu.memory_space<vmem>>, vector<256x64xf32>
    tpu.vector_store %arg10[%c0_79, %c320_80], %56 {strides = array<i32>} : memref<256x576xf32, #tpu.memory_space<vmem>>, vector<256x64xf32>,
    %c2_81 = arith.constant 2 : index
    %c7_82 = arith.constant 7 : index
    %c0_83 = arith.constant 0 : index
    %58 = vector.load %arg9[%c2_81, %c7_82, %c0_83] : memref<18x32x64xf32, #tpu.memory_space<vmem>>, vector<16x16x64xf32>
    %59 = vector.shape_cast %58 : vector<16x16x64xf32> to vector<256x64xf32>
    %c0_84 = arith.constant 0 : index
    %c384_85 = arith.constant 384 : index
    %60 = vector.load %arg10[%c0_84, %c384_85] : memref<256x576xf32, #tpu.memory_space<vmem>>, vector<256x64xf32>
    tpu.vector_store %arg10[%c0_84, %c384_85], %59 {strides = array<i32>} : memref<256x576xf32, #tpu.memory_space<vmem>>, vector<256x64xf32>,
    %c2_86 = arith.constant 2 : index
    %c8_87 = arith.constant 8 : index
    %c0_88 = arith.constant 0 : index
    %61 = vector.load %arg9[%c2_86, %c8_87, %c0_88] : memref<18x32x64xf32, #tpu.memory_space<vmem>>, vector<16x16x64xf32>
    %62 = vector.shape_cast %61 : vector<16x16x64xf32> to vector<256x64xf32>
    %c0_89 = arith.constant 0 : index
    %c448_90 = arith.constant 448 : index
    %63 = vector.load %arg10[%c0_89, %c448_90] : memref<256x576xf32, #tpu.memory_space<vmem>>, vector<256x64xf32>
    tpu.vector_store %arg10[%c0_89, %c448_90], %62 {strides = array<i32>} : memref<256x576xf32, #tpu.memory_space<vmem>>, vector<256x64xf32>,
    %c2_91 = arith.constant 2 : index
    %c9_92 = arith.constant 9 : index
    %c0_93 = arith.constant 0 : index
    %64 = vector.load %arg9[%c2_91, %c9_92, %c0_93] : memref<18x32x64xf32, #tpu.memory_space<vmem>>, vector<16x16x64xf32>
    %65 = vector.shape_cast %64 : vector<16x16x64xf32> to vector<256x64xf32>
    %c0_94 = arith.constant 0 : index
    %c512_95 = arith.constant 512 : index
    %66 = vector.load %arg10[%c0_94, %c512_95] : memref<256x576xf32, #tpu.memory_space<vmem>>, vector<256x64xf32>
    tpu.vector_store %arg10[%c0_94, %c512_95], %65 {strides = array<i32>} : memref<256x576xf32, #tpu.memory_space<vmem>>, vector<256x64xf32>,
    %c0_96 = arith.constant 0 : index
    %c0_97 = arith.constant 0 : index
    %67 = vector.load %arg10[%c0_96, %c0_97] : memref<256x576xf32, #tpu.memory_space<vmem>>, vector<256x576xf32>
    %c0_98 = arith.constant 0 : index
    %c0_99 = arith.constant 0 : index
    %68 = vector.load %arg4[%c0_98, %c0_99] : memref<576x32xf32, #tpu.memory_space<vmem>>, vector<576x32xf32>
    %cst_100 = arith.constant dense<0.000000e+00> : vector<256x32xf32>
    %69 = tpu.matmul %67, %68, %cst_100 {dimension_numbers = #tpu.dot_dimension_numbers<[1], [0], [0], [1], [0, 0, 1, 1], [], []>} : vector<256x576xf32>, vector<576x32xf32>, vector<256x32xf32> -> vector<256x32xf32>
    %c0_101 = arith.constant 0 : index
    %c0_102 = arith.constant 0 : index
    %70 = vector.load %arg5[%c0_101, %c0_102] : memref<1x32xf32, #tpu.memory_space<vmem>>, vector<1x32xf32>
    %71 = vector.broadcast %70 : vector<1x32xf32> to vector<256x32xf32>
    %72 = arith.addf %69, %71 : vector<256x32xf32>
    %c0_103 = arith.constant 0 : index
    %c0_104 = arith.constant 0 : index
    %73 = vector.load %arg6[%c0_103, %c0_104] : memref<32x1xf32, #tpu.memory_space<vmem>>, vector<32x1xf32>
    %cst_105 = arith.constant dense<0.000000e+00> : vector<256x1xf32>
    %74 = tpu.matmul %72, %73, %cst_105 {dimension_numbers = #tpu.dot_dimension_numbers<[1], [0], [0], [1], [0, 0, 1, 1], [], []>} : vector<256x32xf32>, vector<32x1xf32>, vector<256x1xf32> -> vector<256x1xf32>
    %c0_106 = arith.constant 0 : index
    %c0_107 = arith.constant 0 : index
    %75 = vector.load %arg7[%c0_106, %c0_107] : memref<1x1xf32, #tpu.memory_space<vmem>>, vector<1x1xf32>
    %76 = vector.broadcast %75 : vector<1x1xf32> to vector<256x1xf32>
    %77 = arith.addf %74, %76 : vector<256x1xf32>
    %78 = vector.shape_cast %77 : vector<256x1xf32> to vector<1x256x1xf32>
    %c0_108 = arith.constant 0 : index
    %c0_109 = arith.constant 0 : index
    %c0_110 = arith.constant 0 : index
    %79 = vector.load %arg8[%c0_108, %c0_109, %c0_110] : memref<1x256x1xf32, #tpu.memory_space<vmem>>, vector<1x256x1xf32>
    tpu.vector_store %arg8[%c0_108, %c0_109, %c0_110], %78 {strides = array<i32>} : memref<1x256x1xf32, #tpu.memory_space<vmem>>, vector<1x256x1xf32>,
    return
  }
  func.func @transform_0(%arg0: i32) -> (i32, i32, i32, i32) {
    %c0_i32 = arith.constant 0 : i32
    %c0_i32_0 = arith.constant 0 : i32
    %c0_i32_1 = arith.constant 0 : i32
    %c0_i32_2 = arith.constant 0 : i32
    return %arg0, %c0_i32, %c0_i32_0, %c0_i32_1 : i32, i32, i32, i32
  }
  func.func @transform_1(%arg0: i32) -> (i32, i32) {
    %c0_i32 = arith.constant 0 : i32
    %c0_i32_0 = arith.constant 0 : i32
    %c0_i32_1 = arith.constant 0 : i32
    return %c0_i32, %c0_i32_0 : i32, i32
  }
  func.func @transform_2(%arg0: i32) -> (i32, i32) {
    %c0_i32 = arith.constant 0 : i32
    %c0_i32_0 = arith.constant 0 : i32
    %c0_i32_1 = arith.constant 0 : i32
    return %c0_i32, %c0_i32_0 : i32, i32
  }
  func.func @transform_3(%arg0: i32) -> (i32, i32) {
    %c0_i32 = arith.constant 0 : i32
    %c0_i32_0 = arith.constant 0 : i32
    %c0_i32_1 = arith.constant 0 : i32
    return %c0_i32, %c0_i32_0 : i32, i32
  }
  func.func @transform_4(%arg0: i32) -> (i32, i32) {
    %c0_i32 = arith.constant 0 : i32
    %c0_i32_0 = arith.constant 0 : i32
    %c0_i32_1 = arith.constant 0 : i32
    return %c0_i32, %c0_i32_0 : i32, i32
  }
  func.func @transform_5(%arg0: i32) -> (i32, i32) {
    %c0_i32 = arith.constant 0 : i32
    %c0_i32_0 = arith.constant 0 : i32
    %c0_i32_1 = arith.constant 0 : i32
    return %c0_i32, %c0_i32_0 : i32, i32
  }
  func.func @transform_6(%arg0: i32) -> (i32, i32) {
    %c0_i32 = arith.constant 0 : i32
    %c0_i32_0 = arith.constant 0 : i32
    %c0_i32_1 = arith.constant 0 : i32
    return %c0_i32, %c0_i32_0 : i32, i32
  }
  func.func @transform_7(%arg0: i32) -> (i32, i32, i32) {
    %c0_i32 = arith.constant 0 : i32
    %c0_i32_0 = arith.constant 0 : i32
    %c0_i32_1 = arith.constant 0 : i32
    return %arg0, %c0_i32, %c0_i32_0 : i32, i32, i32
  }
}

</mosaic_0001>

<llo_original>
// kernel: tpu_custom_call.1
$region0: #{tpu_custom_call.1}
  #allocation0 [shape = 'u32[]', space=smem, size = 0x4, offset = 0x4, fixed_abs, tag = 'smem constant byte address 0x4 - core index']
  #allocation1 [shape = 'u32[144,128]{1,0:T(1,128)}', space=vmem, size = 0x12000, scoped, tag = 'internal scratch']
  #allocation2 [shape = 'f32[18,32,64]{2,1,0:T(8,128)}', space=vmem, size = 0x48000, scoped, tag = 'scratch operand']
  #allocation3 [shape = 'f32[256,576]{1,0:T(8,128)}', space=vmem, size = 0xa0000, scoped, tag = 'scratch operand']
  #allocation4 [shape = 'f32[1,1]{1,0:T(1,128)S(1)}', space=vmem, size = 0x200, scoped, tag = 'scoped memory for tpu_custom_call.1']
  %s0 = inlined_call_operand.vmem [shape: f32[2,16,16,64], index: 0, kind: input, shape index: {}]
  %s1 = inlined_call_operand.vmem [shape: f32[576,64], index: 1, kind: input, shape index: {}]
  %s2 = inlined_call_operand.vmem [shape: f32[1,64], index: 2, kind: input, shape index: {}]
  %s3 = inlined_call_operand.vmem [shape: f32[576,32], index: 3, kind: input, shape index: {}]
  %s4 = inlined_call_operand.vmem [shape: f32[1,32], index: 4, kind: input, shape index: {}]
  %s5 = inlined_call_operand.vmem [shape: f32[32,1], index: 5, kind: input, shape index: {}]
  %s6 = inlined_call_operand.<no memory space> [shape: f32[1,1], index: 6, kind: input, shape index: {}]
  %s7 = inlined_call_operand.vmem [shape: f32[2,256,1], index: 7, kind: output, shape index: {}]
  %s8 = sld [smem:[#allocation0]]
  $region61: #{tpu_custom_call.1} parent=0
    _
  %s10 = ssub.s32 1, %s8
  %s11 = scalar_select 0, %s10, %s8
  %v12 = vstv %s6
  %13 = vst [vmem:[#allocation4] sm:$0x1] %v12
  loop: start=0, step=1, limit=4
  $region2: #{tpu_custom_call.1} parent=0 // loop_pre_header
    _
  $region3: #{tpu_custom_call.1} parent=0 // loop_header
    %s15 = sphi 0, %s19
    %p16 = scmp.ge.s32.totalorder %s15, 4
    %s25 = sphi 0, %s27
    %s28 = sphi 0, %s25
    %s29 = sphi 0, %s28
    %s45 = sphi 0, %s29
    %s49 = sphi 0, %s49
    %s51 = sphi 0, %s49
    %s52 = sphi 0, %s51
    %s66 = sphi 0, %s52
    %s70 = sphi 0, %s70
    %s72 = sphi 0, %s70
    %s73 = sphi 0, %s72
    %s87 = sphi 0, %s73
    %s91 = sphi 0, %s91
    %s93 = sphi 0, %s91
    %s94 = sphi 0, %s93
    %s108 = sphi 0, %s94
    %s112 = sphi 0, %s112
    %s114 = sphi 0, %s112
    %s115 = sphi 0, %s114
    %s129 = sphi 0, %s115
    %s133 = sphi 0, %s133
    %s135 = sphi 0, %s133
    %s136 = sphi 0, %s135
    %s150 = sphi 0, %s136
    %s154 = sphi 0, %s154
    %s156 = sphi 0, %s154
    %s157 = sphi 0, %s156
    %s171 = sphi 0, %s157
    %s177 = sphi 0, %s179
    %s180 = sphi 0, %s177
    %s181 = sphi 0, %s180
    %s197 = sphi 0, %s181
  $region4: #{tpu_custom_call.1} parent=0 // loop_header_branch
    %18 = sbr.rel (%p16) target = $region8
  $region5: #{tpu_custom_call.1} parent=0 // loop_body
    %s20 = ssub.s32 %s15, 1
    %s21 = ssub.s32 %s15, 2
    %s22 = sadd.s32 %s15, 1
    %s23 = ssub.s32 %s15, %s22
    %p24 = scmp.eq.s32.totalorder %s23, 0
    %s26 = sadd.s32 %s25, 1
    %s27 = scalar_select %p24, %s25, %s26
    %p30 = pneg %p24
    %p31 = scmp.eq.s32.totalorder %s15, 1
    %p32 = por %p30, %p31
    %p33 = scmp.ne.s32.totalorder %s25, %s28
    %p34 = scmp.eq.s32.totalorder %s15, 0
    %p35 = por %p33, %p34
    %p36 = scmp.ne.s32.totalorder %s25, %s28
    %p37 = scmp.eq.s32.totalorder %s20, 1
    %p38 = por %p36, %p37
    %p39 = scmp.ne.s32.totalorder %s28, %s29
    %p40 = scmp.eq.s32.totalorder %s20, 0
    %p41 = por %p39, %p40
    %p42 = scmp.ne.s32.totalorder %s28, %s29
    %p43 = scmp.eq.s32.totalorder %s21, 1
    %p44 = por %p42, %p43
    %p46 = scmp.ne.s32.totalorder %s29, %s45
    %p47 = scmp.eq.s32.totalorder %s21, 0
    %p48 = por %p46, %p47
    %s50 = sadd.s32 %s49, 1
    %p53 = scmp.eq.s32.totalorder %s15, 1
    %p54 = scmp.ne.s32.totalorder %s49, %s51
    %p55 = scmp.eq.s32.totalorder %s15, 0
    %p56 = por %p54, %p55
    %p57 = scmp.ne.s32.totalorder %s49, %s51
    %p58 = scmp.eq.s32.totalorder %s20, 1
    %p59 = por %p57, %p58
    %p60 = scmp.ne.s32.totalorder %s51, %s52
    %p61 = scmp.eq.s32.totalorder %s20, 0
    %p62 = por %p60, %p61
    %p63 = scmp.ne.s32.totalorder %s51, %s52
    %p64 = scmp.eq.s32.totalorder %s21, 1
    %p65 = por %p63, %p64
    %p67 = scmp.ne.s32.totalorder %s52, %s66
    %p68 = scmp.eq.s32.totalorder %s21, 0
    %p69 = por %p67, %p68
    %s71 = sadd.s32 %s70, 1
    %p74 = scmp.eq.s32.totalorder %s15, 1
    %p75 = scmp.ne.s32.totalorder %s70, %s72
    %p76 = scmp.eq.s32.totalorder %s15, 0
    %p77 = por %p75, %p76
    %p78 = scmp.ne.s32.totalorder %s70, %s72
    %p79 = scmp.eq.s32.totalorder %s20, 1
    %p80 = por %p78, %p79
    %p81 = scmp.ne.s32.totalorder %s72, %s73
    %p82 = scmp.eq.s32.totalorder %s20, 0
    %p83 = por %p81, %p82
    %p84 = scmp.ne.s32.totalorder %s72, %s73
    %p85 = scmp.eq.s32.totalorder %s21, 1
    %p86 = por %p84, %p85
    %p88 = scmp.ne.s32.totalorder %s73, %s87
    %p89 = scmp.eq.s32.totalorder %s21, 0
    %p90 = por %p88, %p89
    %s92 = sadd.s32 %s91, 1
    %p95 = scmp.eq.s32.totalorder %s15, 1
    %p96 = scmp.ne.s32.totalorder %s91, %s93
    %p97 = scmp.eq.s32.totalorder %s15, 0
    %p98 = por %p96, %p97
    %p99 = scmp.ne.s32.totalorder %s91, %s93
    %p100 = scmp.eq.s32.totalorder %s20, 1
    %p101 = por %p99, %p100
    %p102 = scmp.ne.s32.totalorder %s93, %s94
    %p103 = scmp.eq.s32.totalorder %s20, 0
    %p104 = por %p102, %p103
    %p105 = scmp.ne.s32.totalorder %s93, %s94
    %p106 = scmp.eq.s32.totalorder %s21, 1
    %p107 = por %p105, %p106
    %p109 = scmp.ne.s32.totalorder %s94, %s108
    %p110 = scmp.eq.s32.totalorder %s21, 0
    %p111 = por %p109, %p110
    %s113 = sadd.s32 %s112, 1
    %p116 = scmp.eq.s32.totalorder %s15, 1
    %p117 = scmp.ne.s32.totalorder %s112, %s114
    %p118 = scmp.eq.s32.totalorder %s15, 0
    %p119 = por %p117, %p118
    %p120 = scmp.ne.s32.totalorder %s112, %s114
    %p121 = scmp.eq.s32.totalorder %s20, 1
    %p122 = por %p120, %p121
    %p123 = scmp.ne.s32.totalorder %s114, %s115
    %p124 = scmp.eq.s32.totalorder %s20, 0
    %p125 = por %p123, %p124
    %p126 = scmp.ne.s32.totalorder %s114, %s115
    %p127 = scmp.eq.s32.totalorder %s21, 1
    %p128 = por %p126, %p127
    %p130 = scmp.ne.s32.totalorder %s115, %s129
    %p131 = scmp.eq.s32.totalorder %s21, 0
    %p132 = por %p130, %p131
    %s134 = sadd.s32 %s133, 1
    %p137 = scmp.eq.s32.totalorder %s15, 1
    %p138 = scmp.ne.s32.totalorder %s133, %s135
    %p139 = scmp.eq.s32.totalorder %s15, 0
    %p140 = por %p138, %p139
    %p141 = scmp.ne.s32.totalorder %s133, %s135
    %p142 = scmp.eq.s32.totalorder %s20, 1
    %p143 = por %p141, %p142
    %p144 = scmp.ne.s32.totalorder %s135, %s136
    %p145 = scmp.eq.s32.totalorder %s20, 0
    %p146 = por %p144, %p145
    %p147 = scmp.ne.s32.totalorder %s135, %s136
    %p148 = scmp.eq.s32.totalorder %s21, 1
    %p149 = por %p147, %p148
    %p151 = scmp.ne.s32.totalorder %s136, %s150
    %p152 = scmp.eq.s32.totalorder %s21, 0
    %p153 = por %p151, %p152
    %s155 = sadd.s32 %s154, 1
    %p158 = scmp.eq.s32.totalorder %s15, 1
    %p159 = scmp.ne.s32.totalorder %s154, %s156
    %p160 = scmp.eq.s32.totalorder %s15, 0
    %p161 = por %p159, %p160
    %p162 = scmp.ne.s32.totalorder %s154, %s156
    %p163 = scmp.eq.s32.totalorder %s20, 1
    %p164 = por %p162, %p163
    %p165 = scmp.ne.s32.totalorder %s156, %s157
    %p166 = scmp.eq.s32.totalorder %s20, 0
    %p167 = por %p165, %p166
    %p168 = scmp.ne.s32.totalorder %s156, %s157
    %p169 = scmp.eq.s32.totalorder %s21, 1
    %p170 = por %p168, %p169
    %p172 = scmp.ne.s32.totalorder %s157, %s171
    %p173 = scmp.eq.s32.totalorder %s21, 0
    %p174 = por %p172, %p173
    %s175 = ssub.s32 %s15, %s22
    %p176 = scmp.eq.s32.totalorder %s175, 0
    %s178 = sadd.s32 %s177, 1
    %s179 = scalar_select %p176, %s177, %s178
    %p182 = pneg %p176
    %p183 = scmp.eq.s32.totalorder %s15, 1
    %p184 = por %p182, %p183
    %p185 = scmp.ne.s32.totalorder %s177, %s180
    %p186 = scmp.eq.s32.totalorder %s15, 0
    %p187 = por %p185, %p186
    %p188 = scmp.ne.s32.totalorder %s177, %s180
    %p189 = scmp.eq.s32.totalorder %s20, 1
    %p190 = por %p188, %p189
    %p191 = scmp.ne.s32.totalorder %s180, %s181
    %p192 = scmp.eq.s32.totalorder %s20, 0
    %p193 = por %p191, %p192
    %p194 = scmp.ne.s32.totalorder %s180, %s181
    %p195 = scmp.eq.s32.totalorder %s21, 1
    %p196 = por %p194, %p195
    %p198 = scmp.ne.s32.totalorder %s181, %s197
    %p199 = scmp.eq.s32.totalorder %s21, 0
    %p200 = por %p198, %p199
    %p201 = scmp.le.s32.totalorder 1, %s15
    %p202 = scmp.lt.s32.totalorder %s15, 3
    %p203 = pnand %p201, %p202
    %p204 = pneg %p203
    // Predicated region
    $region9: #{tpu_custom_call.1} parent=5 // pred_check
      _
    $region10: #{tpu_custom_call.1} parent=5 // pred_check_branch
      %206 = sbr.rel (%p203) target = $region12
    $region11: #{tpu_custom_call.1} parent=5 // pred_region
      %s207 = ssub.s32 %s15, 1
      // Predicated region
      $region13: #{tpu_custom_call.1} parent=11 // pred_check
        %p208 = pneg %p62
      $region14: #{tpu_custom_call.1} parent=11 // pred_check_branch
        %210 = sbr.rel (%p208) target = $region16
      $region15: #{tpu_custom_call.1} parent=11 // pred_region
        _
      $region16: #{tpu_custom_call.1} parent=11 // pred_fallthru
        _
      // Predicated region
      $region17: #{tpu_custom_call.1} parent=11 // pred_check
        %p211 = pneg %p83
      $region18: #{tpu_custom_call.1} parent=11 // pred_check_branch
        %213 = sbr.rel (%p211) target = $region20
      $region19: #{tpu_custom_call.1} parent=11 // pred_region
        _
      $region20: #{tpu_custom_call.1} parent=11 // pred_fallthru
        _
      // Predicated region
      $region21: #{tpu_custom_call.1} parent=11 // pred_check
        %p214 = pneg %p104
      $region22: #{tpu_custom_call.1} parent=11 // pred_check_branch
        %216 = sbr.rel (%p214) target = $region24
      $region23: #{tpu_custom_call.1} parent=11 // pred_region
        _
      $region24: #{tpu_custom_call.1} parent=11 // pred_fallthru
        _
      // Predicated region
      $region25: #{tpu_custom_call.1} parent=11 // pred_check
        %p217 = pneg %p125
      $region26: #{tpu_custom_call.1} parent=11 // pred_check_branch
        %219 = sbr.rel (%p217) target = $region28
      $region27: #{tpu_custom_call.1} parent=11 // pred_region
        _
      $region28: #{tpu_custom_call.1} parent=11 // pred_fallthru
        _
      // Predicated region
      $region29: #{tpu_custom_call.1} parent=11 // pred_check
        %p220 = pneg %p146
      $region30: #{tpu_custom_call.1} parent=11 // pred_check_branch
        %222 = sbr.rel (%p220) target = $region32
      $region31: #{tpu_custom_call.1} parent=11 // pred_region
        _
      $region32: #{tpu_custom_call.1} parent=11 // pred_fallthru
        _
      // Predicated region
      $region33: #{tpu_custom_call.1} parent=11 // pred_check
        %p223 = pneg %p167
      $region34: #{tpu_custom_call.1} parent=11 // pred_check_branch
        %225 = sbr.rel (%p223) target = $region36
      $region35: #{tpu_custom_call.1} parent=11 // pred_region
        _
      $region36: #{tpu_custom_call.1} parent=11 // pred_fallthru
        _
    $region12: #{tpu_custom_call.1} parent=5 // pred_fallthru
      _
    %p226 = scmp.lt.s32.totalorder %s15, 2
    // Predicated region
    $region37: #{tpu_custom_call.1} parent=5 // pred_check
      %p227 = pneg %p226
    $region38: #{tpu_custom_call.1} parent=5 // pred_check_branch
      %229 = sbr.rel (%p227) target = $region40
    $region39: #{tpu_custom_call.1} parent=5 // pred_region
      // Predicated region
      $region41: #{tpu_custom_call.1} parent=39 // pred_check
        %p230 = pneg %p35
      $region42: #{tpu_custom_call.1} parent=39 // pred_check_branch
        %232 = sbr.rel (%p230) target = $region44
      $region43: #{tpu_custom_call.1} parent=39 // pred_region
        %p233 = scmp.lt.s32.totalorder %s15, 1
        %s234 = scalar_select %p233, %s15, 1
        %s235 = smul.addr %s234, 32
        %s236 = smul.addr %s235, 8
        %s237 = scalar_lea.vmem %s0, %s236
      $region44: #{tpu_custom_call.1} parent=39 // pred_fallthru
        _
    $region40: #{tpu_custom_call.1} parent=5 // pred_fallthru
      _
    %p238 = scmp.le.s32.totalorder 1, %s15
    %p239 = scmp.lt.s32.totalorder %s15, 3
    %p240 = pnand %p238, %p239
    %p241 = pneg %p240
    // Predicated region
    $region45: #{tpu_custom_call.1} parent=5 // pred_check
      _
    $region46: #{tpu_custom_call.1} parent=5 // pred_check_branch
      %243 = sbr.rel (%p240) target = $region48
    $region47: #{tpu_custom_call.1} parent=5 // pred_region
      %s244 = ssub.s32 %s15, 1
      %p245 = scmp.lt.s32.totalorder %s20, 1
      %s246 = scalar_select %p245, %s20, 1
      %s247 = smul.addr %s246, 32
      %s248 = smul.addr %s247, 8
      %s249 = scalar_lea.vmem %s0, %s248
      %p250 = pneg %p41
      %p251 = pneg %p38
      %p252 = pneg %p62
      %p253 = pneg %p59
      %p254 = pneg %p83
      %p255 = pneg %p80
      %p256 = pneg %p104
      %p257 = pneg %p101
      %p258 = pneg %p125
      %p259 = pneg %p122
      %p260 = pneg %p146
      %p261 = pneg %p143
      %p262 = pneg %p167
      %p263 = pneg %p164
      %p264 = pneg %p193
      %p265 = pneg %p190
      %p266 = scmp.lt.s32.totalorder %s20, 1
      %s267 = scalar_select %p266, %s20, 1
      %s268 = smul.addr %s267, 32
      %s269 = smul.addr %s268, 8
      %s270 = scalar_lea.vmem %s7, %s269
      %p271 = scmp.lt.s32.totalorder %s20, 1
      %s272 = scalar_select %p271, %s20, 1
      %s273 = smul.addr %s272, 32
      %s274 = smul.addr %s273, 8
      %s275 = scalar_lea.vmem %s0, %s274
      %p276 = scmp.lt.s32.totalorder %s20, 1
      %s277 = scalar_select %p276, %s20, 1
      %s278 = smul.addr %s277, 32
      %s279 = smul.addr %s278, 8
      %s280 = scalar_lea.vmem %s7, %s279
      %vm281 = vcmask 523264
      %282 = vst.msk [vmem:[#allocation2] sm:$0xff] %vm281, 0.0
      %283 = vst.msk [vmem:[#allocation2 + $0x8] sm:$0xff] %vm281, 0.0
      %284 = vst.msk [vmem:[#allocation2 + $0x10] sm:$0xff] %vm281, 0.0
      %285 = vst.msk [vmem:[#allocation2 + $0x18] sm:$0xff] %vm281, 0.0
      %286 = vst.msk [vmem:[#allocation2 + $0x20] sm:$0xff] %vm281, 0.0
      %287 = vst.msk [vmem:[#allocation2 + $0x28] sm:$0xff] %vm281, 0.0
      %288 = vst.msk [vmem:[#allocation2 + $0x30] sm:$0xff] %vm281, 0.0
      %289 = vst.msk [vmem:[#allocation2 + $0x38] sm:$0xff] %vm281, 0.0
      %290 = vst.msk [vmem:[#allocation2 + $0x40] sm:$0xff] %vm281, 0.0
      %291 = vst.msk [vmem:[#allocation2 + $0x48] sm:$0xff] %vm281, 0.0
      %292 = vst.msk [vmem:[#allocation2 + $0x50] sm:$0xff] %vm281, 0.0
      %293 = vst.msk [vmem:[#allocation2 + $0x58] sm:$0xff] %vm281, 0.0
      %294 = vst.msk [vmem:[#allocation2 + $0x60] sm:$0xff] %vm281, 0.0
      %295 = vst.msk [vmem:[#allocation2 + $0x68] sm:$0xff] %vm281, 0.0
      %296 = vst.msk [vmem:[#allocation2 + $0x70] sm:$0xff] %vm281, 0.0
      %297 = vst.msk [vmem:[#allocation2 + $0x78] sm:$0xff] %vm281, 0.0
      %298 = vst.msk [vmem:[#allocation2 + $0x80] sm:$0xff] %vm281, 0.0
      %299 = vst.msk [vmem:[#allocation2 + $0x88] sm:$0xff] %vm281, 0.0
      %300 = vst.msk [vmem:[#allocation2 + $0x90] sm:$0xff] %vm281, 0.0
      %301 = vst.msk [vmem:[#allocation2 + $0x98] sm:$0xff] %vm281, 0.0
      %302 = vst.msk [vmem:[#allocation2 + $0xa0] sm:$0xff] %vm281, 0.0
      %303 = vst.msk [vmem:[#allocation2 + $0xa8] sm:$0xff] %vm281, 0.0
      %304 = vst.msk [vmem:[#allocation2 + $0xb0] sm:$0xff] %vm281, 0.0
      %305 = vst.msk [vmem:[#allocation2 + $0xb8] sm:$0xff] %vm281, 0.0
      %306 = vst.msk [vmem:[#allocation2 + $0xc0] sm:$0xff] %vm281, 0.0
      %307 = vst.msk [vmem:[#allocation2 + $0xc8] sm:$0xff] %vm281, 0.0
      %308 = vst.msk [vmem:[#allocation2 + $0xd0] sm:$0xff] %vm281, 0.0
      %309 = vst.msk [vmem:[#allocation2 + $0xd8] sm:$0xff] %vm281, 0.0
      %310 = vst.msk [vmem:[#allocation2 + $0xe0] sm:$0xff] %vm281, 0.0
      %311 = vst.msk [vmem:[#allocation2 + $0xe8] sm:$0xff] %vm281, 0.0
      %312 = vst.msk [vmem:[#allocation2 + $0xf0] sm:$0xff] %vm281, 0.0
      %313 = vst.msk [vmem:[#allocation2 + $0xf8] sm:$0xff] %vm281, 0.0
      %314 = vst.msk [vmem:[#allocation2 + $0x100] sm:$0xff] %vm281, 0.0
      %315 = vst.msk [vmem:[#allocation2 + $0x108] sm:$0xff] %vm281, 0.0
      %316 = vst.msk [vmem:[#allocation2 + $0x110] sm:$0xff] %vm281, 0.0
      %317 = vst.msk [vmem:[#allocation2 + $0x118] sm:$0xff] %vm281, 0.0
      %318 = vst.msk [vmem:[#allocation2 + $0x120] sm:$0xff] %vm281, 0.0
      %319 = vst.msk [vmem:[#allocation2 + $0x128] sm:$0xff] %vm281, 0.0
      %320 = vst.msk [vmem:[#allocation2 + $0x130] sm:$0xff] %vm281, 0.0
      %321 = vst.msk [vmem:[#allocation2 + $0x138] sm:$0xff] %vm281, 0.0
      %322 = vst.msk [vmem:[#allocation2 + $0x140] sm:$0xff] %vm281, 0.0
      %323 = vst.msk [vmem:[#allocation2 + $0x148] sm:$0xff] %vm281, 0.0
      %324 = vst.msk [vmem:[#allocation2 + $0x150] sm:$0xff] %vm281, 0.0
      %325 = vst.msk [vmem:[#allocation2 + $0x158] sm:$0xff] %vm281, 0.0
      %326 = vst.msk [vmem:[#allocation2 + $0x160] sm:$0xff] %vm281, 0.0
      %327 = vst.msk [vmem:[#allocation2 + $0x168] sm:$0xff] %vm281, 0.0
      %328 = vst.msk [vmem:[#allocation2 + $0x170] sm:$0xff] %vm281, 0.0
      %329 = vst.msk [vmem:[#allocation2 + $0x178] sm:$0xff] %vm281, 0.0
      %330 = vst.msk [vmem:[#allocation2 + $0x180] sm:$0xff] %vm281, 0.0
      %331 = vst.msk [vmem:[#allocation2 + $0x188] sm:$0xff] %vm281, 0.0
      %332 = vst.msk [vmem:[#allocation2 + $0x190] sm:$0xff] %vm281, 0.0
      %333 = vst.msk [vmem:[#allocation2 + $0x198] sm:$0xff] %vm281, 0.0
      %334 = vst.msk [vmem:[#allocation2 + $0x1a0] sm:$0xff] %vm281, 0.0
      %335 = vst.msk [vmem:[#allocation2 + $0x1a8] sm:$0xff] %vm281, 0.0
      %336 = vst.msk [vmem:[#allocation2 + $0x1b0] sm:$0xff] %vm281, 0.0
      %337 = vst.msk [vmem:[#allocation2 + $0x1b8] sm:$0xff] %vm281, 0.0
      %338 = vst.msk [vmem:[#allocation2 + $0x1c0] sm:$0xff] %vm281, 0.0
      %339 = vst.msk [vmem:[#allocation2 + $0x1c8] sm:$0xff] %vm281, 0.0
      %340 = vst.msk [vmem:[#allocation2 + $0x1d0] sm:$0xff] %vm281, 0.0
      %341 = vst.msk [vmem:[#allocation2 + $0x1d8] sm:$0xff] %vm281, 0.0
      %342 = vst.msk [vmem:[#allocation2 + $0x1e0] sm:$0xff] %vm281, 0.0
      %343 = vst.msk [vmem:[#allocation2 + $0x1e8] sm:$0xff] %vm281, 0.0
      %344 = vst.msk [vmem:[#allocation2 + $0x1f0] sm:$0xff] %vm281, 0.0
      %345 = vst.msk [vmem:[#allocation2 + $0x1f8] sm:$0xff] %vm281, 0.0
      %346 = vst.msk [vmem:[#allocation2 + $0x200] sm:$0xff] %vm281, 0.0
      %347 = vst.msk [vmem:[#allocation2 + $0x208] sm:$0xff] %vm281, 0.0
      %348 = vst.msk [vmem:[#allocation2 + $0x210] sm:$0xff] %vm281, 0.0
      %349 = vst.msk [vmem:[#allocation2 + $0x218] sm:$0xff] %vm281, 0.0
      %350 = vst.msk [vmem:[#allocation2 + $0x220] sm:$0xff] %vm281, 0.0
      %351 = vst.msk [vmem:[#allocation2 + $0x228] sm:$0xff] %vm281, 0.0
      %352 = vst.msk [vmem:[#allocation2 + $0x230] sm:$0xff] %vm281, 0.0
      %353 = vst.msk [vmem:[#allocation2 + $0x238] sm:$0xff] %vm281, 0.0
      %v354 = vld [vmem:[%s275] sm:$0xff]
      %v355 = vld [vmem:[%s275 + $0x8] sm:$0xff]
      %v356 = vld [vmem:[%s275 + $0x10] sm:$0xff]
      %v357 = vld [vmem:[%s275 + $0x18] sm:$0xff]
      %v358 = vld [vmem:[%s275 + $0x20] sm:$0xff]
      %v359 = vld [vmem:[%s275 + $0x28] sm:$0xff]
      %v360 = vld [vmem:[%s275 + $0x30] sm:$0xff]
      %v361 = vld [vmem:[%s275 + $0x38] sm:$0xff]
      %v362 = vld [vmem:[%s275 + $0x40] sm:$0xff]
      %v363 = vld [vmem:[%s275 + $0x48] sm:$0xff]
      %v364 = vld [vmem:[%s275 + $0x50] sm:$0xff]
      %v365 = vld [vmem:[%s275 + $0x58] sm:$0xff]
      %v366 = vld [vmem:[%s275 + $0x60] sm:$0xff]
      %v367 = vld [vmem:[%s275 + $0x68] sm:$0xff]
      %v368 = vld [vmem:[%s275 + $0x70] sm:$0xff]
      %v369 = vld [vmem:[%s275 + $0x78] sm:$0xff]
      %v370 = vld [vmem:[%s275 + $0x80] sm:$0xff]
      %v371 = vld [vmem:[%s275 + $0x88] sm:$0xff]
      %v372 = vld [vmem:[%s275 + $0x90] sm:$0xff]
      %v373 = vld [vmem:[%s275 + $0x98] sm:$0xff]
      %v374 = vld [vmem:[%s275 + $0xa0] sm:$0xff]
      %v375 = vld [vmem:[%s275 + $0xa8] sm:$0xff]
      %v376 = vld [vmem:[%s275 + $0xb0] sm:$0xff]
      %v377 = vld [vmem:[%s275 + $0xb8] sm:$0xff]
      %v378 = vld [vmem:[%s275 + $0xc0] sm:$0xff]
      %v379 = vld [vmem:[%s275 + $0xc8] sm:$0xff]
      %v380 = vld [vmem:[%s275 + $0xd0] sm:$0xff]
      %v381 = vld [vmem:[%s275 + $0xd8] sm:$0xff]
      %v382 = vld [vmem:[%s275 + $0xe0] sm:$0xff]
      %v383 = vld [vmem:[%s275 + $0xe8] sm:$0xff]
      %v384 = vld [vmem:[%s275 + $0xf0] sm:$0xff]
      %v385 = vld [vmem:[%s275 + $0xf8] sm:$0xff]
      %s386 = scalar_lea.vmem [#allocation2], 32
      %387 = vst.msk [vmem:[%s386 + $0x8] sm:$0xff] %vm281, %v354
      %388 = vst.msk [vmem:[%s386 + $0x10] sm:$0xff] %vm281, %v355
      %389 = vst.msk [vmem:[%s386 + $0x28] sm:$0xff] %vm281, %v356
      %390 = vst.msk [vmem:[%s386 + $0x30] sm:$0xff] %vm281, %v357
      %391 = vst.msk [vmem:[%s386 + $0x48] sm:$0xff] %vm281, %v358
      %392 = vst.msk [vmem:[%s386 + $0x50] sm:$0xff] %vm281, %v359
      %393 = vst.msk [vmem:[%s386 + $0x68] sm:$0xff] %vm281, %v360
      %394 = vst.msk [vmem:[%s386 + $0x70] sm:$0xff] %vm281, %v361
      %395 = vst.msk [vmem:[%s386 + $0x88] sm:$0xff] %vm281, %v362
      %396 = vst.msk [vmem:[%s386 + $0x90] sm:$0xff] %vm281, %v363
      %397 = vst.msk [vmem:[%s386 + $0xa8] sm:$0xff] %vm281, %v364
      %398 = vst.msk [vmem:[%s386 + $0xb0] sm:$0xff] %vm281, %v365
      %399 = vst.msk [vmem:[%s386 + $0xc8] sm:$0xff] %vm281, %v366
      %400 = vst.msk [vmem:[%s386 + $0xd0] sm:$0xff] %vm281, %v367
      %401 = vst.msk [vmem:[%s386 + $0xe8] sm:$0xff] %vm281, %v368
      %402 = vst.msk [vmem:[%s386 + $0xf0] sm:$0xff] %vm281, %v369
      %403 = vst.msk [vmem:[%s386 + $0x108] sm:$0xff] %vm281, %v370
      %404 = vst.msk [vmem:[%s386 + $0x110] sm:$0xff] %vm281, %v371
      %405 = vst.msk [vmem:[%s386 + $0x128] sm:$0xff] %vm281, %v372
      %406 = vst.msk [vmem:[%s386 + $0x130] sm:$0xff] %vm281, %v373
      %407 = vst.msk [vmem:[%s386 + $0x148] sm:$0xff] %vm281, %v374
      %408 = vst.msk [vmem:[%s386 + $0x150] sm:$0xff] %vm281, %v375
      %409 = vst.msk [vmem:[%s386 + $0x168] sm:$0xff] %vm281, %v376
      %410 = vst.msk [vmem:[%s386 + $0x170] sm:$0xff] %vm281, %v377
      %411 = vst.msk [vmem:[%s386 + $0x188] sm:$0xff] %vm281, %v378
      %412 = vst.msk [vmem:[%s386 + $0x190] sm:$0xff] %vm281, %v379
      %413 = vst.msk [vmem:[%s386 + $0x1a8] sm:$0xff] %vm281, %v380
      %414 = vst.msk [vmem:[%s386 + $0x1b0] sm:$0xff] %vm281, %v381
      %415 = vst.msk [vmem:[%s386 + $0x1c8] sm:$0xff] %vm281, %v382
      %416 = vst.msk [vmem:[%s386 + $0x1d0] sm:$0xff] %vm281, %v383
      %417 = vst.msk [vmem:[%s386 + $0x1e8] sm:$0xff] %vm281, %v384
      %418 = vst.msk [vmem:[%s386 + $0x1f0] sm:$0xff] %vm281, %v385
      %v419 = vld [vmem:[#allocation2 + $0x7] sm:$0xff]
      %v420 = vld [vmem:[#allocation2 + $0xf] sm:$0xff]
      %v421 = vld [vmem:[#allocation2 + $0x27] sm:$0xff]
      %v422 = vld [vmem:[#allocation2 + $0x2f] sm:$0xff]
      %v423 = vld [vmem:[#allocation2 + $0x47] sm:$0xff]
      %v424 = vld [vmem:[#allocation2 + $0x4f] sm:$0xff]
      %v425 = vld [vmem:[#allocation2 + $0x67] sm:$0xff]
      %v426 = vld [vmem:[#allocation2 + $0x6f] sm:$0xff]
      %v427 = vld [vmem:[#allocation2 + $0x87] sm:$0xff]
      %v428 = vld [vmem:[#allocation2 + $0x8f] sm:$0xff]
      %v429 = vld [vmem:[#allocation2 + $0xa7] sm:$0xff]
      %v430 = vld [vmem:[#allocation2 + $0xaf] sm:$0xff]
      %v431 = vld [vmem:[#allocation2 + $0xc7] sm:$0xff]
      %v432 = vld [vmem:[#allocation2 + $0xcf] sm:$0xff]
      %v433 = vld [vmem:[#allocation2 + $0xe7] sm:$0xff]
      %v434 = vld [vmem:[#allocation2 + $0xef] sm:$0xff]
      %v435 = vld [vmem:[#allocation2 + $0x107] sm:$0xff]
      %v436 = vld [vmem:[#allocation2 + $0x10f] sm:$0xff]
      %v437 = vld [vmem:[#allocation2 + $0x127] sm:$0xff]
      %v438 = vld [vmem:[#allocation2 + $0x12f] sm:$0xff]
      %v439 = vld [vmem:[#allocation2 + $0x147] sm:$0xff]
      %v440 = vld [vmem:[#allocation2 + $0x14f] sm:$0xff]
      %v441 = vld [vmem:[#allocation2 + $0x167] sm:$0xff]
      %v442 = vld [vmem:[#allocation2 + $0x16f] sm:$0xff]
      %v443 = vld [vmem:[#allocation2 + $0x187] sm:$0xff]
      %v444 = vld [vmem:[#allocation2 + $0x18f] sm:$0xff]
      %v445 = vld [vmem:[#allocation2 + $0x1a7] sm:$0xff]
      %v446 = vld [vmem:[#allocation2 + $0x1af] sm:$0xff]
      %v447 = vld [vmem:[#allocation2 + $0x1c7] sm:$0xff]
      %v448 = vld [vmem:[#allocation2 + $0x1cf] sm:$0xff]
      %v449 = vld [vmem:[#allocation2 + $0x1e7] sm:$0xff]
      %v450 = vld [vmem:[#allocation2 + $0x1ef] sm:$0xff]
      %451 = vst.msk [vmem:[#allocation3] sm:$0xff] %vm281, %v419
      %452 = vst.msk [vmem:[#allocation3 + $0x28] sm:$0xff] %vm281, %v420
      %453 = vst.msk [vmem:[#allocation3 + $0x50] sm:$0xff] %vm281, %v421
      %454 = vst.msk [vmem:[#allocation3 + $0x78] sm:$0xff] %vm281, %v422
      %455 = vst.msk [vmem:[#allocation3 + $0xa0] sm:$0xff] %vm281, %v423
      %456 = vst.msk [vmem:[#allocation3 + $0xc8] sm:$0xff] %vm281, %v424
      %457 = vst.msk [vmem:[#allocation3 + $0xf0] sm:$0xff] %vm281, %v425
      %458 = vst.msk [vmem:[#allocation3 + $0x118] sm:$0xff] %vm281, %v426
      %459 = vst.msk [vmem:[#allocation3 + $0x140] sm:$0xff] %vm281, %v427
      %460 = vst.msk [vmem:[#allocation3 + $0x168] sm:$0xff] %vm281, %v428
      %461 = vst.msk [vmem:[#allocation3 + $0x190] sm:$0xff] %vm281, %v429
      %462 = vst.msk [vmem:[#allocation3 + $0x1b8] sm:$0xff] %vm281, %v430
      %463 = vst.msk [vmem:[#allocation3 + $0x1e0] sm:$0xff] %vm281, %v431
      %464 = vst.msk [vmem:[#allocation3 + $0x208] sm:$0xff] %vm281, %v432
      %465 = vst.msk [vmem:[#allocation3 + $0x230] sm:$0xff] %vm281, %v433
      %466 = vst.msk [vmem:[#allocation3 + $0x258] sm:$0xff] %vm281, %v434
      %467 = vst.msk [vmem:[#allocation3 + $0x280] sm:$0xff] %vm281, %v435
      %468 = vst.msk [vmem:[#allocation3 + $0x2a8] sm:$0xff] %vm281, %v436
      %469 = vst.msk [vmem:[#allocation3 + $0x2d0] sm:$0xff] %vm281, %v437
      %470 = vst.msk [vmem:[#allocation3 + $0x2f8] sm:$0xff] %vm281, %v438
      %471 = vst.msk [vmem:[#allocation3 + $0x320] sm:$0xff] %vm281, %v439
      %472 = vst.msk [vmem:[#allocation3 + $0x348] sm:$0xff] %vm281, %v440
      %473 = vst.msk [vmem:[#allocation3 + $0x370] sm:$0xff] %vm281, %v441
      %474 = vst.msk [vmem:[#allocation3 + $0x398] sm:$0xff] %vm281, %v442
      %475 = vst.msk [vmem:[#allocation3 + $0x3c0] sm:$0xff] %vm281, %v443
      %476 = vst.msk [vmem:[#allocation3 + $0x3e8] sm:$0xff] %vm281, %v444
      %477 = vst.msk [vmem:[#allocation3 + $0x410] sm:$0xff] %vm281, %v445
      %478 = vst.msk [vmem:[#allocation3 + $0x438] sm:$0xff] %vm281, %v446
      %479 = vst.msk [vmem:[#allocation3 + $0x460] sm:$0xff] %vm281, %v447
      %480 = vst.msk [vmem:[#allocation3 + $0x488] sm:$0xff] %vm281, %v448
      %481 = vst.msk [vmem:[#allocation3 + $0x4b0] sm:$0xff] %vm281, %v449
      %482 = vst.msk [vmem:[#allocation3 + $0x4d8] sm:$0xff] %vm281, %v450
      %v483 = vld [vmem:[#allocation2 + $0x8] sm:$0xff]
      %v484 = vld [vmem:[#allocation2 + $0x10] sm:$0xff]
      %v485 = vld [vmem:[#allocation2 + $0x28] sm:$0xff]
      %v486 = vld [vmem:[#allocation2 + $0x30] sm:$0xff]
      %v487 = vld [vmem:[#allocation2 + $0x48] sm:$0xff]
      %v488 = vld [vmem:[#allocation2 + $0x50] sm:$0xff]
      %v489 = vld [vmem:[#allocation2 + $0x68] sm:$0xff]
      %v490 = vld [vmem:[#allocation2 + $0x70] sm:$0xff]
      %v491 = vld [vmem:[#allocation2 + $0x88] sm:$0xff]
      %v492 = vld [vmem:[#allocation2 + $0x90] sm:$0xff]
      %v493 = vld [vmem:[#allocation2 + $0xa8] sm:$0xff]
      %v494 = vld [vmem:[#allocation2 + $0xb0] sm:$0xff]
      %v495 = vld [vmem:[#allocation2 + $0xc8] sm:$0xff]
      %v496 = vld [vmem:[#allocation2 + $0xd0] sm:$0xff]
      %v497 = vld [vmem:[#allocation2 + $0xe8] sm:$0xff]
      %v498 = vld [vmem:[#allocation2 + $0xf0] sm:$0xff]
      %v499 = vld [vmem:[#allocation2 + $0x108] sm:$0xff]
      %v500 = vld [vmem:[#allocation2 + $0x110] sm:$0xff]
      %v501 = vld [vmem:[#allocation2 + $0x128] sm:$0xff]
      %v502 = vld [vmem:[#allocation2 + $0x130] sm:$0xff]
      %v503 = vld [vmem:[#allocation2 + $0x148] sm:$0xff]
      %v504 = vld [vmem:[#allocation2 + $0x150] sm:$0xff]
      %v505 = vld [vmem:[#allocation2 + $0x168] sm:$0xff]
      %v506 = vld [vmem:[#allocation2 + $0x170] sm:$0xff]
      %v507 = vld [vmem:[#allocation2 + $0x188] sm:$0xff]
      %v508 = vld [vmem:[#allocation2 + $0x190] sm:$0xff]
      %v509 = vld [vmem:[#allocation2 + $0x1a8] sm:$0xff]
      %v510 = vld [vmem:[#allocation2 + $0x1b0] sm:$0xff]
      %v511 = vld [vmem:[#allocation2 + $0x1c8] sm:$0xff]
      %v512 = vld [vmem:[#allocation2 + $0x1d0] sm:$0xff]
      %v513 = vld [vmem:[#allocation2 + $0x1e8] sm:$0xff]
      %v514 = vld [vmem:[#allocation2 + $0x1f0] sm:$0xff]
      %547 = vrot.lane.b32.xlu0 %v483, 64
      %v548 = vpop.permute.xlu0 %547
      %549 = vrot.lane.b32.xlu0 %v484, 64
      %v550 = vpop.permute.xlu0 %549
      %551 = vrot.lane.b32.xlu0 %v485, 64
      %v552 = vpop.permute.xlu0 %551
      %553 = vrot.lane.b32.xlu0 %v486, 64
      %v554 = vpop.permute.xlu0 %553
      %555 = vrot.lane.b32.xlu0 %v487, 64
      %v556 = vpop.permute.xlu0 %555
      %557 = vrot.lane.b32.xlu0 %v488, 64
      %v558 = vpop.permute.xlu0 %557
      %559 = vrot.lane.b32.xlu0 %v489, 64
      %v560 = vpop.permute.xlu0 %559
      %561 = vrot.lane.b32.xlu0 %v490, 64
      %v562 = vpop.permute.xlu0 %561
      %563 = vrot.lane.b32.xlu0 %v491, 64
      %v564 = vpop.permute.xlu0 %563
      %565 = vrot.lane.b32.xlu0 %v492, 64
      %v566 = vpop.permute.xlu0 %565
      %567 = vrot.lane.b32.xlu0 %v493, 64
      %v568 = vpop.permute.xlu0 %567
      %569 = vrot.lane.b32.xlu0 %v494, 64
      %v570 = vpop.permute.xlu0 %569
      %571 = vrot.lane.b32.xlu0 %v495, 64
      %v572 = vpop.permute.xlu0 %571
      %573 = vrot.lane.b32.xlu0 %v496, 64
      %v574 = vpop.permute.xlu0 %573
      %575 = vrot.lane.b32.xlu0 %v497, 64
      %v576 = vpop.permute.xlu0 %575
      %577 = vrot.lane.b32.xlu0 %v498, 64
      %v578 = vpop.permute.xlu0 %577
      %579 = vrot.lane.b32.xlu0 %v499, 64
      %v580 = vpop.permute.xlu0 %579
      %581 = vrot.lane.b32.xlu0 %v500, 64
      %v582 = vpop.permute.xlu0 %581
      %583 = vrot.lane.b32.xlu0 %v501, 64
      %v584 = vpop.permute.xlu0 %583
      %585 = vrot.lane.b32.xlu0 %v502, 64
      %v586 = vpop.permute.xlu0 %585
      %587 = vrot.lane.b32.xlu0 %v503, 64
      %v588 = vpop.permute.xlu0 %587
      %589 = vrot.lane.b32.xlu0 %v504, 64
      %v590 = vpop.permute.xlu0 %589
      %591 = vrot.lane.b32.xlu0 %v505, 64
      %v592 = vpop.permute.xlu0 %591
      %593 = vrot.lane.b32.xlu0 %v506, 64
      %v594 = vpop.permute.xlu0 %593
      %595 = vrot.lane.b32.xlu0 %v507, 64
      %v596 = vpop.permute.xlu0 %595
      %597 = vrot.lane.b32.xlu0 %v508, 64
      %v598 = vpop.permute.xlu0 %597
      %599 = vrot.lane.b32.xlu0 %v509, 64
      %v600 = vpop.permute.xlu0 %599
      %601 = vrot.lane.b32.xlu0 %v510, 64
      %v602 = vpop.permute.xlu0 %601
      %603 = vrot.lane.b32.xlu0 %v511, 64
      %v604 = vpop.permute.xlu0 %603
      %605 = vrot.lane.b32.xlu0 %v512, 64
      %v606 = vpop.permute.xlu0 %605
      %607 = vrot.lane.b32.xlu0 %v513, 64
      %v608 = vpop.permute.xlu0 %607
      %609 = vrot.lane.b32.xlu0 %v514, 64
      %v610 = vpop.permute.xlu0 %609
      %vm643 = vcmask 1048064
      %644 = vst.msk [vmem:[#allocation3] sm:$0xff] %vm643, %v548
      %645 = vst.msk [vmem:[#allocation3 + $0x28] sm:$0xff] %vm643, %v550
      %646 = vst.msk [vmem:[#allocation3 + $0x50] sm:$0xff] %vm643, %v552
      %647 = vst.msk [vmem:[#allocation3 + $0x78] sm:$0xff] %vm643, %v554
      %648 = vst.msk [vmem:[#allocation3 + $0xa0] sm:$0xff] %vm643, %v556
      %649 = vst.msk [vmem:[#allocation3 + $0xc8] sm:$0xff] %vm643, %v558
      %650 = vst.msk [vmem:[#allocation3 + $0xf0] sm:$0xff] %vm643, %v560
      %651 = vst.msk [vmem:[#allocation3 + $0x118] sm:$0xff] %vm643, %v562
      %652 = vst.msk [vmem:[#allocation3 + $0x140] sm:$0xff] %vm643, %v564
      %653 = vst.msk [vmem:[#allocation3 + $0x168] sm:$0xff] %vm643, %v566
      %654 = vst.msk [vmem:[#allocation3 + $0x190] sm:$0xff] %vm643, %v568
      %655 = vst.msk [vmem:[#allocation3 + $0x1b8] sm:$0xff] %vm643, %v570
      %656 = vst.msk [vmem:[#allocation3 + $0x1e0] sm:$0xff] %vm643, %v572
      %657 = vst.msk [vmem:[#allocation3 + $0x208] sm:$0xff] %vm643, %v574
      %658 = vst.msk [vmem:[#allocation3 + $0x230] sm:$0xff] %vm643, %v576
      %659 = vst.msk [vmem:[#allocation3 + $0x258] sm:$0xff] %vm643, %v578
      %660 = vst.msk [vmem:[#allocation3 + $0x280] sm:$0xff] %vm643, %v580
      %661 = vst.msk [vmem:[#allocation3 + $0x2a8] sm:$0xff] %vm643, %v582
      %662 = vst.msk [vmem:[#allocation3 + $0x2d0] sm:$0xff] %vm643, %v584
      %663 = vst.msk [vmem:[#allocation3 + $0x2f8] sm:$0xff] %vm643, %v586
      %664 = vst.msk [vmem:[#allocation3 + $0x320] sm:$0xff] %vm643, %v588
      %665 = vst.msk [vmem:[#allocation3 + $0x348] sm:$0xff] %vm643, %v590
      %666 = vst.msk [vmem:[#allocation3 + $0x370] sm:$0xff] %vm643, %v592
      %667 = vst.msk [vmem:[#allocation3 + $0x398] sm:$0xff] %vm643, %v594
      %668 = vst.msk [vmem:[#allocation3 + $0x3c0] sm:$0xff] %vm643, %v596
      %669 = vst.msk [vmem:[#allocation3 + $0x3e8] sm:$0xff] %vm643, %v598
      %670 = vst.msk [vmem:[#allocation3 + $0x410] sm:$0xff] %vm643, %v600
      %671 = vst.msk [vmem:[#allocation3 + $0x438] sm:$0xff] %vm643, %v602
      %672 = vst.msk [vmem:[#allocation3 + $0x460] sm:$0xff] %vm643, %v604
      %673 = vst.msk [vmem:[#allocation3 + $0x488] sm:$0xff] %vm643, %v606
      %674 = vst.msk [vmem:[#allocation3 + $0x4b0] sm:$0xff] %vm643, %v608
      %675 = vst.msk [vmem:[#allocation3 + $0x4d8] sm:$0xff] %vm643, %v610
      %v676 = vld [vmem:[#allocation2 + $0x9] sm:$0xff]
      %v677 = vld [vmem:[#allocation2 + $0x11] sm:$0xff]
      %v678 = vld [vmem:[#allocation2 + $0x29] sm:$0xff]
      %v679 = vld [vmem:[#allocation2 + $0x31] sm:$0xff]
      %v680 = vld [vmem:[#allocation2 + $0x49] sm:$0xff]
      %v681 = vld [vmem:[#allocation2 + $0x51] sm:$0xff]
      %v682 = vld [vmem:[#allocation2 + $0x69] sm:$0xff]
      %v683 = vld [vmem:[#allocation2 + $0x71] sm:$0xff]
      %v684 = vld [vmem:[#allocation2 + $0x89] sm:$0xff]
      %v685 = vld [vmem:[#allocation2 + $0x91] sm:$0xff]
      %v686 = vld [vmem:[#allocation2 + $0xa9] sm:$0xff]
      %v687 = vld [vmem:[#allocation2 + $0xb1] sm:$0xff]
      %v688 = vld [vmem:[#allocation2 + $0xc9] sm:$0xff]
      %v689 = vld [vmem:[#allocation2 + $0xd1] sm:$0xff]
      %v690 = vld [vmem:[#allocation2 + $0xe9] sm:$0xff]
      %v691 = vld [vmem:[#allocation2 + $0xf1] sm:$0xff]
      %v692 = vld [vmem:[#allocation2 + $0x109] sm:$0xff]
      %v693 = vld [vmem:[#allocation2 + $0x111] sm:$0xff]
      %v694 = vld [vmem:[#allocation2 + $0x129] sm:$0xff]
      %v695 = vld [vmem:[#allocation2 + $0x131] sm:$0xff]
      %v696 = vld [vmem:[#allocation2 + $0x149] sm:$0xff]
      %v697 = vld [vmem:[#allocation2 + $0x151] sm:$0xff]
      %v698 = vld [vmem:[#allocation2 + $0x169] sm:$0xff]
      %v699 = vld [vmem:[#allocation2 + $0x171] sm:$0xff]
      %v700 = vld [vmem:[#allocation2 + $0x189] sm:$0xff]
      %v701 = vld [vmem:[#allocation2 + $0x191] sm:$0xff]
      %v702 = vld [vmem:[#allocation2 + $0x1a9] sm:$0xff]
      %v703 = vld [vmem:[#allocation2 + $0x1b1] sm:$0xff]
      %v704 = vld [vmem:[#allocation2 + $0x1c9] sm:$0xff]
      %v705 = vld [vmem:[#allocation2 + $0x1d1] sm:$0xff]
      %v706 = vld [vmem:[#allocation2 + $0x1e9] sm:$0xff]
      %v707 = vld [vmem:[#allocation2 + $0x1f1] sm:$0xff]
      %708 = vst.msk [vmem:[#allocation3 + $0x8] sm:$0xff] %vm281, %v676
      %709 = vst.msk [vmem:[#allocation3 + $0x30] sm:$0xff] %vm281, %v677
      %710 = vst.msk [vmem:[#allocation3 + $0x58] sm:$0xff] %vm281, %v678
      %711 = vst.msk [vmem:[#allocation3 + $0x80] sm:$0xff] %vm281, %v679
      %712 = vst.msk [vmem:[#allocation3 + $0xa8] sm:$0xff] %vm281, %v680
      %713 = vst.msk [vmem:[#allocation3 + $0xd0] sm:$0xff] %vm281, %v681
      %714 = vst.msk [vmem:[#allocation3 + $0xf8] sm:$0xff] %vm281, %v682
      %715 = vst.msk [vmem:[#allocation3 + $0x120] sm:$0xff] %vm281, %v683
      %716 = vst.msk [vmem:[#allocation3 + $0x148] sm:$0xff] %vm281, %v684
      %717 = vst.msk [vmem:[#allocation3 + $0x170] sm:$0xff] %vm281, %v685
      %718 = vst.msk [vmem:[#allocation3 + $0x198] sm:$0xff] %vm281, %v686
      %719 = vst.msk [vmem:[#allocation3 + $0x1c0] sm:$0xff] %vm281, %v687
      %720 = vst.msk [vmem:[#allocation3 + $0x1e8] sm:$0xff] %vm281, %v688
      %721 = vst.msk [vmem:[#allocation3 + $0x210] sm:$0xff] %vm281, %v689
      %722 = vst.msk [vmem:[#allocation3 + $0x238] sm:$0xff] %vm281, %v690
      %723 = vst.msk [vmem:[#allocation3 + $0x260] sm:$0xff] %vm281, %v691
      %724 = vst.msk [vmem:[#allocation3 + $0x288] sm:$0xff] %vm281, %v692
      %725 = vst.msk [vmem:[#allocation3 + $0x2b0] sm:$0xff] %vm281, %v693
      %726 = vst.msk [vmem:[#allocation3 + $0x2d8] sm:$0xff] %vm281, %v694
      %727 = vst.msk [vmem:[#allocation3 + $0x300] sm:$0xff] %vm281, %v695
      %728 = vst.msk [vmem:[#allocation3 + $0x328] sm:$0xff] %vm281, %v696
      %729 = vst.msk [vmem:[#allocation3 + $0x350] sm:$0xff] %vm281, %v697
      %730 = vst.msk [vmem:[#allocation3 + $0x378] sm:$0xff] %vm281, %v698
      %731 = vst.msk [vmem:[#allocation3 + $0x3a0] sm:$0xff] %vm281, %v699
      %732 = vst.msk [vmem:[#allocation3 + $0x3c8] sm:$0xff] %vm281, %v700
      %733 = vst.msk [vmem:[#allocation3 + $0x3f0] sm:$0xff] %vm281, %v701
      %734 = vst.msk [vmem:[#allocation3 + $0x418] sm:$0xff] %vm281, %v702
      %735 = vst.msk [vmem:[#allocation3 + $0x440] sm:$0xff] %vm281, %v703
      %736 = vst.msk [vmem:[#allocation3 + $0x468] sm:$0xff] %vm281, %v704
      %737 = vst.msk [vmem:[#allocation3 + $0x490] sm:$0xff] %vm281, %v705
      %738 = vst.msk [vmem:[#allocation3 + $0x4b8] sm:$0xff] %vm281, %v706
      %739 = vst.msk [vmem:[#allocation3 + $0x4e0] sm:$0xff] %vm281, %v707
      %v740 = vld [vmem:[%s386 + $0x7] sm:$0xff]
      %v741 = vld [vmem:[%s386 + $0xf] sm:$0xff]
      %v742 = vld [vmem:[%s386 + $0x27] sm:$0xff]
      %v743 = vld [vmem:[%s386 + $0x2f] sm:$0xff]
      %v744 = vld [vmem:[%s386 + $0x47] sm:$0xff]
      %v745 = vld [vmem:[%s386 + $0x4f] sm:$0xff]
      %v746 = vld [vmem:[%s386 + $0x67] sm:$0xff]
      %v747 = vld [vmem:[%s386 + $0x6f] sm:$0xff]
      %v748 = vld [vmem:[%s386 + $0x87] sm:$0xff]
      %v749 = vld [vmem:[%s386 + $0x8f] sm:$0xff]
      %v750 = vld [vmem:[%s386 + $0xa7] sm:$0xff]
      %v751 = vld [vmem:[%s386 + $0xaf] sm:$0xff]
      %v752 = vld [vmem:[%s386 + $0xc7] sm:$0xff]
      %v753 = vld [vmem:[%s386 + $0xcf] sm:$0xff]
      %v754 = vld [vmem:[%s386 + $0xe7] sm:$0xff]
      %v755 = vld [vmem:[%s386 + $0xef] sm:$0xff]
      %v756 = vld [vmem:[%s386 + $0x107] sm:$0xff]
      %v757 = vld [vmem:[%s386 + $0x10f] sm:$0xff]
      %v758 = vld [vmem:[%s386 + $0x127] sm:$0xff]
      %v759 = vld [vmem:[%s386 + $0x12f] sm:$0xff]
      %v760 = vld [vmem:[%s386 + $0x147] sm:$0xff]
      %v761 = vld [vmem:[%s386 + $0x14f] sm:$0xff]
      %v762 = vld [vmem:[%s386 + $0x167] sm:$0xff]
      %v763 = vld [vmem:[%s386 + $0x16f] sm:$0xff]
      %v764 = vld [vmem:[%s386 + $0x187] sm:$0xff]
      %v765 = vld [vmem:[%s386 + $0x18f] sm:$0xff]
      %v766 = vld [vmem:[%s386 + $0x1a7] sm:$0xff]
      %v767 = vld [vmem:[%s386 + $0x1af] sm:$0xff]
      %v768 = vld [vmem:[%s386 + $0x1c7] sm:$0xff]
      %v769 = vld [vmem:[%s386 + $0x1cf] sm:$0xff]
      %v770 = vld [vmem:[%s386 + $0x1e7] sm:$0xff]
      %v771 = vld [vmem:[%s386 + $0x1ef] sm:$0xff]
      %804 = vrot.lane.b32.xlu0 %v740, 64
      %v805 = vpop.permute.xlu0 %804
      %806 = vrot.lane.b32.xlu0 %v741, 64
      %v807 = vpop.permute.xlu0 %806
      %808 = vrot.lane.b32.xlu0 %v742, 64
      %v809 = vpop.permute.xlu0 %808
      %810 = vrot.lane.b32.xlu0 %v743, 64
      %v811 = vpop.permute.xlu0 %810
      %812 = vrot.lane.b32.xlu0 %v744, 64
      %v813 = vpop.permute.xlu0 %812
      %814 = vrot.lane.b32.xlu0 %v745, 64
      %v815 = vpop.permute.xlu0 %814
      %816 = vrot.lane.b32.xlu0 %v746, 64
      %v817 = vpop.permute.xlu0 %816
      %818 = vrot.lane.b32.xlu0 %v747, 64
      %v819 = vpop.permute.xlu0 %818
      %820 = vrot.lane.b32.xlu0 %v748, 64
      %v821 = vpop.permute.xlu0 %820
      %822 = vrot.lane.b32.xlu0 %v749, 64
      %v823 = vpop.permute.xlu0 %822
      %824 = vrot.lane.b32.xlu0 %v750, 64
      %v825 = vpop.permute.xlu0 %824
      %826 = vrot.lane.b32.xlu0 %v751, 64
      %v827 = vpop.permute.xlu0 %826
      %828 = vrot.lane.b32.xlu0 %v752, 64
      %v829 = vpop.permute.xlu0 %828
      %830 = vrot.lane.b32.xlu0 %v753, 64
      %v831 = vpop.permute.xlu0 %830
      %832 = vrot.lane.b32.xlu0 %v754, 64
      %v833 = vpop.permute.xlu0 %832
      %834 = vrot.lane.b32.xlu0 %v755, 64
      %v835 = vpop.permute.xlu0 %834
      %836 = vrot.lane.b32.xlu0 %v756, 64
      %v837 = vpop.permute.xlu0 %836
      %838 = vrot.lane.b32.xlu0 %v757, 64
      %v839 = vpop.permute.xlu0 %838
      %840 = vrot.lane.b32.xlu0 %v758, 64
      %v841 = vpop.permute.xlu0 %840
      %842 = vrot.lane.b32.xlu0 %v759, 64
      %v843 = vpop.permute.xlu0 %842
      %844 = vrot.lane.b32.xlu0 %v760, 64
      %v845 = vpop.permute.xlu0 %844
      %846 = vrot.lane.b32.xlu0 %v761, 64
      %v847 = vpop.permute.xlu0 %846
      %848 = vrot.lane.b32.xlu0 %v762, 64
      %v849 = vpop.permute.xlu0 %848
      %850 = vrot.lane.b32.xlu0 %v763, 64
      %v851 = vpop.permute.xlu0 %850
      %852 = vrot.lane.b32.xlu0 %v764, 64
      %v853 = vpop.permute.xlu0 %852
      %854 = vrot.lane.b32.xlu0 %v765, 64
      %v855 = vpop.permute.xlu0 %854
      %856 = vrot.lane.b32.xlu0 %v766, 64
      %v857 = vpop.permute.xlu0 %856
      %858 = vrot.lane.b32.xlu0 %v767, 64
      %v859 = vpop.permute.xlu0 %858
      %860 = vrot.lane.b32.xlu0 %v768, 64
      %v861 = vpop.permute.xlu0 %860
      %862 = vrot.lane.b32.xlu0 %v769, 64
      %v863 = vpop.permute.xlu0 %862
      %864 = vrot.lane.b32.xlu0 %v770, 64
      %v865 = vpop.permute.xlu0 %864
      %866 = vrot.lane.b32.xlu0 %v771, 64
      %v867 = vpop.permute.xlu0 %866
      %900 = vst.msk [vmem:[#allocation3 + $0x8] sm:$0xff] %vm643, %v805
      %901 = vst.msk [vmem:[#allocation3 + $0x30] sm:$0xff] %vm643, %v807
      %902 = vst.msk [vmem:[#allocation3 + $0x58] sm:$0xff] %vm643, %v809
      %903 = vst.msk [vmem:[#allocation3 + $0x80] sm:$0xff] %vm643, %v811
      %904 = vst.msk [vmem:[#allocation3 + $0xa8] sm:$0xff] %vm643, %v813
      %905 = vst.msk [vmem:[#allocation3 + $0xd0] sm:$0xff] %vm643, %v815
      %906 = vst.msk [vmem:[#allocation3 + $0xf8] sm:$0xff] %vm643, %v817
      %907 = vst.msk [vmem:[#allocation3 + $0x120] sm:$0xff] %vm643, %v819
      %908 = vst.msk [vmem:[#allocation3 + $0x148] sm:$0xff] %vm643, %v821
      %909 = vst.msk [vmem:[#allocation3 + $0x170] sm:$0xff] %vm643, %v823
      %910 = vst.msk [vmem:[#allocation3 + $0x198] sm:$0xff] %vm643, %v825
      %911 = vst.msk [vmem:[#allocation3 + $0x1c0] sm:$0xff] %vm643, %v827
      %912 = vst.msk [vmem:[#allocation3 + $0x1e8] sm:$0xff] %vm643, %v829
      %913 = vst.msk [vmem:[#allocation3 + $0x210] sm:$0xff] %vm643, %v831
      %914 = vst.msk [vmem:[#allocation3 + $0x238] sm:$0xff] %vm643, %v833
      %915 = vst.msk [vmem:[#allocation3 + $0x260] sm:$0xff] %vm643, %v835
      %916 = vst.msk [vmem:[#allocation3 + $0x288] sm:$0xff] %vm643, %v837
      %917 = vst.msk [vmem:[#allocation3 + $0x2b0] sm:$0xff] %vm643, %v839
      %918 = vst.msk [vmem:[#allocation3 + $0x2d8] sm:$0xff] %vm643, %v841
      %919 = vst.msk [vmem:[#allocation3 + $0x300] sm:$0xff] %vm643, %v843
      %920 = vst.msk [vmem:[#allocation3 + $0x328] sm:$0xff] %vm643, %v845
      %921 = vst.msk [vmem:[#allocation3 + $0x350] sm:$0xff] %vm643, %v847
      %922 = vst.msk [vmem:[#allocation3 + $0x378] sm:$0xff] %vm643, %v849
      %923 = vst.msk [vmem:[#allocation3 + $0x3a0] sm:$0xff] %vm643, %v851
      %924 = vst.msk [vmem:[#allocation3 + $0x3c8] sm:$0xff] %vm643, %v853
      %925 = vst.msk [vmem:[#allocation3 + $0x3f0] sm:$0xff] %vm643, %v855
      %926 = vst.msk [vmem:[#allocation3 + $0x418] sm:$0xff] %vm643, %v857
      %927 = vst.msk [vmem:[#allocation3 + $0x440] sm:$0xff] %vm643, %v859
      %928 = vst.msk [vmem:[#allocation3 + $0x468] sm:$0xff] %vm643, %v861
      %929 = vst.msk [vmem:[#allocation3 + $0x490] sm:$0xff] %vm643, %v863
      %930 = vst.msk [vmem:[#allocation3 + $0x4b8] sm:$0xff] %vm643, %v865
      %931 = vst.msk [vmem:[#allocation3 + $0x4e0] sm:$0xff] %vm643, %v867
      %v932 = vld [vmem:[%s386 + $0x8] sm:$0xff]
      %v933 = vld [vmem:[%s386 + $0x10] sm:$0xff]
      %v934 = vld [vmem:[%s386 + $0x28] sm:$0xff]
      %v935 = vld [vmem:[%s386 + $0x30] sm:$0xff]
      %v936 = vld [vmem:[%s386 + $0x48] sm:$0xff]
      %v937 = vld [vmem:[%s386 + $0x50] sm:$0xff]
      %v938 = vld [vmem:[%s386 + $0x68] sm:$0xff]
      %v939 = vld [vmem:[%s386 + $0x70] sm:$0xff]
      %v940 = vld [vmem:[%s386 + $0x88] sm:$0xff]
      %v941 = vld [vmem:[%s386 + $0x90] sm:$0xff]
      %v942 = vld [vmem:[%s386 + $0xa8] sm:$0xff]
      %v943 = vld [vmem:[%s386 + $0xb0] sm:$0xff]
      %v944 = vld [vmem:[%s386 + $0xc8] sm:$0xff]
      %v945 = vld [vmem:[%s386 + $0xd0] sm:$0xff]
      %v946 = vld [vmem:[%s386 + $0xe8] sm:$0xff]
      %v947 = vld [vmem:[%s386 + $0xf0] sm:$0xff]
      %v948 = vld [vmem:[%s386 + $0x108] sm:$0xff]
      %v949 = vld [vmem:[%s386 + $0x110] sm:$0xff]
      %v950 = vld [vmem:[%s386 + $0x128] sm:$0xff]
      %v951 = vld [vmem:[%s386 + $0x130] sm:$0xff]
      %v952 = vld [vmem:[%s386 + $0x148] sm:$0xff]
      %v953 = vld [vmem:[%s386 + $0x150] sm:$0xff]
      %v954 = vld [vmem:[%s386 + $0x168] sm:$0xff]
      %v955 = vld [vmem:[%s386 + $0x170] sm:$0xff]
      %v956 = vld [vmem:[%s386 + $0x188] sm:$0xff]
      %v957 = vld [vmem:[%s386 + $0x190] sm:$0xff]
      %v958 = vld [vmem:[%s386 + $0x1a8] sm:$0xff]
      %v959 = vld [vmem:[%s386 + $0x1b0] sm:$0xff]
      %v960 = vld [vmem:[%s386 + $0x1c8] sm:$0xff]
      %v961 = vld [vmem:[%s386 + $0x1d0] sm:$0xff]
      %v962 = vld [vmem:[%s386 + $0x1e8] sm:$0xff]
      %v963 = vld [vmem:[%s386 + $0x1f0] sm:$0xff]
      %964 = vst.msk [vmem:[#allocation3 + $0x10] sm:$0xff] %vm281, %v932
      %965 = vst.msk [vmem:[#allocation3 + $0x38] sm:$0xff] %vm281, %v933
      %966 = vst.msk [vmem:[#allocation3 + $0x60] sm:$0xff] %vm281, %v934
      %967 = vst.msk [vmem:[#allocation3 + $0x88] sm:$0xff] %vm281, %v935
      %968 = vst.msk [vmem:[#allocation3 + $0xb0] sm:$0xff] %vm281, %v936
      %969 = vst.msk [vmem:[#allocation3 + $0xd8] sm:$0xff] %vm281, %v937
      %970 = vst.msk [vmem:[#allocation3 + $0x100] sm:$0xff] %vm281, %v938
      %971 = vst.msk [vmem:[#allocation3 + $0x128] sm:$0xff] %vm281, %v939
      %972 = vst.msk [vmem:[#allocation3 + $0x150] sm:$0xff] %vm281, %v940
      %973 = vst.msk [vmem:[#allocation3 + $0x178] sm:$0xff] %vm281, %v941
      %974 = vst.msk [vmem:[#allocation3 + $0x1a0] sm:$0xff] %vm281, %v942
      %975 = vst.msk [vmem:[#allocation3 + $0x1c8] sm:$0xff] %vm281, %v943
      %976 = vst.msk [vmem:[#allocation3 + $0x1f0] sm:$0xff] %vm281, %v944
      %977 = vst.msk [vmem:[#allocation3 + $0x218] sm:$0xff] %vm281, %v945
      %978 = vst.msk [vmem:[#allocation3 + $0x240] sm:$0xff] %vm281, %v946
      %979 = vst.msk [vmem:[#allocation3 + $0x268] sm:$0xff] %vm281, %v947
      %980 = vst.msk [vmem:[#allocation3 + $0x290] sm:$0xff] %vm281, %v948
      %981 = vst.msk [vmem:[#allocation3 + $0x2b8] sm:$0xff] %vm281, %v949
      %982 = vst.msk [vmem:[#allocation3 + $0x2e0] sm:$0xff] %vm281, %v950
      %983 = vst.msk [vmem:[#allocation3 + $0x308] sm:$0xff] %vm281, %v951
      %984 = vst.msk [vmem:[#allocation3 + $0x330] sm:$0xff] %vm281, %v952
      %985 = vst.msk [vmem:[#allocation3 + $0x358] sm:$0xff] %vm281, %v953
      %986 = vst.msk [vmem:[#allocation3 + $0x380] sm:$0xff] %vm281, %v954
      %987 = vst.msk [vmem:[#allocation3 + $0x3a8] sm:$0xff] %vm281, %v955
      %988 = vst.msk [vmem:[#allocation3 + $0x3d0] sm:$0xff] %vm281, %v956
      %989 = vst.msk [vmem:[#allocation3 + $0x3f8] sm:$0xff] %vm281, %v957
      %990 = vst.msk [vmem:[#allocation3 + $0x420] sm:$0xff] %vm281, %v958
      %991 = vst.msk [vmem:[#allocation3 + $0x448] sm:$0xff] %vm281, %v959
      %992 = vst.msk [vmem:[#allocation3 + $0x470] sm:$0xff] %vm281, %v960
      %993 = vst.msk [vmem:[#allocation3 + $0x498] sm:$0xff] %vm281, %v961
      %994 = vst.msk [vmem:[#allocation3 + $0x4c0] sm:$0xff] %vm281, %v962
      %995 = vst.msk [vmem:[#allocation3 + $0x4e8] sm:$0xff] %vm281, %v963
      %v996 = vld [vmem:[%s386 + $0x9] sm:$0xff]
      %v997 = vld [vmem:[%s386 + $0x11] sm:$0xff]
      %v998 = vld [vmem:[%s386 + $0x29] sm:$0xff]
      %v999 = vld [vmem:[%s386 + $0x31] sm:$0xff]
      %v1000 = vld [vmem:[%s386 + $0x49] sm:$0xff]
      %v1001 = vld [vmem:[%s386 + $0x51] sm:$0xff]
      %v1002 = vld [vmem:[%s386 + $0x69] sm:$0xff]
      %v1003 = vld [vmem:[%s386 + $0x71] sm:$0xff]
      %v1004 = vld [vmem:[%s386 + $0x89] sm:$0xff]
      %v1005 = vld [vmem:[%s386 + $0x91] sm:$0xff]
      %v1006 = vld [vmem:[%s386 + $0xa9] sm:$0xff]
      %v1007 = vld [vmem:[%s386 + $0xb1] sm:$0xff]
      %v1008 = vld [vmem:[%s386 + $0xc9] sm:$0xff]
      %v1009 = vld [vmem:[%s386 + $0xd1] sm:$0xff]
      %v1010 = vld [vmem:[%s386 + $0xe9] sm:$0xff]
      %v1011 = vld [vmem:[%s386 + $0xf1] sm:$0xff]
      %v1012 = vld [vmem:[%s386 + $0x109] sm:$0xff]
      %v1013 = vld [vmem:[%s386 + $0x111] sm:$0xff]
      %v1014 = vld [vmem:[%s386 + $0x129] sm:$0xff]
      %v1015 = vld [vmem:[%s386 + $0x131] sm:$0xff]
      %v1016 = vld [vmem:[%s386 + $0x149] sm:$0xff]
      %v1017 = vld [vmem:[%s386 + $0x151] sm:$0xff]
      %v1018 = vld [vmem:[%s386 + $0x169] sm:$0xff]
      %v1019 = vld [vmem:[%s386 + $0x171] sm:$0xff]
      %v1020 = vld [vmem:[%s386 + $0x189] sm:$0xff]
      %v1021 = vld [vmem:[%s386 + $0x191] sm:$0xff]
      %v1022 = vld [vmem:[%s386 + $0x1a9] sm:$0xff]
      %v1023 = vld [vmem:[%s386 + $0x1b1] sm:$0xff]
      %v1024 = vld [vmem:[%s386 + $0x1c9] sm:$0xff]
      %v1025 = vld [vmem:[%s386 + $0x1d1] sm:$0xff]
      %v1026 = vld [vmem:[%s386 + $0x1e9] sm:$0xff]
      %v1027 = vld [vmem:[%s386 + $0x1f1] sm:$0xff]
      %1060 = vrot.lane.b32.xlu0 %v996, 64
      %v1061 = vpop.permute.xlu0 %1060
      %1062 = vrot.lane.b32.xlu0 %v997, 64
      %v1063 = vpop.permute.xlu0 %1062
      %1064 = vrot.lane.b32.xlu0 %v998, 64
      %v1065 = vpop.permute.xlu0 %1064
      %1066 = vrot.lane.b32.xlu0 %v999, 64
      %v1067 = vpop.permute.xlu0 %1066
      %1068 = vrot.lane.b32.xlu0 %v1000, 64
      %v1069 = vpop.permute.xlu0 %1068
      %1070 = vrot.lane.b32.xlu0 %v1001, 64
      %v1071 = vpop.permute.xlu0 %1070
      %1072 = vrot.lane.b32.xlu0 %v1002, 64
      %v1073 = vpop.permute.xlu0 %1072
      %1074 = vrot.lane.b32.xlu0 %v1003, 64
      %v1075 = vpop.permute.xlu0 %1074
      %1076 = vrot.lane.b32.xlu0 %v1004, 64
      %v1077 = vpop.permute.xlu0 %1076
      %1078 = vrot.lane.b32.xlu0 %v1005, 64
      %v1079 = vpop.permute.xlu0 %1078
      %1080 = vrot.lane.b32.xlu0 %v1006, 64
      %v1081 = vpop.permute.xlu0 %1080
      %1082 = vrot.lane.b32.xlu0 %v1007, 64
      %v1083 = vpop.permute.xlu0 %1082
      %1084 = vrot.lane.b32.xlu0 %v1008, 64
      %v1085 = vpop.permute.xlu0 %1084
      %1086 = vrot.lane.b32.xlu0 %v1009, 64
      %v1087 = vpop.permute.xlu0 %1086
      %1088 = vrot.lane.b32.xlu0 %v1010, 64
      %v1089 = vpop.permute.xlu0 %1088
      %1090 = vrot.lane.b32.xlu0 %v1011, 64
      %v1091 = vpop.permute.xlu0 %1090
      %1092 = vrot.lane.b32.xlu0 %v1012, 64
      %v1093 = vpop.permute.xlu0 %1092
      %1094 = vrot.lane.b32.xlu0 %v1013, 64
      %v1095 = vpop.permute.xlu0 %1094
      %1096 = vrot.lane.b32.xlu0 %v1014, 64
      %v1097 = vpop.permute.xlu0 %1096
      %1098 = vrot.lane.b32.xlu0 %v1015, 64
      %v1099 = vpop.permute.xlu0 %1098
      %1100 = vrot.lane.b32.xlu0 %v1016, 64
      %v1101 = vpop.permute.xlu0 %1100
      %1102 = vrot.lane.b32.xlu0 %v1017, 64
      %v1103 = vpop.permute.xlu0 %1102
      %1104 = vrot.lane.b32.xlu0 %v1018, 64
      %v1105 = vpop.permute.xlu0 %1104
      %1106 = vrot.lane.b32.xlu0 %v1019, 64
      %v1107 = vpop.permute.xlu0 %1106
      %1108 = vrot.lane.b32.xlu0 %v1020, 64
      %v1109 = vpop.permute.xlu0 %1108
      %1110 = vrot.lane.b32.xlu0 %v1021, 64
      %v1111 = vpop.permute.xlu0 %1110
      %1112 = vrot.lane.b32.xlu0 %v1022, 64
      %v1113 = vpop.permute.xlu0 %1112
      %1114 = vrot.lane.b32.xlu0 %v1023, 64
      %v1115 = vpop.permute.xlu0 %1114
      %1116 = vrot.lane.b32.xlu0 %v1024, 64
      %v1117 = vpop.permute.xlu0 %1116
      %1118 = vrot.lane.b32.xlu0 %v1025, 64
      %v1119 = vpop.permute.xlu0 %1118
      %1120 = vrot.lane.b32.xlu0 %v1026, 64
      %v1121 = vpop.permute.xlu0 %1120
      %1122 = vrot.lane.b32.xlu0 %v1027, 64
      %v1123 = vpop.permute.xlu0 %1122
      %1156 = vst.msk [vmem:[#allocation3 + $0x10] sm:$0xff] %vm643, %v1061
      %1157 = vst.msk [vmem:[#allocation3 + $0x38] sm:$0xff] %vm643, %v1063
      %1158 = vst.msk [vmem:[#allocation3 + $0x60] sm:$0xff] %vm643, %v1065
      %1159 = vst.msk [vmem:[#allocation3 + $0x88] sm:$0xff] %vm643, %v1067
      %1160 = vst.msk [vmem:[#allocation3 + $0xb0] sm:$0xff] %vm643, %v1069
      %1161 = vst.msk [vmem:[#allocation3 + $0xd8] sm:$0xff] %vm643, %v1071
      %1162 = vst.msk [vmem:[#allocation3 + $0x100] sm:$0xff] %vm643, %v1073
      %1163 = vst.msk [vmem:[#allocation3 + $0x128] sm:$0xff] %vm643, %v1075
      %1164 = vst.msk [vmem:[#allocation3 + $0x150] sm:$0xff] %vm643, %v1077
      %1165 = vst.msk [vmem:[#allocation3 + $0x178] sm:$0xff] %vm643, %v1079
      %1166 = vst.msk [vmem:[#allocation3 + $0x1a0] sm:$0xff] %vm643, %v1081
      %1167 = vst.msk [vmem:[#allocation3 + $0x1c8] sm:$0xff] %vm643, %v1083
      %1168 = vst.msk [vmem:[#allocation3 + $0x1f0] sm:$0xff] %vm643, %v1085
      %1169 = vst.msk [vmem:[#allocation3 + $0x218] sm:$0xff] %vm643, %v1087
      %1170 = vst.msk [vmem:[#allocation3 + $0x240] sm:$0xff] %vm643, %v1089
      %1171 = vst.msk [vmem:[#allocation3 + $0x268] sm:$0xff] %vm643, %v1091
      %1172 = vst.msk [vmem:[#allocation3 + $0x290] sm:$0xff] %vm643, %v1093
      %1173 = vst.msk [vmem:[#allocation3 + $0x2b8] sm:$0xff] %vm643, %v1095
      %1174 = vst.msk [vmem:[#allocation3 + $0x2e0] sm:$0xff] %vm643, %v1097
      %1175 = vst.msk [vmem:[#allocation3 + $0x308] sm:$0xff] %vm643, %v1099
      %1176 = vst.msk [vmem:[#allocation3 + $0x330] sm:$0xff] %vm643, %v1101
      %1177 = vst.msk [vmem:[#allocation3 + $0x358] sm:$0xff] %vm643, %v1103
      %1178 = vst.msk [vmem:[#allocation3 + $0x380] sm:$0xff] %vm643, %v1105
      %1179 = vst.msk [vmem:[#allocation3 + $0x3a8] sm:$0xff] %vm643, %v1107
      %1180 = vst.msk [vmem:[#allocation3 + $0x3d0] sm:$0xff] %vm643, %v1109
      %1181 = vst.msk [vmem:[#allocation3 + $0x3f8] sm:$0xff] %vm643, %v1111
      %1182 = vst.msk [vmem:[#allocation3 + $0x420] sm:$0xff] %vm643, %v1113
      %1183 = vst.msk [vmem:[#allocation3 + $0x448] sm:$0xff] %vm643, %v1115
      %1184 = vst.msk [vmem:[#allocation3 + $0x470] sm:$0xff] %vm643, %v1117
      %1185 = vst.msk [vmem:[#allocation3 + $0x498] sm:$0xff] %vm643, %v1119
      %1186 = vst.msk [vmem:[#allocation3 + $0x4c0] sm:$0xff] %vm643, %v1121
      %1187 = vst.msk [vmem:[#allocation3 + $0x4e8] sm:$0xff] %vm643, %v1123
      %s1188 = scalar_lea.vmem [#allocation2], 64
      %v1189 = vld [vmem:[%s1188 + $0x7] sm:$0xff]
      %v1190 = vld [vmem:[%s1188 + $0xf] sm:$0xff]
      %v1191 = vld [vmem:[%s1188 + $0x27] sm:$0xff]
      %v1192 = vld [vmem:[%s1188 + $0x2f] sm:$0xff]
      %v1193 = vld [vmem:[%s1188 + $0x47] sm:$0xff]
      %v1194 = vld [vmem:[%s1188 + $0x4f] sm:$0xff]
      %v1195 = vld [vmem:[%s1188 + $0x67] sm:$0xff]
      %v1196 = vld [vmem:[%s1188 + $0x6f] sm:$0xff]
      %v1197 = vld [vmem:[%s1188 + $0x87] sm:$0xff]
      %v1198 = vld [vmem:[%s1188 + $0x8f] sm:$0xff]
      %v1199 = vld [vmem:[%s1188 + $0xa7] sm:$0xff]
      %v1200 = vld [vmem:[%s1188 + $0xaf] sm:$0xff]
      %v1201 = vld [vmem:[%s1188 + $0xc7] sm:$0xff]
      %v1202 = vld [vmem:[%s1188 + $0xcf] sm:$0xff]
      %v1203 = vld [vmem:[%s1188 + $0xe7] sm:$0xff]
      %v1204 = vld [vmem:[%s1188 + $0xef] sm:$0xff]
      %v1205 = vld [vmem:[%s1188 + $0x107] sm:$0xff]
      %v1206 = vld [vmem:[%s1188 + $0x10f] sm:$0xff]
      %v1207 = vld [vmem:[%s1188 + $0x127] sm:$0xff]
      %v1208 = vld [vmem:[%s1188 + $0x12f] sm:$0xff]
      %v1209 = vld [vmem:[%s1188 + $0x147] sm:$0xff]
      %v1210 = vld [vmem:[%s1188 + $0x14f] sm:$0xff]
      %v1211 = vld [vmem:[%s1188 + $0x167] sm:$0xff]
      %v1212 = vld [vmem:[%s1188 + $0x16f] sm:$0xff]
      %v1213 = vld [vmem:[%s1188 + $0x187] sm:$0xff]
      %v1214 = vld [vmem:[%s1188 + $0x18f] sm:$0xff]
      %v1215 = vld [vmem:[%s1188 + $0x1a7] sm:$0xff]
      %v1216 = vld [vmem:[%s1188 + $0x1af] sm:$0xff]
      %v1217 = vld [vmem:[%s1188 + $0x1c7] sm:$0xff]
      %v1218 = vld [vmem:[%s1188 + $0x1cf] sm:$0xff]
      %v1219 = vld [vmem:[%s1188 + $0x1e7] sm:$0xff]
      %v1220 = vld [vmem:[%s1188 + $0x1ef] sm:$0xff]
      %1221 = vst.msk [vmem:[#allocation3 + $0x18] sm:$0xff] %vm281, %v1189
      %1222 = vst.msk [vmem:[#allocation3 + $0x40] sm:$0xff] %vm281, %v1190
      %1223 = vst.msk [vmem:[#allocation3 + $0x68] sm:$0xff] %vm281, %v1191
      %1224 = vst.msk [vmem:[#allocation3 + $0x90] sm:$0xff] %vm281, %v1192
      %1225 = vst.msk [vmem:[#allocation3 + $0xb8] sm:$0xff] %vm281, %v1193
      %1226 = vst.msk [vmem:[#allocation3 + $0xe0] sm:$0xff] %vm281, %v1194
      %1227 = vst.msk [vmem:[#allocation3 + $0x108] sm:$0xff] %vm281, %v1195
      %1228 = vst.msk [vmem:[#allocation3 + $0x130] sm:$0xff] %vm281, %v1196
      %1229 = vst.msk [vmem:[#allocation3 + $0x158] sm:$0xff] %vm281, %v1197
      %1230 = vst.msk [vmem:[#allocation3 + $0x180] sm:$0xff] %vm281, %v1198
      %1231 = vst.msk [vmem:[#allocation3 + $0x1a8] sm:$0xff] %vm281, %v1199
      %1232 = vst.msk [vmem:[#allocation3 + $0x1d0] sm:$0xff] %vm281, %v1200
      %1233 = vst.msk [vmem:[#allocation3 + $0x1f8] sm:$0xff] %vm281, %v1201
      %1234 = vst.msk [vmem:[#allocation3 + $0x220] sm:$0xff] %vm281, %v1202
      %1235 = vst.msk [vmem:[#allocation3 + $0x248] sm:$0xff] %vm281, %v1203
      %1236 = vst.msk [vmem:[#allocation3 + $0x270] sm:$0xff] %vm281, %v1204
      %1237 = vst.msk [vmem:[#allocation3 + $0x298] sm:$0xff] %vm281, %v1205
      %1238 = vst.msk [vmem:[#allocation3 + $0x2c0] sm:$0xff] %vm281, %v1206
      %1239 = vst.msk [vmem:[#allocation3 + $0x2e8] sm:$0xff] %vm281, %v1207
      %1240 = vst.msk [vmem:[#allocation3 + $0x310] sm:$0xff] %vm281, %v1208
      %1241 = vst.msk [vmem:[#allocation3 + $0x338] sm:$0xff] %vm281, %v1209
      %1242 = vst.msk [vmem:[#allocation3 + $0x360] sm:$0xff] %vm281, %v1210
      %1243 = vst.msk [vmem:[#allocation3 + $0x388] sm:$0xff] %vm281, %v1211
      %1244 = vst.msk [vmem:[#allocation3 + $0x3b0] sm:$0xff] %vm281, %v1212
      %1245 = vst.msk [vmem:[#allocation3 + $0x3d8] sm:$0xff] %vm281, %v1213
      %1246 = vst.msk [vmem:[#allocation3 + $0x400] sm:$0xff] %vm281, %v1214
      %1247 = vst.msk [vmem:[#allocation3 + $0x428] sm:$0xff] %vm281, %v1215
      %1248 = vst.msk [vmem:[#allocation3 + $0x450] sm:$0xff] %vm281, %v1216
      %1249 = vst.msk [vmem:[#allocation3 + $0x478] sm:$0xff] %vm281, %v1217
      %1250 = vst.msk [vmem:[#allocation3 + $0x4a0] sm:$0xff] %vm281, %v1218
      %1251 = vst.msk [vmem:[#allocation3 + $0x4c8] sm:$0xff] %vm281, %v1219
      %1252 = vst.msk [vmem:[#allocation3 + $0x4f0] sm:$0xff] %vm281, %v1220
      %v1253 = vld [vmem:[%s1188 + $0x8] sm:$0xff]
      %v1254 = vld [vmem:[%s1188 + $0x10] sm:$0xff]
      %v1255 = vld [vmem:[%s1188 + $0x28] sm:$0xff]
      %v1256 = vld [vmem:[%s1188 + $0x30] sm:$0xff]
      %v1257 = vld [vmem:[%s1188 + $0x48] sm:$0xff]
      %v1258 = vld [vmem:[%s1188 + $0x50] sm:$0xff]
      %v1259 = vld [vmem:[%s1188 + $0x68] sm:$0xff]
      %v1260 = vld [vmem:[%s1188 + $0x70] sm:$0xff]
      %v1261 = vld [vmem:[%s1188 + $0x88] sm:$0xff]
      %v1262 = vld [vmem:[%s1188 + $0x90] sm:$0xff]
      %v1263 = vld [vmem:[%s1188 + $0xa8] sm:$0xff]
      %v1264 = vld [vmem:[%s1188 + $0xb0] sm:$0xff]
      %v1265 = vld [vmem:[%s1188 + $0xc8] sm:$0xff]
      %v1266 = vld [vmem:[%s1188 + $0xd0] sm:$0xff]
      %v1267 = vld [vmem:[%s1188 + $0xe8] sm:$0xff]
      %v1268 = vld [vmem:[%s1188 + $0xf0] sm:$0xff]
      %v1269 = vld [vmem:[%s1188 + $0x108] sm:$0xff]
      %v1270 = vld [vmem:[%s1188 + $0x110] sm:$0xff]
      %v1271 = vld [vmem:[%s1188 + $0x128] sm:$0xff]
      %v1272 = vld [vmem:[%s1188 + $0x130] sm:$0xff]
      %v1273 = vld [vmem:[%s1188 + $0x148] sm:$0xff]
      %v1274 = vld [vmem:[%s1188 + $0x150] sm:$0xff]
      %v1275 = vld [vmem:[%s1188 + $0x168] sm:$0xff]
      %v1276 = vld [vmem:[%s1188 + $0x170] sm:$0xff]
      %v1277 = vld [vmem:[%s1188 + $0x188] sm:$0xff]
      %v1278 = vld [vmem:[%s1188 + $0x190] sm:$0xff]
      %v1279 = vld [vmem:[%s1188 + $0x1a8] sm:$0xff]
      %v1280 = vld [vmem:[%s1188 + $0x1b0] sm:$0xff]
      %v1281 = vld [vmem:[%s1188 + $0x1c8] sm:$0xff]
      %v1282 = vld [vmem:[%s1188 + $0x1d0] sm:$0xff]
      %v1283 = vld [vmem:[%s1188 + $0x1e8] sm:$0xff]
      %v1284 = vld [vmem:[%s1188 + $0x1f0] sm:$0xff]
      %1317 = vrot.lane.b32.xlu0 %v1253, 64
      %v1318 = vpop.permute.xlu0 %1317
      %1319 = vrot.lane.b32.xlu0 %v1254, 64
      %v1320 = vpop.permute.xlu0 %1319
      %1321 = vrot.lane.b32.xlu0 %v1255, 64
      %v1322 = vpop.permute.xlu0 %1321
      %1323 = vrot.lane.b32.xlu0 %v1256, 64
      %v1324 = vpop.permute.xlu0 %1323
      %1325 = vrot.lane.b32.xlu0 %v1257, 64
      %v1326 = vpop.permute.xlu0 %1325
      %1327 = vrot.lane.b32.xlu0 %v1258, 64
      %v1328 = vpop.permute.xlu0 %1327
      %1329 = vrot.lane.b32.xlu0 %v1259, 64
      %v1330 = vpop.permute.xlu0 %1329
      %1331 = vrot.lane.b32.xlu0 %v1260, 64
      %v1332 = vpop.permute.xlu0 %1331
      %1333 = vrot.lane.b32.xlu0 %v1261, 64
      %v1334 = vpop.permute.xlu0 %1333
      %1335 = vrot.lane.b32.xlu0 %v1262, 64
      %v1336 = vpop.permute.xlu0 %1335
      %1337 = vrot.lane.b32.xlu0 %v1263, 64
      %v1338 = vpop.permute.xlu0 %1337
      %1339 = vrot.lane.b32.xlu0 %v1264, 64
      %v1340 = vpop.permute.xlu0 %1339
      %1341 = vrot.lane.b32.xlu0 %v1265, 64
      %v1342 = vpop.permute.xlu0 %1341
      %1343 = vrot.lane.b32.xlu0 %v1266, 64
      %v1344 = vpop.permute.xlu0 %1343
      %1345 = vrot.lane.b32.xlu0 %v1267, 64
      %v1346 = vpop.permute.xlu0 %1345
      %1347 = vrot.lane.b32.xlu0 %v1268, 64
      %v1348 = vpop.permute.xlu0 %1347
      %1349 = vrot.lane.b32.xlu0 %v1269, 64
      %v1350 = vpop.permute.xlu0 %1349
      %1351 = vrot.lane.b32.xlu0 %v1270, 64
      %v1352 = vpop.permute.xlu0 %1351
      %1353 = vrot.lane.b32.xlu0 %v1271, 64
      %v1354 = vpop.permute.xlu0 %1353
      %1355 = vrot.lane.b32.xlu0 %v1272, 64
      %v1356 = vpop.permute.xlu0 %1355
      %1357 = vrot.lane.b32.xlu0 %v1273, 64
      %v1358 = vpop.permute.xlu0 %1357
      %1359 = vrot.lane.b32.xlu0 %v1274, 64
      %v1360 = vpop.permute.xlu0 %1359
      %1361 = vrot.lane.b32.xlu0 %v1275, 64
      %v1362 = vpop.permute.xlu0 %1361
      %1363 = vrot.lane.b32.xlu0 %v1276, 64
      %v1364 = vpop.permute.xlu0 %1363
      %1365 = vrot.lane.b32.xlu0 %v1277, 64
      %v1366 = vpop.permute.xlu0 %1365
      %1367 = vrot.lane.b32.xlu0 %v1278, 64
      %v1368 = vpop.permute.xlu0 %1367
      %1369 = vrot.lane.b32.xlu0 %v1279, 64
      %v1370 = vpop.permute.xlu0 %1369
      %1371 = vrot.lane.b32.xlu0 %v1280, 64
      %v1372 = vpop.permute.xlu0 %1371
      %1373 = vrot.lane.b32.xlu0 %v1281, 64
      %v1374 = vpop.permute.xlu0 %1373
      %1375 = vrot.lane.b32.xlu0 %v1282, 64
      %v1376 = vpop.permute.xlu0 %1375
      %1377 = vrot.lane.b32.xlu0 %v1283, 64
      %v1378 = vpop.permute.xlu0 %1377
      %1379 = vrot.lane.b32.xlu0 %v1284, 64
      %v1380 = vpop.permute.xlu0 %1379
      %1413 = vst.msk [vmem:[#allocation3 + $0x18] sm:$0xff] %vm643, %v1318
      %1414 = vst.msk [vmem:[#allocation3 + $0x40] sm:$0xff] %vm643, %v1320
      %1415 = vst.msk [vmem:[#allocation3 + $0x68] sm:$0xff] %vm643, %v1322
      %1416 = vst.msk [vmem:[#allocation3 + $0x90] sm:$0xff] %vm643, %v1324
      %1417 = vst.msk [vmem:[#allocation3 + $0xb8] sm:$0xff] %vm643, %v1326
      %1418 = vst.msk [vmem:[#allocation3 + $0xe0] sm:$0xff] %vm643, %v1328
      %1419 = vst.msk [vmem:[#allocation3 + $0x108] sm:$0xff] %vm643, %v1330
      %1420 = vst.msk [vmem:[#allocation3 + $0x130] sm:$0xff] %vm643, %v1332
      %1421 = vst.msk [vmem:[#allocation3 + $0x158] sm:$0xff] %vm643, %v1334
      %1422 = vst.msk [vmem:[#allocation3 + $0x180] sm:$0xff] %vm643, %v1336
      %1423 = vst.msk [vmem:[#allocation3 + $0x1a8] sm:$0xff] %vm643, %v1338
      %1424 = vst.msk [vmem:[#allocation3 + $0x1d0] sm:$0xff] %vm643, %v1340
      %1425 = vst.msk [vmem:[#allocation3 + $0x1f8] sm:$0xff] %vm643, %v1342
      %1426 = vst.msk [vmem:[#allocation3 + $0x220] sm:$0xff] %vm643, %v1344
      %1427 = vst.msk [vmem:[#allocation3 + $0x248] sm:$0xff] %vm643, %v1346
      %1428 = vst.msk [vmem:[#allocation3 + $0x270] sm:$0xff] %vm643, %v1348
      %1429 = vst.msk [vmem:[#allocation3 + $0x298] sm:$0xff] %vm643, %v1350
      %1430 = vst.msk [vmem:[#allocation3 + $0x2c0] sm:$0xff] %vm643, %v1352
      %1431 = vst.msk [vmem:[#allocation3 + $0x2e8] sm:$0xff] %vm643, %v1354
      %1432 = vst.msk [vmem:[#allocation3 + $0x310] sm:$0xff] %vm643, %v1356
      %1433 = vst.msk [vmem:[#allocation3 + $0x338] sm:$0xff] %vm643, %v1358
      %1434 = vst.msk [vmem:[#allocation3 + $0x360] sm:$0xff] %vm643, %v1360
      %1435 = vst.msk [vmem:[#allocation3 + $0x388] sm:$0xff] %vm643, %v1362
      %1436 = vst.msk [vmem:[#allocation3 + $0x3b0] sm:$0xff] %vm643, %v1364
      %1437 = vst.msk [vmem:[#allocation3 + $0x3d8] sm:$0xff] %vm643, %v1366
      %1438 = vst.msk [vmem:[#allocation3 + $0x400] sm:$0xff] %vm643, %v1368
      %1439 = vst.msk [vmem:[#allocation3 + $0x428] sm:$0xff] %vm643, %v1370
      %1440 = vst.msk [vmem:[#allocation3 + $0x450] sm:$0xff] %vm643, %v1372
      %1441 = vst.msk [vmem:[#allocation3 + $0x478] sm:$0xff] %vm643, %v1374
      %1442 = vst.msk [vmem:[#allocation3 + $0x4a0] sm:$0xff] %vm643, %v1376
      %1443 = vst.msk [vmem:[#allocation3 + $0x4c8] sm:$0xff] %vm643, %v1378
      %1444 = vst.msk [vmem:[#allocation3 + $0x4f0] sm:$0xff] %vm643, %v1380
      %v1445 = vld [vmem:[%s1188 + $0x9] sm:$0xff]
      %v1446 = vld [vmem:[%s1188 + $0x11] sm:$0xff]
      %v1447 = vld [vmem:[%s1188 + $0x29] sm:$0xff]
      %v1448 = vld [vmem:[%s1188 + $0x31] sm:$0xff]
      %v1449 = vld [vmem:[%s1188 + $0x49] sm:$0xff]
      %v1450 = vld [vmem:[%s1188 + $0x51] sm:$0xff]
      %v1451 = vld [vmem:[%s1188 + $0x69] sm:$0xff]
      %v1452 = vld [vmem:[%s1188 + $0x71] sm:$0xff]
      %v1453 = vld [vmem:[%s1188 + $0x89] sm:$0xff]
      %v1454 = vld [vmem:[%s1188 + $0x91] sm:$0xff]
      %v1455 = vld [vmem:[%s1188 + $0xa9] sm:$0xff]
      %v1456 = vld [vmem:[%s1188 + $0xb1] sm:$0xff]
      %v1457 = vld [vmem:[%s1188 + $0xc9] sm:$0xff]
      %v1458 = vld [vmem:[%s1188 + $0xd1] sm:$0xff]
      %v1459 = vld [vmem:[%s1188 + $0xe9] sm:$0xff]
      %v1460 = vld [vmem:[%s1188 + $0xf1] sm:$0xff]
      %v1461 = vld [vmem:[%s1188 + $0x109] sm:$0xff]
      %v1462 = vld [vmem:[%s1188 + $0x111] sm:$0xff]
      %v1463 = vld [vmem:[%s1188 + $0x129] sm:$0xff]
      %v1464 = vld [vmem:[%s1188 + $0x131] sm:$0xff]
      %v1465 = vld [vmem:[%s1188 + $0x149] sm:$0xff]
      %v1466 = vld [vmem:[%s1188 + $0x151] sm:$0xff]
      %v1467 = vld [vmem:[%s1188 + $0x169] sm:$0xff]
      %v1468 = vld [vmem:[%s1188 + $0x171] sm:$0xff]
      %v1469 = vld [vmem:[%s1188 + $0x189] sm:$0xff]
      %v1470 = vld [vmem:[%s1188 + $0x191] sm:$0xff]
      %v1471 = vld [vmem:[%s1188 + $0x1a9] sm:$0xff]
      %v1472 = vld [vmem:[%s1188 + $0x1b1] sm:$0xff]
      %v1473 = vld [vmem:[%s1188 + $0x1c9] sm:$0xff]
      %v1474 = vld [vmem:[%s1188 + $0x1d1] sm:$0xff]
      %v1475 = vld [vmem:[%s1188 + $0x1e9] sm:$0xff]
      %v1476 = vld [vmem:[%s1188 + $0x1f1] sm:$0xff]
      %1477 = vst.msk [vmem:[#allocation3 + $0x20] sm:$0xff] %vm281, %v1445
      %1478 = vst.msk [vmem:[#allocation3 + $0x48] sm:$0xff] %vm281, %v1446
      %1479 = vst.msk [vmem:[#allocation3 + $0x70] sm:$0xff] %vm281, %v1447
      %1480 = vst.msk [vmem:[#allocation3 + $0x98] sm:$0xff] %vm281, %v1448
      %1481 = vst.msk [vmem:[#allocation3 + $0xc0] sm:$0xff] %vm281, %v1449
      %1482 = vst.msk [vmem:[#allocation3 + $0xe8] sm:$0xff] %vm281, %v1450
      %1483 = vst.msk [vmem:[#allocation3 + $0x110] sm:$0xff] %vm281, %v1451
      %1484 = vst.msk [vmem:[#allocation3 + $0x138] sm:$0xff] %vm281, %v1452
      %1485 = vst.msk [vmem:[#allocation3 + $0x160] sm:$0xff] %vm281, %v1453
      %1486 = vst.msk [vmem:[#allocation3 + $0x188] sm:$0xff] %vm281, %v1454
      %1487 = vst.msk [vmem:[#allocation3 + $0x1b0] sm:$0xff] %vm281, %v1455
      %1488 = vst.msk [vmem:[#allocation3 + $0x1d8] sm:$0xff] %vm281, %v1456
      %1489 = vst.msk [vmem:[#allocation3 + $0x200] sm:$0xff] %vm281, %v1457
      %1490 = vst.msk [vmem:[#allocation3 + $0x228] sm:$0xff] %vm281, %v1458
      %1491 = vst.msk [vmem:[#allocation3 + $0x250] sm:$0xff] %vm281, %v1459
      %1492 = vst.msk [vmem:[#allocation3 + $0x278] sm:$0xff] %vm281, %v1460
      %1493 = vst.msk [vmem:[#allocation3 + $0x2a0] sm:$0xff] %vm281, %v1461
      %1494 = vst.msk [vmem:[#allocation3 + $0x2c8] sm:$0xff] %vm281, %v1462
      %1495 = vst.msk [vmem:[#allocation3 + $0x2f0] sm:$0xff] %vm281, %v1463
      %1496 = vst.msk [vmem:[#allocation3 + $0x318] sm:$0xff] %vm281, %v1464
      %1497 = vst.msk [vmem:[#allocation3 + $0x340] sm:$0xff] %vm281, %v1465
      %1498 = vst.msk [vmem:[#allocation3 + $0x368] sm:$0xff] %vm281, %v1466
      %1499 = vst.msk [vmem:[#allocation3 + $0x390] sm:$0xff] %vm281, %v1467
      %1500 = vst.msk [vmem:[#allocation3 + $0x3b8] sm:$0xff] %vm281, %v1468
      %1501 = vst.msk [vmem:[#allocation3 + $0x3e0] sm:$0xff] %vm281, %v1469
      %1502 = vst.msk [vmem:[#allocation3 + $0x408] sm:$0xff] %vm281, %v1470
      %1503 = vst.msk [vmem:[#allocation3 + $0x430] sm:$0xff] %vm281, %v1471
      %1504 = vst.msk [vmem:[#allocation3 + $0x458] sm:$0xff] %vm281, %v1472
      %1505 = vst.msk [vmem:[#allocation3 + $0x480] sm:$0xff] %vm281, %v1473
      %1506 = vst.msk [vmem:[#allocation3 + $0x4a8] sm:$0xff] %vm281, %v1474
      %1507 = vst.msk [vmem:[#allocation3 + $0x4d0] sm:$0xff] %vm281, %v1475
      %1508 = vst.msk [vmem:[#allocation3 + $0x4f8] sm:$0xff] %vm281, %v1476
      %v1509 = vld [vmem:[#allocation3] sm:$0xff]
      %v1510 = vld [vmem:[#allocation3 + $0x8] sm:$0xff]
      %v1511 = vld [vmem:[#allocation3 + $0x10] sm:$0xff]
      %v1512 = vld [vmem:[#allocation3 + $0x18] sm:$0xff]
      %v1513 = vld [vmem:[#allocation3 + $0x20] sm:$0xff]
      %v1514 = vld [vmem:[#allocation3 + $0x28] sm:$0xff]
      %v1515 = vld [vmem:[#allocation3 + $0x30] sm:$0xff]
      %v1516 = vld [vmem:[#allocation3 + $0x38] sm:$0xff]
      %v1517 = vld [vmem:[#allocation3 + $0x40] sm:$0xff]
      %v1518 = vld [vmem:[#allocation3 + $0x48] sm:$0xff]
      %v1519 = vld [vmem:[#allocation3 + $0x50] sm:$0xff]
      %v1520 = vld [vmem:[#allocation3 + $0x58] sm:$0xff]
      %v1521 = vld [vmem:[#allocation3 + $0x60] sm:$0xff]
      %v1522 = vld [vmem:[#allocation3 + $0x68] sm:$0xff]
      %v1523 = vld [vmem:[#allocation3 + $0x70] sm:$0xff]
      %v1524 = vld [vmem:[#allocation3 + $0x78] sm:$0xff]
      %v1525 = vld [vmem:[#allocation3 + $0x80] sm:$0xff]
      %v1526 = vld [vmem:[#allocation3 + $0x88] sm:$0xff]
      %v1527 = vld [vmem:[#allocation3 + $0x90] sm:$0xff]
      %v1528 = vld [vmem:[#allocation3 + $0x98] sm:$0xff]
      %v1529 = vld [vmem:[#allocation3 + $0xa0] sm:$0xff]
      %v1530 = vld [vmem:[#allocation3 + $0xa8] sm:$0xff]
      %v1531 = vld [vmem:[#allocation3 + $0xb0] sm:$0xff]
      %v1532 = vld [vmem:[#allocation3 + $0xb8] sm:$0xff]
      %v1533 = vld [vmem:[#allocation3 + $0xc0] sm:$0xff]
      %v1534 = vld [vmem:[#allocation3 + $0xc8] sm:$0xff]
      %v1535 = vld [vmem:[#allocation3 + $0xd0] sm:$0xff]
      %v1536 = vld [vmem:[#allocation3 + $0xd8] sm:$0xff]
      %v1537 = vld [vmem:[#allocation3 + $0xe0] sm:$0xff]
      %v1538 = vld [vmem:[#allocation3 + $0xe8] sm:$0xff]
      %v1539 = vld [vmem:[#allocation3 + $0xf0] sm:$0xff]
      %v1540 = vld [vmem:[#allocation3 + $0xf8] sm:$0xff]
      %v1541 = vld [vmem:[#allocation3 + $0x100] sm:$0xff]
      %v1542 = vld [vmem:[#allocation3 + $0x108] sm:$0xff]
      %v1543 = vld [vmem:[#allocation3 + $0x110] sm:$0xff]
      %v1544 = vld [vmem:[#allocation3 + $0x118] sm:$0xff]
      %v1545 = vld [vmem:[#allocation3 + $0x120] sm:$0xff]
      %v1546 = vld [vmem:[#allocation3 + $0x128] sm:$0xff]
      %v1547 = vld [vmem:[#allocation3 + $0x130] sm:$0xff]
      %v1548 = vld [vmem:[#allocation3 + $0x138] sm:$0xff]
      %v1549 = vld [vmem:[#allocation3 + $0x140] sm:$0xff]
      %v1550 = vld [vmem:[#allocation3 + $0x148] sm:$0xff]
      %v1551 = vld [vmem:[#allocation3 + $0x150] sm:$0xff]
      %v1552 = vld [vmem:[#allocation3 + $0x158] sm:$0xff]
      %v1553 = vld [vmem:[#allocation3 + $0x160] sm:$0xff]
      %v1554 = vld [vmem:[#allocation3 + $0x168] sm:$0xff]
      %v1555 = vld [vmem:[#allocation3 + $0x170] sm:$0xff]
      %v1556 = vld [vmem:[#allocation3 + $0x178] sm:$0xff]
      %v1557 = vld [vmem:[#allocation3 + $0x180] sm:$0xff]
      %v1558 = vld [vmem:[#allocation3 + $0x188] sm:$0xff]
      %v1559 = vld [vmem:[#allocation3 + $0x190] sm:$0xff]
      %v1560 = vld [vmem:[#allocation3 + $0x198] sm:$0xff]
      %v1561 = vld [vmem:[#allocation3 + $0x1a0] sm:$0xff]
      %v1562 = vld [vmem:[#allocation3 + $0x1a8] sm:$0xff]
      %v1563 = vld [vmem:[#allocation3 + $0x1b0] sm:$0xff]
      %v1564 = vld [vmem:[#allocation3 + $0x1b8] sm:$0xff]
      %v1565 = vld [vmem:[#allocation3 + $0x1c0] sm:$0xff]
      %v1566 = vld [vmem:[#allocation3 + $0x1c8] sm:$0xff]
      %v1567 = vld [vmem:[#allocation3 + $0x1d0] sm:$0xff]
      %v1568 = vld [vmem:[#allocation3 + $0x1d8] sm:$0xff]
      %v1569 = vld [vmem:[#allocation3 + $0x1e0] sm:$0xff]
      %v1570 = vld [vmem:[#allocation3 + $0x1e8] sm:$0xff]
      %v1571 = vld [vmem:[#allocation3 + $0x1f0] sm:$0xff]
      %v1572 = vld [vmem:[#allocation3 + $0x1f8] sm:$0xff]
      %v1573 = vld [vmem:[#allocation3 + $0x200] sm:$0xff]
      %v1574 = vld [vmem:[#allocation3 + $0x208] sm:$0xff]
      %v1575 = vld [vmem:[#allocation3 + $0x210] sm:$0xff]
      %v1576 = vld [vmem:[#allocation3 + $0x218] sm:$0xff]
      %v1577 = vld [vmem:[#allocation3 + $0x220] sm:$0xff]
      %v1578 = vld [vmem:[#allocation3 + $0x228] sm:$0xff]
      %v1579 = vld [vmem:[#allocation3 + $0x230] sm:$0xff]
      %v1580 = vld [vmem:[#allocation3 + $0x238] sm:$0xff]
      %v1581 = vld [vmem:[#allocation3 + $0x240] sm:$0xff]
      %v1582 = vld [vmem:[#allocation3 + $0x248] sm:$0xff]
      %v1583 = vld [vmem:[#allocation3 + $0x250] sm:$0xff]
      %v1584 = vld [vmem:[#allocation3 + $0x258] sm:$0xff]
      %v1585 = vld [vmem:[#allocation3 + $0x260] sm:$0xff]
      %v1586 = vld [vmem:[#allocation3 + $0x268] sm:$0xff]
      %v1587 = vld [vmem:[#allocation3 + $0x270] sm:$0xff]
      %v1588 = vld [vmem:[#allocation3 + $0x278] sm:$0xff]
      %v1589 = vld [vmem:[#allocation3 + $0x280] sm:$0xff]
      %v1590 = vld [vmem:[#allocation3 + $0x288] sm:$0xff]
      %v1591 = vld [vmem:[#allocation3 + $0x290] sm:$0xff]
      %v1592 = vld [vmem:[#allocation3 + $0x298] sm:$0xff]
      %v1593 = vld [vmem:[#allocation3 + $0x2a0] sm:$0xff]
      %v1594 = vld [vmem:[#allocation3 + $0x2a8] sm:$0xff]
      %v1595 = vld [vmem:[#allocation3 + $0x2b0] sm:$0xff]
      %v1596 = vld [vmem:[#allocation3 + $0x2b8] sm:$0xff]
      %v1597 = vld [vmem:[#allocation3 + $0x2c0] sm:$0xff]
      %v1598 = vld [vmem:[#allocation3 + $0x2c8] sm:$0xff]
      %v1599 = vld [vmem:[#allocation3 + $0x2d0] sm:$0xff]
      %v1600 = vld [vmem:[#allocation3 + $0x2d8] sm:$0xff]
      %v1601 = vld [vmem:[#allocation3 + $0x2e0] sm:$0xff]
      %v1602 = vld [vmem:[#allocation3 + $0x2e8] sm:$0xff]
      %v1603 = vld [vmem:[#allocation3 + $0x2f0] sm:$0xff]
      %v1604 = vld [vmem:[#allocation3 + $0x2f8] sm:$0xff]
      %v1605 = vld [vmem:[#allocation3 + $0x300] sm:$0xff]
      %v1606 = vld [vmem:[#allocation3 + $0x308] sm:$0xff]
      %v1607 = vld [vmem:[#allocation3 + $0x310] sm:$0xff]
      %v1608 = vld [vmem:[#allocation3 + $0x318] sm:$0xff]
      %v1609 = vld [vmem:[#allocation3 + $0x320] sm:$0xff]
      %v1610 = vld [vmem:[#allocation3 + $0x328] sm:$0xff]
      %v1611 = vld [vmem:[#allocation3 + $0x330] sm:$0xff]
      %v1612 = vld [vmem:[#allocation3 + $0x338] sm:$0xff]
      %v1613 = vld [vmem:[#allocation3 + $0x340] sm:$0xff]
      %v1614 = vld [vmem:[#allocation3 + $0x348] sm:$0xff]
      %v1615 = vld [vmem:[#allocation3 + $0x350] sm:$0xff]
      %v1616 = vld [vmem:[#allocation3 + $0x358] sm:$0xff]
      %v1617 = vld [vmem:[#allocation3 + $0x360] sm:$0xff]
      %v1618 = vld [vmem:[#allocation3 + $0x368] sm:$0xff]
      %v1619 = vld [vmem:[#allocation3 + $0x370] sm:$0xff]
      %v1620 = vld [vmem:[#allocation3 + $0x378] sm:$0xff]
      %v1621 = vld [vmem:[#allocation3 + $0x380] sm:$0xff]
      %v1622 = vld [vmem:[#allocation3 + $0x388] sm:$0xff]
      %v1623 = vld [vmem:[#allocation3 + $0x390] sm:$0xff]
      %v1624 = vld [vmem:[#allocation3 + $0x398] sm:$0xff]
      %v1625 = vld [vmem:[#allocation3 + $0x3a0] sm:$0xff]
      %v1626 = vld [vmem:[#allocation3 + $0x3a8] sm:$0xff]
      %v1627 = vld [vmem:[#allocation3 + $0x3b0] sm:$0xff]
      %v1628 = vld [vmem:[#allocation3 + $0x3b8] sm:$0xff]
      %v1629 = vld [vmem:[#allocation3 + $0x3c0] sm:$0xff]
      %v1630 = vld [vmem:[#allocation3 + $0x3c8] sm:$0xff]
      %v1631 = vld [vmem:[#allocation3 + $0x3d0] sm:$0xff]
      %v1632 = vld [vmem:[#allocation3 + $0x3d8] sm:$0xff]
      %v1633 = vld [vmem:[#allocation3 + $0x3e0] sm:$0xff]
      %v1634 = vld [vmem:[#allocation3 + $0x3e8] sm:$0xff]
      %v1635 = vld [vmem:[#allocation3 + $0x3f0] sm:$0xff]
      %v1636 = vld [vmem:[#allocation3 + $0x3f8] sm:$0xff]
      %v1637 = vld [vmem:[#allocation3 + $0x400] sm:$0xff]
      %v1638 = vld [vmem:[#allocation3 + $0x408] sm:$0xff]
      %v1639 = vld [vmem:[#allocation3 + $0x410] sm:$0xff]
      %v1640 = vld [vmem:[#allocation3 + $0x418] sm:$0xff]
      %v1641 = vld [vmem:[#allocation3 + $0x420] sm:$0xff]
      %v1642 = vld [vmem:[#allocation3 + $0x428] sm:$0xff]
      %v1643 = vld [vmem:[#allocation3 + $0x430] sm:$0xff]
      %v1644 = vld [vmem:[#allocation3 + $0x438] sm:$0xff]
      %v1645 = vld [vmem:[#allocation3 + $0x440] sm:$0xff]
      %v1646 = vld [vmem:[#allocation3 + $0x448] sm:$0xff]
      %v1647 = vld [vmem:[#allocation3 + $0x450] sm:$0xff]
      %v1648 = vld [vmem:[#allocation3 + $0x458] sm:$0xff]
      %v1649 = vld [vmem:[#allocation3 + $0x460] sm:$0xff]
      %v1650 = vld [vmem:[#allocation3 + $0x468] sm:$0xff]
      %v1651 = vld [vmem:[#allocation3 + $0x470] sm:$0xff]
      %v1652 = vld [vmem:[#allocation3 + $0x478] sm:$0xff]
      %v1653 = vld [vmem:[#allocation3 + $0x480] sm:$0xff]
      %v1654 = vld [vmem:[#allocation3 + $0x488] sm:$0xff]
      %v1655 = vld [vmem:[#allocation3 + $0x490] sm:$0xff]
      %v1656 = vld [vmem:[#allocation3 + $0x498] sm:$0xff]
      %v1657 = vld [vmem:[#allocation3 + $0x4a0] sm:$0xff]
      %v1658 = vld [vmem:[#allocation3 + $0x4a8] sm:$0xff]
      %v1659 = vld [vmem:[#allocation3 + $0x4b0] sm:$0xff]
      %v1660 = vld [vmem:[#allocation3 + $0x4b8] sm:$0xff]
      %v1661 = vld [vmem:[#allocation3 + $0x4c0] sm:$0xff]
      %v1662 = vld [vmem:[#allocation3 + $0x4c8] sm:$0xff]
      %v1663 = vld [vmem:[#allocation3 + $0x4d0] sm:$0xff]
      %v1664 = vld [vmem:[#allocation3 + $0x4d8] sm:$0xff]
      %v1665 = vld [vmem:[#allocation3 + $0x4e0] sm:$0xff]
      %v1666 = vld [vmem:[#allocation3 + $0x4e8] sm:$0xff]
      %v1667 = vld [vmem:[#allocation3 + $0x4f0] sm:$0xff]
      %v1668 = vld [vmem:[#allocation3 + $0x4f8] sm:$0xff]
      %v1669 = vld [vmem:[%s1] sm:$0xff]
      %v1670 = vld [vmem:[%s1 + $0x8] sm:$0xff]
      %v1671 = vld [vmem:[%s1 + $0x10] sm:$0xff]
      %v1672 = vld [vmem:[%s1 + $0x18] sm:$0xff]
      %v1673 = vld [vmem:[%s1 + $0x20] sm:$0xff]
      %v1674 = vld [vmem:[%s1 + $0x28] sm:$0xff]
      %v1675 = vld [vmem:[%s1 + $0x30] sm:$0xff]
      %v1676 = vld [vmem:[%s1 + $0x38] sm:$0xff]
      %v1677 = vld [vmem:[%s1 + $0x40] sm:$0xff]
      %v1678 = vld [vmem:[%s1 + $0x48] sm:$0xff]
      %v1679 = vld [vmem:[%s1 + $0x50] sm:$0xff]
      %v1680 = vld [vmem:[%s1 + $0x58] sm:$0xff]
      %v1681 = vld [vmem:[%s1 + $0x60] sm:$0xff]
      %v1682 = vld [vmem:[%s1 + $0x68] sm:$0xff]
      %v1683 = vld [vmem:[%s1 + $0x70] sm:$0xff]
      %v1684 = vld [vmem:[%s1 + $0x78] sm:$0xff]
      %v1685 = vld [vmem:[%s1 + $0x80] sm:$0xff]
      %v1686 = vld [vmem:[%s1 + $0x88] sm:$0xff]
      %v1687 = vld [vmem:[%s1 + $0x90] sm:$0xff]
      %v1688 = vld [vmem:[%s1 + $0x98] sm:$0xff]
      %v1689 = vld [vmem:[%s1 + $0xa0] sm:$0xff]
      %v1690 = vld [vmem:[%s1 + $0xa8] sm:$0xff]
      %v1691 = vld [vmem:[%s1 + $0xb0] sm:$0xff]
      %v1692 = vld [vmem:[%s1 + $0xb8] sm:$0xff]
      %v1693 = vld [vmem:[%s1 + $0xc0] sm:$0xff]
      %v1694 = vld [vmem:[%s1 + $0xc8] sm:$0xff]
      %v1695 = vld [vmem:[%s1 + $0xd0] sm:$0xff]
      %v1696 = vld [vmem:[%s1 + $0xd8] sm:$0xff]
      %v1697 = vld [vmem:[%s1 + $0xe0] sm:$0xff]
      %v1698 = vld [vmem:[%s1 + $0xe8] sm:$0xff]
      %v1699 = vld [vmem:[%s1 + $0xf0] sm:$0xff]
      %v1700 = vld [vmem:[%s1 + $0xf8] sm:$0xff]
      %v1701 = vld [vmem:[%s1 + $0x100] sm:$0xff]
      %v1702 = vld [vmem:[%s1 + $0x108] sm:$0xff]
      %v1703 = vld [vmem:[%s1 + $0x110] sm:$0xff]
      %v1704 = vld [vmem:[%s1 + $0x118] sm:$0xff]
      %v1705 = vld [vmem:[%s1 + $0x120] sm:$0xff]
      %v1706 = vld [vmem:[%s1 + $0x128] sm:$0xff]
      %v1707 = vld [vmem:[%s1 + $0x130] sm:$0xff]
      %v1708 = vld [vmem:[%s1 + $0x138] sm:$0xff]
      %v1709 = vld [vmem:[%s1 + $0x140] sm:$0xff]
      %v1710 = vld [vmem:[%s1 + $0x148] sm:$0xff]
      %v1711 = vld [vmem:[%s1 + $0x150] sm:$0xff]
      %v1712 = vld [vmem:[%s1 + $0x158] sm:$0xff]
      %v1713 = vld [vmem:[%s1 + $0x160] sm:$0xff]
      %v1714 = vld [vmem:[%s1 + $0x168] sm:$0xff]
      %v1715 = vld [vmem:[%s1 + $0x170] sm:$0xff]
      %v1716 = vld [vmem:[%s1 + $0x178] sm:$0xff]
      %v1717 = vld [vmem:[%s1 + $0x180] sm:$0xff]
      %v1718 = vld [vmem:[%s1 + $0x188] sm:$0xff]
      %v1719 = vld [vmem:[%s1 + $0x190] sm:$0xff]
      %v1720 = vld [vmem:[%s1 + $0x198] sm:$0xff]
      %v1721 = vld [vmem:[%s1 + $0x1a0] sm:$0xff]
      %v1722 = vld [vmem:[%s1 + $0x1a8] sm:$0xff]
      %v1723 = vld [vmem:[%s1 + $0x1b0] sm:$0xff]
      %v1724 = vld [vmem:[%s1 + $0x1b8] sm:$0xff]
      %v1725 = vld [vmem:[%s1 + $0x1c0] sm:$0xff]
      %v1726 = vld [vmem:[%s1 + $0x1c8] sm:$0xff]
      %v1727 = vld [vmem:[%s1 + $0x1d0] sm:$0xff]
      %v1728 = vld [vmem:[%s1 + $0x1d8] sm:$0xff]
      %v1729 = vld [vmem:[%s1 + $0x1e0] sm:$0xff]
      %v1730 = vld [vmem:[%s1 + $0x1e8] sm:$0xff]
      %v1731 = vld [vmem:[%s1 + $0x1f0] sm:$0xff]
      %v1732 = vld [vmem:[%s1 + $0x1f8] sm:$0xff]
      %v1733 = vld [vmem:[%s1 + $0x200] sm:$0xff]
      %v1734 = vld [vmem:[%s1 + $0x208] sm:$0xff]
      %v1735 = vld [vmem:[%s1 + $0x210] sm:$0xff]
      %v1736 = vld [vmem:[%s1 + $0x218] sm:$0xff]
      %v1737 = vld [vmem:[%s1 + $0x220] sm:$0xff]
      %v1738 = vld [vmem:[%s1 + $0x228] sm:$0xff]
      %v1739 = vld [vmem:[%s1 + $0x230] sm:$0xff]
      %v1740 = vld [vmem:[%s1 + $0x238] sm:$0xff]
      %v1741 = vld [vmem:[%s2] sm:$0x1]
      %v1743 = vlaneseq
      %v1744 = vshrl.u32 %v1743, 7
      %v1745 = vsub.s32 0, %v1744
      %v1746 = vrot.slane %v1741, %v1745
      %v1749 = vsel %vm281, %v1513, 0
      %v1752 = vsel %vm281, %v1518, 0
      %v1755 = vsel %vm281, %v1523, 0
      %v1758 = vsel %vm281, %v1528, 0
      %v1761 = vsel %vm281, %v1533, 0
      %v1764 = vsel %vm281, %v1538, 0
      %v1767 = vsel %vm281, %v1543, 0
      %v1770 = vsel %vm281, %v1548, 0
      %v1773 = vsel %vm281, %v1553, 0
      %v1776 = vsel %vm281, %v1558, 0
      %v1779 = vsel %vm281, %v1563, 0
      %v1782 = vsel %vm281, %v1568, 0
      %v1785 = vsel %vm281, %v1573, 0
      %v1788 = vsel %vm281, %v1578, 0
      %v1791 = vsel %vm281, %v1583, 0
      %v1794 = vsel %vm281, %v1588, 0
      %v1797 = vsel %vm281, %v1593, 0
      %v1800 = vsel %vm281, %v1598, 0
      %v1803 = vsel %vm281, %v1603, 0
      %v1806 = vsel %vm281, %v1608, 0
      %v1809 = vsel %vm281, %v1613, 0
      %v1812 = vsel %vm281, %v1618, 0
      %v1815 = vsel %vm281, %v1623, 0
      %v1818 = vsel %vm281, %v1628, 0
      %v1821 = vsel %vm281, %v1633, 0
      %v1824 = vsel %vm281, %v1638, 0
      %v1827 = vsel %vm281, %v1643, 0
      %v1830 = vsel %vm281, %v1648, 0
      %v1833 = vsel %vm281, %v1653, 0
      %v1836 = vsel %vm281, %v1658, 0
      %v1839 = vsel %vm281, %v1663, 0
      %v1842 = vsel %vm281, %v1668, 0
      %1844 = vmatprep.subr.mxu0 0.0
      %1845 = vmatpush1.msra.mxu0 %v1669
      %1846 = vmatprep.subr.mxu0 0.0
      %1847 = vmatpush1.msra.mxu0 %v1670
      %1848 = vmatprep.subr.mxu0 0.0
      %1849 = vmatpush1.msra.mxu0 %v1671
      %1850 = vmatprep.subr.mxu0 0.0
      %1851 = vmatpush1.msra.mxu0 %v1672
      %1852 = vmatprep.subr.mxu0 0.0
      %1853 = vmatpush1.msra.mxu0 %v1673
      %1854 = vmatprep.subr.mxu0 0.0
      %1855 = vmatpush1.msra.mxu0 %v1674
      %1856 = vmatprep.subr.mxu0 0.0
      %1857 = vmatpush1.msra.mxu0 %v1675
      %1858 = vmatprep.subr.mxu0 0.0
      %1859 = vmatpush1.msra.mxu0 %v1676
      %1860 = vmatprep.subr.mxu0 0.0
      %1861 = vmatpush1.msra.mxu0 %v1677
      %1862 = vmatprep.subr.mxu0 0.0
      %1863 = vmatpush1.msra.mxu0 %v1678
      %1864 = vmatprep.subr.mxu0 0.0
      %1865 = vmatpush1.msra.mxu0 %v1679
      %1866 = vmatprep.subr.mxu0 0.0
      %1867 = vmatpush1.msra.mxu0 %v1680
      %1868 = vmatprep.subr.mxu0 0.0
      %1869 = vmatpush1.msra.mxu0 %v1681
      %1870 = vmatprep.subr.mxu0 0.0
      %1871 = vmatpush1.msra.mxu0 %v1682
      %1872 = vmatprep.subr.mxu0 0.0
      %1873 = vmatpush1.msra.mxu0 %v1683
      %1874 = vmatprep.subr.mxu0 0.0
      %1875 = vmatpush1.msra.mxu0 %v1684
      %1876 = vmatprep.subr.mxu0 0.0
      %1877 = vmatpush1.msra.mxu0 %v1685
      %1878 = vmatprep.subr.mxu0 0.0
      %1879 = vmatpush1.msra.mxu0 %v1686
      %1880 = vmatprep.subr.mxu0 0.0
      %1881 = vmatpush1.msra.mxu0 %v1687
      %1882 = vmatprep.subr.mxu0 0.0
      %1883 = vmatpush1.msra.mxu0 %v1688
      %1884 = vmatprep.subr.mxu0 0.0
      %1885 = vmatpush1.msra.mxu0 %v1689
      %1886 = vmatprep.subr.mxu0 0.0
      %1887 = vmatpush1.msra.mxu0 %v1690
      %1888 = vmatprep.subr.mxu0 0.0
      %1889 = vmatpush1.msra.mxu0 %v1691
      %1890 = vmatprep.subr.mxu0 0.0
      %1891 = vmatpush1.msra.mxu0 %v1692
      %1892 = vmatprep.subr.mxu0 0.0
      %1893 = vmatpush1.msra.mxu0 %v1693
      %1894 = vmatprep.subr.mxu0 0.0
      %1895 = vmatpush1.msra.mxu0 %v1694
      %1896 = vmatprep.subr.mxu0 0.0
      %1897 = vmatpush1.msra.mxu0 %v1695
      %1898 = vmatprep.subr.mxu0 0.0
      %1899 = vmatpush1.msra.mxu0 %v1696
      %1900 = vmatprep.subr.mxu0 0.0
      %1901 = vmatpush1.msra.mxu0 %v1697
      %1902 = vmatprep.subr.mxu0 0.0
      %1903 = vmatpush1.msra.mxu0 %v1698
      %1904 = vmatprep.subr.mxu0 0.0
      %1905 = vmatpush1.msra.mxu0 %v1699
      %1906 = vmatprep.subr.mxu0 0.0
      %1907 = vmatpush1.msra.mxu0 %v1700
      %1908 = vmatprep.mubr.f32.mxu0 %v1510
      %1909 = vmatmul.mubr.f32.gmra.mrb[0].mxu0 %v1509
      %v1910 = vpop.f32.mrb[0].mxu0
      %v1911 = vadd.f32 %v1746, %v1910
      %v1912 = vpop.f32.mrb[0].mxu0
      %1913 = vmatprep.mubr.f32.mxu0 %v1515
      %1914 = vmatmul.mubr.f32.gmra.mrb[0].mxu0 %v1514
      %v1915 = vpop.f32.mrb[0].mxu0
      %v1916 = vadd.f32 %v1746, %v1915
      %v1917 = vpop.f32.mrb[0].mxu0
      %1918 = vmatprep.mubr.f32.mxu0 %v1520
      %1919 = vmatmul.mubr.f32.gmra.mrb[0].mxu0 %v1519
      %v1920 = vpop.f32.mrb[0].mxu0
      %v1921 = vadd.f32 %v1746, %v1920
      %v1922 = vpop.f32.mrb[0].mxu0
      %1923 = vmatprep.mubr.f32.mxu0 %v1525
      %1924 = vmatmul.mubr.f32.gmra.mrb[0].mxu0 %v1524
      %v1925 = vpop.f32.mrb[0].mxu0
      %v1926 = vadd.f32 %v1746, %v1925
      %v1927 = vpop.f32.mrb[0].mxu0
      %1928 = vmatprep.mubr.f32.mxu0 %v1530
      %1929 = vmatmul.mubr.f32.gmra.mrb[0].mxu0 %v1529
      %v1930 = vpop.f32.mrb[0].mxu0
      %v1931 = vadd.f32 %v1746, %v1930
      %v1932 = vpop.f32.mrb[0].mxu0
      %1933 = vmatprep.mubr.f32.mxu0 %v1535
      %1934 = vmatmul.mubr.f32.gmra.mrb[0].mxu0 %v1534
      %v1935 = vpop.f32.mrb[0].mxu0
      %v1936 = vadd.f32 %v1746, %v1935
      %v1937 = vpop.f32.mrb[0].mxu0
      %1938 = vmatprep.mubr.f32.mxu0 %v1540
      %1939 = vmatmul.mubr.f32.gmra.mrb[0].mxu0 %v1539
      %v1940 = vpop.f32.mrb[0].mxu0
      %v1941 = vadd.f32 %v1746, %v1940
      %v1942 = vpop.f32.mrb[0].mxu0
      %1943 = vmatprep.mubr.f32.mxu0 %v1545
      %1944 = vmatmul.mubr.f32.gmra.mrb[0].mxu0 %v1544
      %v1945 = vpop.f32.mrb[0].mxu0
      %v1946 = vadd.f32 %v1746, %v1945
      %v1947 = vpop.f32.mrb[0].mxu0
      %1948 = vmatprep.mubr.f32.mxu0 %v1550
      %1949 = vmatmul.mubr.f32.gmra.mrb[0].mxu0 %v1549
      %v1950 = vpop.f32.mrb[0].mxu0
      %v1951 = vadd.f32 %v1746, %v1950
      %v1952 = vpop.f32.mrb[0].mxu0
      %1953 = vmatprep.mubr.f32.mxu0 %v1555
      %1954 = vmatmul.mubr.f32.gmra.mrb[0].mxu0 %v1554
      %v1955 = vpop.f32.mrb[0].mxu0
      %v1956 = vadd.f32 %v1746, %v1955
      %v1957 = vpop.f32.mrb[0].mxu0
      %1958 = vmatprep.mubr.f32.mxu0 %v1560
      %1959 = vmatmul.mubr.f32.gmra.mrb[0].mxu0 %v1559
      %v1960 = vpop.f32.mrb[0].mxu0
      %v1961 = vadd.f32 %v1746, %v1960
      %v1962 = vpop.f32.mrb[0].mxu0
      %1963 = vmatprep.mubr.f32.mxu0 %v1565
      %1964 = vmatmul.mubr.f32.gmra.mrb[0].mxu0 %v1564
      %v1965 = vpop.f32.mrb[0].mxu0
      %v1966 = vadd.f32 %v1746, %v1965
      %v1967 = vpop.f32.mrb[0].mxu0
      %1968 = vmatprep.mubr.f32.mxu0 %v1570
      %1969 = vmatmul.mubr.f32.gmra.mrb[0].mxu0 %v1569
      %v1970 = vpop.f32.mrb[0].mxu0
      %v1971 = vadd.f32 %v1746, %v1970
      %v1972 = vpop.f32.mrb[0].mxu0
      %1973 = vmatprep.mubr.f32.mxu0 %v1575
      %1974 = vmatmul.mubr.f32.gmra.mrb[0].mxu0 %v1574
      %v1975 = vpop.f32.mrb[0].mxu0
      %v1976 = vadd.f32 %v1746, %v1975
      %v1977 = vpop.f32.mrb[0].mxu0
      %1978 = vmatprep.mubr.f32.mxu0 %v1580
      %1979 = vmatmul.mubr.f32.gmra.mrb[0].mxu0 %v1579
      %v1980 = vpop.f32.mrb[0].mxu0
      %v1981 = vadd.f32 %v1746, %v1980
      %v1982 = vpop.f32.mrb[0].mxu0
      %1983 = vmatprep.mubr.f32.mxu0 %v1585
      %1984 = vmatmul.mubr.f32.gmra.mrb[0].mxu0 %v1584
      %v1985 = vpop.f32.mrb[0].mxu0
      %v1986 = vadd.f32 %v1746, %v1985
      %v1987 = vpop.f32.mrb[0].mxu0
      %1988 = vmatprep.mubr.f32.mxu0 %v1590
      %1989 = vmatmul.mubr.f32.gmra.mrb[0].mxu0 %v1589
      %v1990 = vpop.f32.mrb[0].mxu0
      %v1991 = vadd.f32 %v1746, %v1990
      %v1992 = vpop.f32.mrb[0].mxu0
      %1993 = vmatprep.mubr.f32.mxu0 %v1595
      %1994 = vmatmul.mubr.f32.gmra.mrb[0].mxu0 %v1594
      %v1995 = vpop.f32.mrb[0].mxu0
      %v1996 = vadd.f32 %v1746, %v1995
      %v1997 = vpop.f32.mrb[0].mxu0
      %1998 = vmatprep.mubr.f32.mxu0 %v1600
      %1999 = vmatmul.mubr.f32.gmra.mrb[0].mxu0 %v1599
      %v2000 = vpop.f32.mrb[0].mxu0
      %v2001 = vadd.f32 %v1746, %v2000
      %v2002 = vpop.f32.mrb[0].mxu0
      %2003 = vmatprep.mubr.f32.mxu0 %v1605
      %2004 = vmatmul.mubr.f32.gmra.mrb[0].mxu0 %v1604
      %v2005 = vpop.f32.mrb[0].mxu0
      %v2006 = vadd.f32 %v1746, %v2005
      %v2007 = vpop.f32.mrb[0].mxu0
      %2008 = vmatprep.mubr.f32.mxu0 %v1610
      %2009 = vmatmul.mubr.f32.gmra.mrb[0].mxu0 %v1609
      %v2010 = vpop.f32.mrb[0].mxu0
      %v2011 = vadd.f32 %v1746, %v2010
      %v2012 = vpop.f32.mrb[0].mxu0
      %2013 = vmatprep.mubr.f32.mxu0 %v1615
      %2014 = vmatmul.mubr.f32.gmra.mrb[0].mxu0 %v1614
      %v2015 = vpop.f32.mrb[0].mxu0
      %v2016 = vadd.f32 %v1746, %v2015
      %v2017 = vpop.f32.mrb[0].mxu0
      %2018 = vmatprep.mubr.f32.mxu0 %v1620
      %2019 = vmatmul.mubr.f32.gmra.mrb[0].mxu0 %v1619
      %v2020 = vpop.f32.mrb[0].mxu0
      %v2021 = vadd.f32 %v1746, %v2020
      %v2022 = vpop.f32.mrb[0].mxu0
      %2023 = vmatprep.mubr.f32.mxu0 %v1625
      %2024 = vmatmul.mubr.f32.gmra.mrb[0].mxu0 %v1624
      %v2025 = vpop.f32.mrb[0].mxu0
      %v2026 = vadd.f32 %v1746, %v2025
      %v2027 = vpop.f32.mrb[0].mxu0
      %2028 = vmatprep.mubr.f32.mxu0 %v1630
      %2029 = vmatmul.mubr.f32.gmra.mrb[0].mxu0 %v1629
      %v2030 = vpop.f32.mrb[0].mxu0
      %v2031 = vadd.f32 %v1746, %v2030
      %v2032 = vpop.f32.mrb[0].mxu0
      %2033 = vmatprep.mubr.f32.mxu0 %v1635
      %2034 = vmatmul.mubr.f32.gmra.mrb[0].mxu0 %v1634
      %v2035 = vpop.f32.mrb[0].mxu0
      %v2036 = vadd.f32 %v1746, %v2035
      %v2037 = vpop.f32.mrb[0].mxu0
      %2038 = vmatprep.mubr.f32.mxu0 %v1640
      %2039 = vmatmul.mubr.f32.gmra.mrb[0].mxu0 %v1639
      %v2040 = vpop.f32.mrb[0].mxu0
      %v2041 = vadd.f32 %v1746, %v2040
      %v2042 = vpop.f32.mrb[0].mxu0
      %2043 = vmatprep.mubr.f32.mxu0 %v1645
      %2044 = vmatmul.mubr.f32.gmra.mrb[0].mxu0 %v1644
      %v2045 = vpop.f32.mrb[0].mxu0
      %v2046 = vadd.f32 %v1746, %v2045
      %v2047 = vpop.f32.mrb[0].mxu0
      %2048 = vmatprep.mubr.f32.mxu0 %v1650
      %2049 = vmatmul.mubr.f32.gmra.mrb[0].mxu0 %v1649
      %v2050 = vpop.f32.mrb[0].mxu0
      %v2051 = vadd.f32 %v1746, %v2050
      %v2052 = vpop.f32.mrb[0].mxu0
      %2053 = vmatprep.mubr.f32.mxu0 %v1655
      %2054 = vmatmul.mubr.f32.gmra.mrb[0].mxu0 %v1654
      %v2055 = vpop.f32.mrb[0].mxu0
      %v2056 = vadd.f32 %v1746, %v2055
      %v2057 = vpop.f32.mrb[0].mxu0
      %2058 = vmatprep.mubr.f32.mxu0 %v1660
      %2059 = vmatmul.mubr.f32.gmra.mrb[0].mxu0 %v1659
      %v2060 = vpop.f32.mrb[0].mxu0
      %v2061 = vadd.f32 %v1746, %v2060
      %v2062 = vpop.f32.mrb[0].mxu0
      %2063 = vmatprep.mubr.f32.mxu0 %v1665
      %2064 = vmatmul.mubr.f32.gmra.mrb[0].mxu0 %v1664
      %v2065 = vpop.f32.mrb[0].mxu0
      %v2066 = vadd.f32 %v1746, %v2065
      %v2067 = vpop.f32.mrb[0].mxu0
      %2068 = vdwg.mxu0
      %2069 = vmatprep.subr.mxu0 0.0
      %2070 = vmatpush1.msra.mxu0 %v1701
      %2071 = vmatprep.subr.mxu0 0.0
      %2072 = vmatpush1.msra.mxu0 %v1702
      %2073 = vmatprep.subr.mxu0 0.0
      %2074 = vmatpush1.msra.mxu0 %v1703
      %2075 = vmatprep.subr.mxu0 0.0
      %2076 = vmatpush1.msra.mxu0 %v1704
      %2077 = vmatprep.subr.mxu0 0.0
      %2078 = vmatpush1.msra.mxu0 %v1705
      %2079 = vmatprep.subr.mxu0 0.0
      %2080 = vmatpush1.msra.mxu0 %v1706
      %2081 = vmatprep.subr.mxu0 0.0
      %2082 = vmatpush1.msra.mxu0 %v1707
      %2083 = vmatprep.subr.mxu0 0.0
      %2084 = vmatpush1.msra.mxu0 %v1708
      %2085 = vmatprep.subr.mxu0 0.0
      %2086 = vmatpush1.msra.mxu0 %v1709
      %2087 = vmatprep.subr.mxu0 0.0
      %2088 = vmatpush1.msra.mxu0 %v1710
      %2089 = vmatprep.subr.mxu0 0.0
      %2090 = vmatpush1.msra.mxu0 %v1711
      %2091 = vmatprep.subr.mxu0 0.0
      %2092 = vmatpush1.msra.mxu0 %v1712
      %2093 = vmatprep.subr.mxu0 0.0
      %2094 = vmatpush1.msra.mxu0 %v1713
      %2095 = vmatprep.subr.mxu0 0.0
      %2096 = vmatpush1.msra.mxu0 %v1714
      %2097 = vmatprep.subr.mxu0 0.0
      %2098 = vmatpush1.msra.mxu0 %v1715
      %2099 = vmatprep.subr.mxu0 0.0
      %2100 = vmatpush1.msra.mxu0 %v1716
      %2101 = vmatprep.subr.mxu0 0.0
      %2102 = vmatpush1.msra.mxu0 %v1717
      %2103 = vmatprep.subr.mxu0 0.0
      %2104 = vmatpush1.msra.mxu0 %v1718
      %2105 = vmatprep.subr.mxu0 0.0
      %2106 = vmatpush1.msra.mxu0 %v1719
      %2107 = vmatprep.subr.mxu0 0.0
      %2108 = vmatpush1.msra.mxu0 %v1720
      %2109 = vmatprep.subr.mxu0 0.0
      %2110 = vmatpush1.msra.mxu0 %v1721
      %2111 = vmatprep.subr.mxu0 0.0
      %2112 = vmatpush1.msra.mxu0 %v1722
      %2113 = vmatprep.subr.mxu0 0.0
      %2114 = vmatpush1.msra.mxu0 %v1723
      %2115 = vmatprep.subr.mxu0 0.0
      %2116 = vmatpush1.msra.mxu0 %v1724
      %2117 = vmatprep.subr.mxu0 0.0
      %2118 = vmatpush1.msra.mxu0 %v1725
      %2119 = vmatprep.subr.mxu0 0.0
      %2120 = vmatpush1.msra.mxu0 %v1726
      %2121 = vmatprep.subr.mxu0 0.0
      %2122 = vmatpush1.msra.mxu0 %v1727
      %2123 = vmatprep.subr.mxu0 0.0
      %2124 = vmatpush1.msra.mxu0 %v1728
      %2125 = vmatprep.subr.mxu0 0.0
      %2126 = vmatpush1.msra.mxu0 %v1729
      %2127 = vmatprep.subr.mxu0 0.0
      %2128 = vmatpush1.msra.mxu0 %v1730
      %2129 = vmatprep.subr.mxu0 0.0
      %2130 = vmatpush1.msra.mxu0 %v1731
      %2131 = vmatprep.subr.mxu0 0.0
      %2132 = vmatpush1.msra.mxu0 %v1732
      %2133 = vmatprep.mubr.f32.mxu0 %v1512
      %2134 = vmatmul.mubr.f32.gmra.mrb[0].mxu0 %v1511
      %v2135 = vpop.f32.mrb[0].mxu0
      %v2136 = vadd.f32 %v1911, %v2135
      %v2137 = vpop.f32.mrb[0].mxu0
      %2138 = vmatprep.mubr.f32.mxu0 %v1517
      %2139 = vmatmul.mubr.f32.gmra.mrb[0].mxu0 %v1516
      %v2140 = vpop.f32.mrb[0].mxu0
      %v2141 = vadd.f32 %v1916, %v2140
      %v2142 = vpop.f32.mrb[0].mxu0
      %2143 = vmatprep.mubr.f32.mxu0 %v1522
      %2144 = vmatmul.mubr.f32.gmra.mrb[0].mxu0 %v1521
      %v2145 = vpop.f32.mrb[0].mxu0
      %v2146 = vadd.f32 %v1921, %v2145
      %v2147 = vpop.f32.mrb[0].mxu0
      %2148 = vmatprep.mubr.f32.mxu0 %v1527
      %2149 = vmatmul.mubr.f32.gmra.mrb[0].mxu0 %v1526
      %v2150 = vpop.f32.mrb[0].mxu0
      %v2151 = vadd.f32 %v1926, %v2150
      %v2152 = vpop.f32.mrb[0].mxu0
      %2153 = vmatprep.mubr.f32.mxu0 %v1532
      %2154 = vmatmul.mubr.f32.gmra.mrb[0].mxu0 %v1531
      %v2155 = vpop.f32.mrb[0].mxu0
      %v2156 = vadd.f32 %v1931, %v2155
      %v2157 = vpop.f32.mrb[0].mxu0
      %2158 = vmatprep.mubr.f32.mxu0 %v1537
      %2159 = vmatmul.mubr.f32.gmra.mrb[0].mxu0 %v1536
      %v2160 = vpop.f32.mrb[0].mxu0
      %v2161 = vadd.f32 %v1936, %v2160
      %v2162 = vpop.f32.mrb[0].mxu0
      %2163 = vmatprep.mubr.f32.mxu0 %v1542
      %2164 = vmatmul.mubr.f32.gmra.mrb[0].mxu0 %v1541
      %v2165 = vpop.f32.mrb[0].mxu0
      %v2166 = vadd.f32 %v1941, %v2165
      %v2167 = vpop.f32.mrb[0].mxu0
      %2168 = vmatprep.mubr.f32.mxu0 %v1547
      %2169 = vmatmul.mubr.f32.gmra.mrb[0].mxu0 %v1546
      %v2170 = vpop.f32.mrb[0].mxu0
      %v2171 = vadd.f32 %v1946, %v2170
      %v2172 = vpop.f32.mrb[0].mxu0
      %2173 = vmatprep.mubr.f32.mxu0 %v1552
      %2174 = vmatmul.mubr.f32.gmra.mrb[0].mxu0 %v1551
      %v2175 = vpop.f32.mrb[0].mxu0
      %v2176 = vadd.f32 %v1951, %v2175
      %v2177 = vpop.f32.mrb[0].mxu0
      %2178 = vmatprep.mubr.f32.mxu0 %v1557
      %2179 = vmatmul.mubr.f32.gmra.mrb[0].mxu0 %v1556
      %v2180 = vpop.f32.mrb[0].mxu0
      %v2181 = vadd.f32 %v1956, %v2180
      %v2182 = vpop.f32.mrb[0].mxu0
      %2183 = vmatprep.mubr.f32.mxu0 %v1562
      %2184 = vmatmul.mubr.f32.gmra.mrb[0].mxu0 %v1561
      %v2185 = vpop.f32.mrb[0].mxu0
      %v2186 = vadd.f32 %v1961, %v2185
      %v2187 = vpop.f32.mrb[0].mxu0
      %2188 = vmatprep.mubr.f32.mxu0 %v1567
      %2189 = vmatmul.mubr.f32.gmra.mrb[0].mxu0 %v1566
      %v2190 = vpop.f32.mrb[0].mxu0
      %v2191 = vadd.f32 %v1966, %v2190
      %v2192 = vpop.f32.mrb[0].mxu0
      %2193 = vmatprep.mubr.f32.mxu0 %v1572
      %2194 = vmatmul.mubr.f32.gmra.mrb[0].mxu0 %v1571
      %v2195 = vpop.f32.mrb[0].mxu0
      %v2196 = vadd.f32 %v1971, %v2195
      %v2197 = vpop.f32.mrb[0].mxu0
      %2198 = vmatprep.mubr.f32.mxu0 %v1577
      %2199 = vmatmul.mubr.f32.gmra.mrb[0].mxu0 %v1576
      %v2200 = vpop.f32.mrb[0].mxu0
      %v2201 = vadd.f32 %v1976, %v2200
      %v2202 = vpop.f32.mrb[0].mxu0
      %2203 = vmatprep.mubr.f32.mxu0 %v1582
      %2204 = vmatmul.mubr.f32.gmra.mrb[0].mxu0 %v1581
      %v2205 = vpop.f32.mrb[0].mxu0
      %v2206 = vadd.f32 %v1981, %v2205
      %v2207 = vpop.f32.mrb[0].mxu0
      %2208 = vmatprep.mubr.f32.mxu0 %v1587
      %2209 = vmatmul.mubr.f32.gmra.mrb[0].mxu0 %v1586
      %v2210 = vpop.f32.mrb[0].mxu0
      %v2211 = vadd.f32 %v1986, %v2210
      %v2212 = vpop.f32.mrb[0].mxu0
      %2213 = vmatprep.mubr.f32.mxu0 %v1592
      %2214 = vmatmul.mubr.f32.gmra.mrb[0].mxu0 %v1591
      %v2215 = vpop.f32.mrb[0].mxu0
      %v2216 = vadd.f32 %v1991, %v2215
      %v2217 = vpop.f32.mrb[0].mxu0
      %2218 = vmatprep.mubr.f32.mxu0 %v1597
      %2219 = vmatmul.mubr.f32.gmra.mrb[0].mxu0 %v1596
      %v2220 = vpop.f32.mrb[0].mxu0
      %v2221 = vadd.f32 %v1996, %v2220
      %v2222 = vpop.f32.mrb[0].mxu0
      %2223 = vmatprep.mubr.f32.mxu0 %v1602
      %2224 = vmatmul.mubr.f32.gmra.mrb[0].mxu0 %v1601
      %v2225 = vpop.f32.mrb[0].mxu0
      %v2226 = vadd.f32 %v2001, %v2225
      %v2227 = vpop.f32.mrb[0].mxu0
      %2228 = vmatprep.mubr.f32.mxu0 %v1607
      %2229 = vmatmul.mubr.f32.gmra.mrb[0].mxu0 %v1606
      %v2230 = vpop.f32.mrb[0].mxu0
      %v2231 = vadd.f32 %v2006, %v2230
      %v2232 = vpop.f32.mrb[0].mxu0
      %2233 = vmatprep.mubr.f32.mxu0 %v1612
      %2234 = vmatmul.mubr.f32.gmra.mrb[0].mxu0 %v1611
      %v2235 = vpop.f32.mrb[0].mxu0
      %v2236 = vadd.f32 %v2011, %v2235
      %v2237 = vpop.f32.mrb[0].mxu0
      %2238 = vmatprep.mubr.f32.mxu0 %v1617
      %2239 = vmatmul.mubr.f32.gmra.mrb[0].mxu0 %v1616
      %v2240 = vpop.f32.mrb[0].mxu0
      %v2241 = vadd.f32 %v2016, %v2240
      %v2242 = vpop.f32.mrb[0].mxu0
      %2243 = vmatprep.mubr.f32.mxu0 %v1622
      %2244 = vmatmul.mubr.f32.gmra.mrb[0].mxu0 %v1621
      %v2245 = vpop.f32.mrb[0].mxu0
      %v2246 = vadd.f32 %v2021, %v2245
      %v2247 = vpop.f32.mrb[0].mxu0
      %2248 = vmatprep.mubr.f32.mxu0 %v1627
      %2249 = vmatmul.mubr.f32.gmra.mrb[0].mxu0 %v1626
      %v2250 = vpop.f32.mrb[0].mxu0
      %v2251 = vadd.f32 %v2026, %v2250
      %v2252 = vpop.f32.mrb[0].mxu0
      %2253 = vmatprep.mubr.f32.mxu0 %v1632
      %2254 = vmatmul.mubr.f32.gmra.mrb[0].mxu0 %v1631
      %v2255 = vpop.f32.mrb[0].mxu0
      %v2256 = vadd.f32 %v2031, %v2255
      %v2257 = vpop.f32.mrb[0].mxu0
      %2258 = vmatprep.mubr.f32.mxu0 %v1637
      %2259 = vmatmul.mubr.f32.gmra.mrb[0].mxu0 %v1636
      %v2260 = vpop.f32.mrb[0].mxu0
      %v2261 = vadd.f32 %v2036, %v2260
      %v2262 = vpop.f32.mrb[0].mxu0
      %2263 = vmatprep.mubr.f32.mxu0 %v1642
      %2264 = vmatmul.mubr.f32.gmra.mrb[0].mxu0 %v1641
      %v2265 = vpop.f32.mrb[0].mxu0
      %v2266 = vadd.f32 %v2041, %v2265
      %v2267 = vpop.f32.mrb[0].mxu0
      %2268 = vmatprep.mubr.f32.mxu0 %v1647
      %2269 = vmatmul.mubr.f32.gmra.mrb[0].mxu0 %v1646
      %v2270 = vpop.f32.mrb[0].mxu0
      %v2271 = vadd.f32 %v2046, %v2270
      %v2272 = vpop.f32.mrb[0].mxu0
      %2273 = vmatprep.mubr.f32.mxu0 %v1652
      %2274 = vmatmul.mubr.f32.gmra.mrb[0].mxu0 %v1651
      %v2275 = vpop.f32.mrb[0].mxu0
      %v2276 = vadd.f32 %v2051, %v2275
      %v2277 = vpop.f32.mrb[0].mxu0
      %2278 = vmatprep.mubr.f32.mxu0 %v1657
      %2279 = vmatmul.mubr.f32.gmra.mrb[0].mxu0 %v1656
      %v2280 = vpop.f32.mrb[0].mxu0
      %v2281 = vadd.f32 %v2056, %v2280
      %v2282 = vpop.f32.mrb[0].mxu0
      %2283 = vmatprep.mubr.f32.mxu0 %v1662
      %2284 = vmatmul.mubr.f32.gmra.mrb[0].mxu0 %v1661
      %v2285 = vpop.f32.mrb[0].mxu0
      %v2286 = vadd.f32 %v2061, %v2285
      %v2287 = vpop.f32.mrb[0].mxu0
      %2288 = vmatprep.mubr.f32.mxu0 %v1667
      %2289 = vmatmul.mubr.f32.gmra.mrb[0].mxu0 %v1666
      %v2290 = vpop.f32.mrb[0].mxu0
      %v2291 = vadd.f32 %v2066, %v2290
      %v2292 = vpop.f32.mrb[0].mxu0
      %2293 = vdwg.mxu0
      %2294 = vmatprep.subr.mxu0 0.0
      %2295 = vmatpush1.msra.mxu0 %v1733
      %2296 = vmatprep.subr.mxu0 0.0
      %2297 = vmatpush1.msra.mxu0 %v1734
      %2298 = vmatprep.subr.mxu0 0.0
      %2299 = vmatpush1.msra.mxu0 %v1735
      %2300 = vmatprep.subr.mxu0 0.0
      %2301 = vmatpush1.msra.mxu0 %v1736
      %2302 = vmatprep.subr.mxu0 0.0
      %2303 = vmatpush1.msra.mxu0 %v1737
      %2304 = vmatprep.subr.mxu0 0.0
      %2305 = vmatpush1.msra.mxu0 %v1738
      %2306 = vmatprep.subr.mxu0 0.0
      %2307 = vmatpush1.msra.mxu0 %v1739
      %2308 = vmatprep.subr.mxu0 0.0
      %2309 = vmatpush1.msra.mxu0 %v1740
      %2310 = vmatprep.subr.mxu0 0.0
      %2311 = vmatpush1.msra.mxu0 0.0
      %2312 = vmatprep.subr.mxu0 0.0
      %2313 = vmatpush1.msra.mxu0 0.0
      %2314 = vmatprep.subr.mxu0 0.0
      %2315 = vmatpush1.msra.mxu0 0.0
      %2316 = vmatprep.subr.mxu0 0.0
      %2317 = vmatpush1.msra.mxu0 0.0
      %2318 = vmatprep.subr.mxu0 0.0
      %2319 = vmatpush1.msra.mxu0 0.0
      %2320 = vmatprep.subr.mxu0 0.0
      %2321 = vmatpush1.msra.mxu0 0.0
      %2322 = vmatprep.subr.mxu0 0.0
      %2323 = vmatpush1.msra.mxu0 0.0
      %2324 = vmatprep.subr.mxu0 0.0
      %2325 = vmatpush1.msra.mxu0 0.0
      %2326 = vmatprep.subr.mxu0 0.0
      %2327 = vmatpush1.msra.mxu0 0.0
      %2328 = vmatprep.subr.mxu0 0.0
      %2329 = vmatpush1.msra.mxu0 0.0
      %2330 = vmatprep.subr.mxu0 0.0
      %2331 = vmatpush1.msra.mxu0 0.0
      %2332 = vmatprep.subr.mxu0 0.0
      %2333 = vmatpush1.msra.mxu0 0.0
      %2334 = vmatprep.subr.mxu0 0.0
      %2335 = vmatpush1.msra.mxu0 0.0
      %2336 = vmatprep.subr.mxu0 0.0
      %2337 = vmatpush1.msra.mxu0 0.0
      %2338 = vmatprep.subr.mxu0 0.0
      %2339 = vmatpush1.msra.mxu0 0.0
      %2340 = vmatprep.subr.mxu0 0.0
      %2341 = vmatpush1.msra.mxu0 0.0
      %2342 = vmatprep.subr.mxu0 0.0
      %2343 = vmatpush1.msra.mxu0 0.0
      %2344 = vmatprep.subr.mxu0 0.0
      %2345 = vmatpush1.msra.mxu0 0.0
      %2346 = vmatprep.subr.mxu0 0.0
      %2347 = vmatpush1.msra.mxu0 0.0
      %2348 = vmatprep.subr.mxu0 0.0
      %2349 = vmatpush1.msra.mxu0 0.0
      %2350 = vmatprep.subr.mxu0 0.0
      %2351 = vmatpush1.msra.mxu0 0.0
      %2352 = vmatprep.subr.mxu0 0.0
      %2353 = vmatpush1.msra.mxu0 0.0
      %2354 = vmatprep.subr.mxu0 0.0
      %2355 = vmatpush1.msra.mxu0 0.0
      %2356 = vmatprep.subr.mxu0 0.0
      %2357 = vmatpush1.msra.mxu0 0.0
      %2358 = vmatprep.mubr.f32.mxu0 0.0
      %2359 = vmatmul.mubr.f32.gmra.mrb[0].mxu0 %v1749
      %v2360 = vpop.f32.mrb[0].mxu0
      %v2361 = vadd.f32 %v2136, %v2360
      %v2362 = vpop.f32.mrb[0].mxu0
      %2363 = vmatprep.mubr.f32.mxu0 0.0
      %2364 = vmatmul.mubr.f32.gmra.mrb[0].mxu0 %v1752
      %v2365 = vpop.f32.mrb[0].mxu0
      %v2366 = vadd.f32 %v2141, %v2365
      %v2367 = vpop.f32.mrb[0].mxu0
      %2368 = vmatprep.mubr.f32.mxu0 0.0
      %2369 = vmatmul.mubr.f32.gmra.mrb[0].mxu0 %v1755
      %v2370 = vpop.f32.mrb[0].mxu0
      %v2371 = vadd.f32 %v2146, %v2370
      %v2372 = vpop.f32.mrb[0].mxu0
      %2373 = vmatprep.mubr.f32.mxu0 0.0
      %2374 = vmatmul.mubr.f32.gmra.mrb[0].mxu0 %v1758
      %v2375 = vpop.f32.mrb[0].mxu0
      %v2376 = vadd.f32 %v2151, %v2375
      %v2377 = vpop.f32.mrb[0].mxu0
      %2378 = vmatprep.mubr.f32.mxu0 0.0
      %2379 = vmatmul.mubr.f32.gmra.mrb[0].mxu0 %v1761
      %v2380 = vpop.f32.mrb[0].mxu0
      %v2381 = vadd.f32 %v2156, %v2380
      %v2382 = vpop.f32.mrb[0].mxu0
      %2383 = vmatprep.mubr.f32.mxu0 0.0
      %2384 = vmatmul.mubr.f32.gmra.mrb[0].mxu0 %v1764
      %v2385 = vpop.f32.mrb[0].mxu0
      %v2386 = vadd.f32 %v2161, %v2385
      %v2387 = vpop.f32.mrb[0].mxu0
      %2388 = vmatprep.mubr.f32.mxu0 0.0
      %2389 = vmatmul.mubr.f32.gmra.mrb[0].mxu0 %v1767
      %v2390 = vpop.f32.mrb[0].mxu0
      %v2391 = vadd.f32 %v2166, %v2390
      %v2392 = vpop.f32.mrb[0].mxu0
      %2393 = vmatprep.mubr.f32.mxu0 0.0
      %2394 = vmatmul.mubr.f32.gmra.mrb[0].mxu0 %v1770
      %v2395 = vpop.f32.mrb[0].mxu0
      %v2396 = vadd.f32 %v2171, %v2395
      %v2397 = vpop.f32.mrb[0].mxu0
      %2398 = vmatprep.mubr.f32.mxu0 0.0
      %2399 = vmatmul.mubr.f32.gmra.mrb[0].mxu0 %v1773
      %v2400 = vpop.f32.mrb[0].mxu0
      %v2401 = vadd.f32 %v2176, %v2400
      %v2402 = vpop.f32.mrb[0].mxu0
      %2403 = vmatprep.mubr.f32.mxu0 0.0
      %2404 = vmatmul.mubr.f32.gmra.mrb[0].mxu0 %v1776
      %v2405 = vpop.f32.mrb[0].mxu0
      %v2406 = vadd.f32 %v2181, %v2405
      %v2407 = vpop.f32.mrb[0].mxu0
      %2408 = vmatprep.mubr.f32.mxu0 0.0
      %2409 = vmatmul.mubr.f32.gmra.mrb[0].mxu0 %v1779
      %v2410 = vpop.f32.mrb[0].mxu0
      %v2411 = vadd.f32 %v2186, %v2410
      %v2412 = vpop.f32.mrb[0].mxu0
      %2413 = vmatprep.mubr.f32.mxu0 0.0
      %2414 = vmatmul.mubr.f32.gmra.mrb[0].mxu0 %v1782
      %v2415 = vpop.f32.mrb[0].mxu0
      %v2416 = vadd.f32 %v2191, %v2415
      %v2417 = vpop.f32.mrb[0].mxu0
      %2418 = vmatprep.mubr.f32.mxu0 0.0
      %2419 = vmatmul.mubr.f32.gmra.mrb[0].mxu0 %v1785
      %v2420 = vpop.f32.mrb[0].mxu0
      %v2421 = vadd.f32 %v2196, %v2420
      %v2422 = vpop.f32.mrb[0].mxu0
      %2423 = vmatprep.mubr.f32.mxu0 0.0
      %2424 = vmatmul.mubr.f32.gmra.mrb[0].mxu0 %v1788
      %v2425 = vpop.f32.mrb[0].mxu0
      %v2426 = vadd.f32 %v2201, %v2425
      %v2427 = vpop.f32.mrb[0].mxu0
      %2428 = vmatprep.mubr.f32.mxu0 0.0
      %2429 = vmatmul.mubr.f32.gmra.mrb[0].mxu0 %v1791
      %v2430 = vpop.f32.mrb[0].mxu0
      %v2431 = vadd.f32 %v2206, %v2430
      %v2432 = vpop.f32.mrb[0].mxu0
      %2433 = vmatprep.mubr.f32.mxu0 0.0
      %2434 = vmatmul.mubr.f32.gmra.mrb[0].mxu0 %v1794
      %v2435 = vpop.f32.mrb[0].mxu0
      %v2436 = vadd.f32 %v2211, %v2435
      %v2437 = vpop.f32.mrb[0].mxu0
      %2438 = vmatprep.mubr.f32.mxu0 0.0
      %2439 = vmatmul.mubr.f32.gmra.mrb[0].mxu0 %v1797
      %v2440 = vpop.f32.mrb[0].mxu0
      %v2441 = vadd.f32 %v2216, %v2440
      %v2442 = vpop.f32.mrb[0].mxu0
      %2443 = vmatprep.mubr.f32.mxu0 0.0
      %2444 = vmatmul.mubr.f32.gmra.mrb[0].mxu0 %v1800
      %v2445 = vpop.f32.mrb[0].mxu0
      %v2446 = vadd.f32 %v2221, %v2445
      %v2447 = vpop.f32.mrb[0].mxu0
      %2448 = vmatprep.mubr.f32.mxu0 0.0
      %2449 = vmatmul.mubr.f32.gmra.mrb[0].mxu0 %v1803
      %v2450 = vpop.f32.mrb[0].mxu0
      %v2451 = vadd.f32 %v2226, %v2450
      %v2452 = vpop.f32.mrb[0].mxu0
      %2453 = vmatprep.mubr.f32.mxu0 0.0
      %2454 = vmatmul.mubr.f32.gmra.mrb[0].mxu0 %v1806
      %v2455 = vpop.f32.mrb[0].mxu0
      %v2456 = vadd.f32 %v2231, %v2455
      %v2457 = vpop.f32.mrb[0].mxu0
      %2458 = vmatprep.mubr.f32.mxu0 0.0
      %2459 = vmatmul.mubr.f32.gmra.mrb[0].mxu0 %v1809
      %v2460 = vpop.f32.mrb[0].mxu0
      %v2461 = vadd.f32 %v2236, %v2460
      %v2462 = vpop.f32.mrb[0].mxu0
      %2463 = vmatprep.mubr.f32.mxu0 0.0
      %2464 = vmatmul.mubr.f32.gmra.mrb[0].mxu0 %v1812
      %v2465 = vpop.f32.mrb[0].mxu0
      %v2466 = vadd.f32 %v2241, %v2465
      %v2467 = vpop.f32.mrb[0].mxu0
      %2468 = vmatprep.mubr.f32.mxu0 0.0
      %2469 = vmatmul.mubr.f32.gmra.mrb[0].mxu0 %v1815
      %v2470 = vpop.f32.mrb[0].mxu0
      %v2471 = vadd.f32 %v2246, %v2470
      %v2472 = vpop.f32.mrb[0].mxu0
      %2473 = vmatprep.mubr.f32.mxu0 0.0
      %2474 = vmatmul.mubr.f32.gmra.mrb[0].mxu0 %v1818
      %v2475 = vpop.f32.mrb[0].mxu0
      %v2476 = vadd.f32 %v2251, %v2475
      %v2477 = vpop.f32.mrb[0].mxu0
      %2478 = vmatprep.mubr.f32.mxu0 0.0
      %2479 = vmatmul.mubr.f32.gmra.mrb[0].mxu0 %v1821
      %v2480 = vpop.f32.mrb[0].mxu0
      %v2481 = vadd.f32 %v2256, %v2480
      %v2482 = vpop.f32.mrb[0].mxu0
      %2483 = vmatprep.mubr.f32.mxu0 0.0
      %2484 = vmatmul.mubr.f32.gmra.mrb[0].mxu0 %v1824
      %v2485 = vpop.f32.mrb[0].mxu0
      %v2486 = vadd.f32 %v2261, %v2485
      %v2487 = vpop.f32.mrb[0].mxu0
      %2488 = vmatprep.mubr.f32.mxu0 0.0
      %2489 = vmatmul.mubr.f32.gmra.mrb[0].mxu0 %v1827
      %v2490 = vpop.f32.mrb[0].mxu0
      %v2491 = vadd.f32 %v2266, %v2490
      %v2492 = vpop.f32.mrb[0].mxu0
      %2493 = vmatprep.mubr.f32.mxu0 0.0
      %2494 = vmatmul.mubr.f32.gmra.mrb[0].mxu0 %v1830
      %v2495 = vpop.f32.mrb[0].mxu0
      %v2496 = vadd.f32 %v2271, %v2495
      %v2497 = vpop.f32.mrb[0].mxu0
      %2498 = vmatprep.mubr.f32.mxu0 0.0
      %2499 = vmatmul.mubr.f32.gmra.mrb[0].mxu0 %v1833
      %v2500 = vpop.f32.mrb[0].mxu0
      %v2501 = vadd.f32 %v2276, %v2500
      %v2502 = vpop.f32.mrb[0].mxu0
      %2503 = vmatprep.mubr.f32.mxu0 0.0
      %2504 = vmatmul.mubr.f32.gmra.mrb[0].mxu0 %v1836
      %v2505 = vpop.f32.mrb[0].mxu0
      %v2506 = vadd.f32 %v2281, %v2505
      %v2507 = vpop.f32.mrb[0].mxu0
      %2508 = vmatprep.mubr.f32.mxu0 0.0
      %2509 = vmatmul.mubr.f32.gmra.mrb[0].mxu0 %v1839
      %v2510 = vpop.f32.mrb[0].mxu0
      %v2511 = vadd.f32 %v2286, %v2510
      %v2512 = vpop.f32.mrb[0].mxu0
      %2513 = vmatprep.mubr.f32.mxu0 0.0
      %2514 = vmatmul.mubr.f32.gmra.mrb[0].mxu0 %v1842
      %v2515 = vpop.f32.mrb[0].mxu0
      %v2516 = vadd.f32 %v2291, %v2515
      %v2517 = vpop.f32.mrb[0].mxu0
      %2518 = vdwg.mxu0
      %2519 = vst.msk [vmem:[%s386 + $0x8] sm:$0xff] %vm281, %v2361
      %2520 = vst.msk [vmem:[%s386 + $0x10] sm:$0xff] %vm281, %v2366
      %2521 = vst.msk [vmem:[%s386 + $0x28] sm:$0xff] %vm281, %v2371
      %2522 = vst.msk [vmem:[%s386 + $0x30] sm:$0xff] %vm281, %v2376
      %2523 = vst.msk [vmem:[%s386 + $0x48] sm:$0xff] %vm281, %v2381
      %2524 = vst.msk [vmem:[%s386 + $0x50] sm:$0xff] %vm281, %v2386
      %2525 = vst.msk [vmem:[%s386 + $0x68] sm:$0xff] %vm281, %v2391
      %2526 = vst.msk [vmem:[%s386 + $0x70] sm:$0xff] %vm281, %v2396
      %2527 = vst.msk [vmem:[%s386 + $0x88] sm:$0xff] %vm281, %v2401
      %2528 = vst.msk [vmem:[%s386 + $0x90] sm:$0xff] %vm281, %v2406
      %2529 = vst.msk [vmem:[%s386 + $0xa8] sm:$0xff] %vm281, %v2411
      %2530 = vst.msk [vmem:[%s386 + $0xb0] sm:$0xff] %vm281, %v2416
      %2531 = vst.msk [vmem:[%s386 + $0xc8] sm:$0xff] %vm281, %v2421
      %2532 = vst.msk [vmem:[%s386 + $0xd0] sm:$0xff] %vm281, %v2426
      %2533 = vst.msk [vmem:[%s386 + $0xe8] sm:$0xff] %vm281, %v2431
      %2534 = vst.msk [vmem:[%s386 + $0xf0] sm:$0xff] %vm281, %v2436
      %2535 = vst.msk [vmem:[%s386 + $0x108] sm:$0xff] %vm281, %v2441
      %2536 = vst.msk [vmem:[%s386 + $0x110] sm:$0xff] %vm281, %v2446
      %2537 = vst.msk [vmem:[%s386 + $0x128] sm:$0xff] %vm281, %v2451
      %2538 = vst.msk [vmem:[%s386 + $0x130] sm:$0xff] %vm281, %v2456
      %2539 = vst.msk [vmem:[%s386 + $0x148] sm:$0xff] %vm281, %v2461
      %2540 = vst.msk [vmem:[%s386 + $0x150] sm:$0xff] %vm281, %v2466
      %2541 = vst.msk [vmem:[%s386 + $0x168] sm:$0xff] %vm281, %v2471
      %2542 = vst.msk [vmem:[%s386 + $0x170] sm:$0xff] %vm281, %v2476
      %2543 = vst.msk [vmem:[%s386 + $0x188] sm:$0xff] %vm281, %v2481
      %2544 = vst.msk [vmem:[%s386 + $0x190] sm:$0xff] %vm281, %v2486
      %2545 = vst.msk [vmem:[%s386 + $0x1a8] sm:$0xff] %vm281, %v2491
      %2546 = vst.msk [vmem:[%s386 + $0x1b0] sm:$0xff] %vm281, %v2496
      %2547 = vst.msk [vmem:[%s386 + $0x1c8] sm:$0xff] %vm281, %v2501
      %2548 = vst.msk [vmem:[%s386 + $0x1d0] sm:$0xff] %vm281, %v2506
      %2549 = vst.msk [vmem:[%s386 + $0x1e8] sm:$0xff] %vm281, %v2511
      %2550 = vst.msk [vmem:[%s386 + $0x1f0] sm:$0xff] %vm281, %v2516
      %v2551 = vld [vmem:[#allocation2 + $0x7] sm:$0xff]
      %v2552 = vld [vmem:[#allocation2 + $0xf] sm:$0xff]
      %v2553 = vld [vmem:[#allocation2 + $0x27] sm:$0xff]
      %v2554 = vld [vmem:[#allocation2 + $0x2f] sm:$0xff]
      %v2555 = vld [vmem:[#allocation2 + $0x47] sm:$0xff]
      %v2556 = vld [vmem:[#allocation2 + $0x4f] sm:$0xff]
      %v2557 = vld [vmem:[#allocation2 + $0x67] sm:$0xff]
      %v2558 = vld [vmem:[#allocation2 + $0x6f] sm:$0xff]
      %v2559 = vld [vmem:[#allocation2 + $0x87] sm:$0xff]
      %v2560 = vld [vmem:[#allocation2 + $0x8f] sm:$0xff]
      %v2561 = vld [vmem:[#allocation2 + $0xa7] sm:$0xff]
      %v2562 = vld [vmem:[#allocation2 + $0xaf] sm:$0xff]
      %v2563 = vld [vmem:[#allocation2 + $0xc7] sm:$0xff]
      %v2564 = vld [vmem:[#allocation2 + $0xcf] sm:$0xff]
      %v2565 = vld [vmem:[#allocation2 + $0xe7] sm:$0xff]
      %v2566 = vld [vmem:[#allocation2 + $0xef] sm:$0xff]
      %v2567 = vld [vmem:[#allocation2 + $0x107] sm:$0xff]
      %v2568 = vld [vmem:[#allocation2 + $0x10f] sm:$0xff]
      %v2569 = vld [vmem:[#allocation2 + $0x127] sm:$0xff]
      %v2570 = vld [vmem:[#allocation2 + $0x12f] sm:$0xff]
      %v2571 = vld [vmem:[#allocation2 + $0x147] sm:$0xff]
      %v2572 = vld [vmem:[#allocation2 + $0x14f] sm:$0xff]
      %v2573 = vld [vmem:[#allocation2 + $0x167] sm:$0xff]
      %v2574 = vld [vmem:[#allocation2 + $0x16f] sm:$0xff]
      %v2575 = vld [vmem:[#allocation2 + $0x187] sm:$0xff]
      %v2576 = vld [vmem:[#allocation2 + $0x18f] sm:$0xff]
      %v2577 = vld [vmem:[#allocation2 + $0x1a7] sm:$0xff]
      %v2578 = vld [vmem:[#allocation2 + $0x1af] sm:$0xff]
      %v2579 = vld [vmem:[#allocation2 + $0x1c7] sm:$0xff]
      %v2580 = vld [vmem:[#allocation2 + $0x1cf] sm:$0xff]
      %v2581 = vld [vmem:[#allocation2 + $0x1e7] sm:$0xff]
      %v2582 = vld [vmem:[#allocation2 + $0x1ef] sm:$0xff]
      %2583 = vst.msk [vmem:[#allocation3] sm:$0xff] %vm281, %v2551
      %2584 = vst.msk [vmem:[#allocation3 + $0x28] sm:$0xff] %vm281, %v2552
      %2585 = vst.msk [vmem:[#allocation3 + $0x50] sm:$0xff] %vm281, %v2553
      %2586 = vst.msk [vmem:[#allocation3 + $0x78] sm:$0xff] %vm281, %v2554
      %2587 = vst.msk [vmem:[#allocation3 + $0xa0] sm:$0xff] %vm281, %v2555
      %2588 = vst.msk [vmem:[#allocation3 + $0xc8] sm:$0xff] %vm281, %v2556
      %2589 = vst.msk [vmem:[#allocation3 + $0xf0] sm:$0xff] %vm281, %v2557
      %2590 = vst.msk [vmem:[#allocation3 + $0x118] sm:$0xff] %vm281, %v2558
      %2591 = vst.msk [vmem:[#allocation3 + $0x140] sm:$0xff] %vm281, %v2559
      %2592 = vst.msk [vmem:[#allocation3 + $0x168] sm:$0xff] %vm281, %v2560
      %2593 = vst.msk [vmem:[#allocation3 + $0x190] sm:$0xff] %vm281, %v2561
      %2594 = vst.msk [vmem:[#allocation3 + $0x1b8] sm:$0xff] %vm281, %v2562
      %2595 = vst.msk [vmem:[#allocation3 + $0x1e0] sm:$0xff] %vm281, %v2563
      %2596 = vst.msk [vmem:[#allocation3 + $0x208] sm:$0xff] %vm281, %v2564
      %2597 = vst.msk [vmem:[#allocation3 + $0x230] sm:$0xff] %vm281, %v2565
      %2598 = vst.msk [vmem:[#allocation3 + $0x258] sm:$0xff] %vm281, %v2566
      %2599 = vst.msk [vmem:[#allocation3 + $0x280] sm:$0xff] %vm281, %v2567
      %2600 = vst.msk [vmem:[#allocation3 + $0x2a8] sm:$0xff] %vm281, %v2568
      %2601 = vst.msk [vmem:[#allocation3 + $0x2d0] sm:$0xff] %vm281, %v2569
      %2602 = vst.msk [vmem:[#allocation3 + $0x2f8] sm:$0xff] %vm281, %v2570
      %2603 = vst.msk [vmem:[#allocation3 + $0x320] sm:$0xff] %vm281, %v2571
      %2604 = vst.msk [vmem:[#allocation3 + $0x348] sm:$0xff] %vm281, %v2572
      %2605 = vst.msk [vmem:[#allocation3 + $0x370] sm:$0xff] %vm281, %v2573
      %2606 = vst.msk [vmem:[#allocation3 + $0x398] sm:$0xff] %vm281, %v2574
      %2607 = vst.msk [vmem:[#allocation3 + $0x3c0] sm:$0xff] %vm281, %v2575
      %2608 = vst.msk [vmem:[#allocation3 + $0x3e8] sm:$0xff] %vm281, %v2576
      %2609 = vst.msk [vmem:[#allocation3 + $0x410] sm:$0xff] %vm281, %v2577
      %2610 = vst.msk [vmem:[#allocation3 + $0x438] sm:$0xff] %vm281, %v2578
      %2611 = vst.msk [vmem:[#allocation3 + $0x460] sm:$0xff] %vm281, %v2579
      %2612 = vst.msk [vmem:[#allocation3 + $0x488] sm:$0xff] %vm281, %v2580
      %2613 = vst.msk [vmem:[#allocation3 + $0x4b0] sm:$0xff] %vm281, %v2581
      %2614 = vst.msk [vmem:[#allocation3 + $0x4d8] sm:$0xff] %vm281, %v2582
      %v2615 = vld [vmem:[#allocation2 + $0x8] sm:$0xff]
      %v2616 = vld [vmem:[#allocation2 + $0x10] sm:$0xff]
      %v2617 = vld [vmem:[#allocation2 + $0x28] sm:$0xff]
      %v2618 = vld [vmem:[#allocation2 + $0x30] sm:$0xff]
      %v2619 = vld [vmem:[#allocation2 + $0x48] sm:$0xff]
      %v2620 = vld [vmem:[#allocation2 + $0x50] sm:$0xff]
      %v2621 = vld [vmem:[#allocation2 + $0x68] sm:$0xff]
      %v2622 = vld [vmem:[#allocation2 + $0x70] sm:$0xff]
      %v2623 = vld [vmem:[#allocation2 + $0x88] sm:$0xff]
      %v2624 = vld [vmem:[#allocation2 + $0x90] sm:$0xff]
      %v2625 = vld [vmem:[#allocation2 + $0xa8] sm:$0xff]
      %v2626 = vld [vmem:[#allocation2 + $0xb0] sm:$0xff]
      %v2627 = vld [vmem:[#allocation2 + $0xc8] sm:$0xff]
      %v2628 = vld [vmem:[#allocation2 + $0xd0] sm:$0xff]
      %v2629 = vld [vmem:[#allocation2 + $0xe8] sm:$0xff]
      %v2630 = vld [vmem:[#allocation2 + $0xf0] sm:$0xff]
      %v2631 = vld [vmem:[#allocation2 + $0x108] sm:$0xff]
      %v2632 = vld [vmem:[#allocation2 + $0x110] sm:$0xff]
      %v2633 = vld [vmem:[#allocation2 + $0x128] sm:$0xff]
      %v2634 = vld [vmem:[#allocation2 + $0x130] sm:$0xff]
      %v2635 = vld [vmem:[#allocation2 + $0x148] sm:$0xff]
      %v2636 = vld [vmem:[#allocation2 + $0x150] sm:$0xff]
      %v2637 = vld [vmem:[#allocation2 + $0x168] sm:$0xff]
      %v2638 = vld [vmem:[#allocation2 + $0x170] sm:$0xff]
      %v2639 = vld [vmem:[#allocation2 + $0x188] sm:$0xff]
      %v2640 = vld [vmem:[#allocation2 + $0x190] sm:$0xff]
      %v2641 = vld [vmem:[#allocation2 + $0x1a8] sm:$0xff]
      %v2642 = vld [vmem:[#allocation2 + $0x1b0] sm:$0xff]
      %v2643 = vld [vmem:[#allocation2 + $0x1c8] sm:$0xff]
      %v2644 = vld [vmem:[#allocation2 + $0x1d0] sm:$0xff]
      %v2645 = vld [vmem:[#allocation2 + $0x1e8] sm:$0xff]
      %v2646 = vld [vmem:[#allocation2 + $0x1f0] sm:$0xff]
      %2679 = vrot.lane.b32.xlu0 %v2615, 64
      %v2680 = vpop.permute.xlu0 %2679
      %2681 = vrot.lane.b32.xlu0 %v2616, 64
      %v2682 = vpop.permute.xlu0 %2681
      %2683 = vrot.lane.b32.xlu0 %v2617, 64
      %v2684 = vpop.permute.xlu0 %2683
      %2685 = vrot.lane.b32.xlu0 %v2618, 64
      %v2686 = vpop.permute.xlu0 %2685
      %2687 = vrot.lane.b32.xlu0 %v2619, 64
      %v2688 = vpop.permute.xlu0 %2687
      %2689 = vrot.lane.b32.xlu0 %v2620, 64
      %v2690 = vpop.permute.xlu0 %2689
      %2691 = vrot.lane.b32.xlu0 %v2621, 64
      %v2692 = vpop.permute.xlu0 %2691
      %2693 = vrot.lane.b32.xlu0 %v2622, 64
      %v2694 = vpop.permute.xlu0 %2693
      %2695 = vrot.lane.b32.xlu0 %v2623, 64
      %v2696 = vpop.permute.xlu0 %2695
      %2697 = vrot.lane.b32.xlu0 %v2624, 64
      %v2698 = vpop.permute.xlu0 %2697
      %2699 = vrot.lane.b32.xlu0 %v2625, 64
      %v2700 = vpop.permute.xlu0 %2699
      %2701 = vrot.lane.b32.xlu0 %v2626, 64
      %v2702 = vpop.permute.xlu0 %2701
      %2703 = vrot.lane.b32.xlu0 %v2627, 64
      %v2704 = vpop.permute.xlu0 %2703
      %2705 = vrot.lane.b32.xlu0 %v2628, 64
      %v2706 = vpop.permute.xlu0 %2705
      %2707 = vrot.lane.b32.xlu0 %v2629, 64
      %v2708 = vpop.permute.xlu0 %2707
      %2709 = vrot.lane.b32.xlu0 %v2630, 64
      %v2710 = vpop.permute.xlu0 %2709
      %2711 = vrot.lane.b32.xlu0 %v2631, 64
      %v2712 = vpop.permute.xlu0 %2711
      %2713 = vrot.lane.b32.xlu0 %v2632, 64
      %v2714 = vpop.permute.xlu0 %2713
      %2715 = vrot.lane.b32.xlu0 %v2633, 64
      %v2716 = vpop.permute.xlu0 %2715
      %2717 = vrot.lane.b32.xlu0 %v2634, 64
      %v2718 = vpop.permute.xlu0 %2717
      %2719 = vrot.lane.b32.xlu0 %v2635, 64
      %v2720 = vpop.permute.xlu0 %2719
      %2721 = vrot.lane.b32.xlu0 %v2636, 64
      %v2722 = vpop.permute.xlu0 %2721
      %2723 = vrot.lane.b32.xlu0 %v2637, 64
      %v2724 = vpop.permute.xlu0 %2723
      %2725 = vrot.lane.b32.xlu0 %v2638, 64
      %v2726 = vpop.permute.xlu0 %2725
      %2727 = vrot.lane.b32.xlu0 %v2639, 64
      %v2728 = vpop.permute.xlu0 %2727
      %2729 = vrot.lane.b32.xlu0 %v2640, 64
      %v2730 = vpop.permute.xlu0 %2729
      %2731 = vrot.lane.b32.xlu0 %v2641, 64
      %v2732 = vpop.permute.xlu0 %2731
      %2733 = vrot.lane.b32.xlu0 %v2642, 64
      %v2734 = vpop.permute.xlu0 %2733
      %2735 = vrot.lane.b32.xlu0 %v2643, 64
      %v2736 = vpop.permute.xlu0 %2735
      %2737 = vrot.lane.b32.xlu0 %v2644, 64
      %v2738 = vpop.permute.xlu0 %2737
      %2739 = vrot.lane.b32.xlu0 %v2645, 64
      %v2740 = vpop.permute.xlu0 %2739
      %2741 = vrot.lane.b32.xlu0 %v2646, 64
      %v2742 = vpop.permute.xlu0 %2741
      %2775 = vst.msk [vmem:[#allocation3] sm:$0xff] %vm643, %v2680
      %2776 = vst.msk [vmem:[#allocation3 + $0x28] sm:$0xff] %vm643, %v2682
      %2777 = vst.msk [vmem:[#allocation3 + $0x50] sm:$0xff] %vm643, %v2684
      %2778 = vst.msk [vmem:[#allocation3 + $0x78] sm:$0xff] %vm643, %v2686
      %2779 = vst.msk [vmem:[#allocation3 + $0xa0] sm:$0xff] %vm643, %v2688
      %2780 = vst.msk [vmem:[#allocation3 + $0xc8] sm:$0xff] %vm643, %v2690
      %2781 = vst.msk [vmem:[#allocation3 + $0xf0] sm:$0xff] %vm643, %v2692
      %2782 = vst.msk [vmem:[#allocation3 + $0x118] sm:$0xff] %vm643, %v2694
      %2783 = vst.msk [vmem:[#allocation3 + $0x140] sm:$0xff] %vm643, %v2696
      %2784 = vst.msk [vmem:[#allocation3 + $0x168] sm:$0xff] %vm643, %v2698
      %2785 = vst.msk [vmem:[#allocation3 + $0x190] sm:$0xff] %vm643, %v2700
      %2786 = vst.msk [vmem:[#allocation3 + $0x1b8] sm:$0xff] %vm643, %v2702
      %2787 = vst.msk [vmem:[#allocation3 + $0x1e0] sm:$0xff] %vm643, %v2704
      %2788 = vst.msk [vmem:[#allocation3 + $0x208] sm:$0xff] %vm643, %v2706
      %2789 = vst.msk [vmem:[#allocation3 + $0x230] sm:$0xff] %vm643, %v2708
      %2790 = vst.msk [vmem:[#allocation3 + $0x258] sm:$0xff] %vm643, %v2710
      %2791 = vst.msk [vmem:[#allocation3 + $0x280] sm:$0xff] %vm643, %v2712
      %2792 = vst.msk [vmem:[#allocation3 + $0x2a8] sm:$0xff] %vm643, %v2714
      %2793 = vst.msk [vmem:[#allocation3 + $0x2d0] sm:$0xff] %vm643, %v2716
      %2794 = vst.msk [vmem:[#allocation3 + $0x2f8] sm:$0xff] %vm643, %v2718
      %2795 = vst.msk [vmem:[#allocation3 + $0x320] sm:$0xff] %vm643, %v2720
      %2796 = vst.msk [vmem:[#allocation3 + $0x348] sm:$0xff] %vm643, %v2722
      %2797 = vst.msk [vmem:[#allocation3 + $0x370] sm:$0xff] %vm643, %v2724
      %2798 = vst.msk [vmem:[#allocation3 + $0x398] sm:$0xff] %vm643, %v2726
      %2799 = vst.msk [vmem:[#allocation3 + $0x3c0] sm:$0xff] %vm643, %v2728
      %2800 = vst.msk [vmem:[#allocation3 + $0x3e8] sm:$0xff] %vm643, %v2730
      %2801 = vst.msk [vmem:[#allocation3 + $0x410] sm:$0xff] %vm643, %v2732
      %2802 = vst.msk [vmem:[#allocation3 + $0x438] sm:$0xff] %vm643, %v2734
      %2803 = vst.msk [vmem:[#allocation3 + $0x460] sm:$0xff] %vm643, %v2736
      %2804 = vst.msk [vmem:[#allocation3 + $0x488] sm:$0xff] %vm643, %v2738
      %2805 = vst.msk [vmem:[#allocation3 + $0x4b0] sm:$0xff] %vm643, %v2740
      %2806 = vst.msk [vmem:[#allocation3 + $0x4d8] sm:$0xff] %vm643, %v2742
      %v2807 = vld [vmem:[#allocation2 + $0x9] sm:$0xff]
      %v2808 = vld [vmem:[#allocation2 + $0x11] sm:$0xff]
      %v2809 = vld [vmem:[#allocation2 + $0x29] sm:$0xff]
      %v2810 = vld [vmem:[#allocation2 + $0x31] sm:$0xff]
      %v2811 = vld [vmem:[#allocation2 + $0x49] sm:$0xff]
      %v2812 = vld [vmem:[#allocation2 + $0x51] sm:$0xff]
      %v2813 = vld [vmem:[#allocation2 + $0x69] sm:$0xff]
      %v2814 = vld [vmem:[#allocation2 + $0x71] sm:$0xff]
      %v2815 = vld [vmem:[#allocation2 + $0x89] sm:$0xff]
      %v2816 = vld [vmem:[#allocation2 + $0x91] sm:$0xff]
      %v2817 = vld [vmem:[#allocation2 + $0xa9] sm:$0xff]
      %v2818 = vld [vmem:[#allocation2 + $0xb1] sm:$0xff]
      %v2819 = vld [vmem:[#allocation2 + $0xc9] sm:$0xff]
      %v2820 = vld [vmem:[#allocation2 + $0xd1] sm:$0xff]
      %v2821 = vld [vmem:[#allocation2 + $0xe9] sm:$0xff]
      %v2822 = vld [vmem:[#allocation2 + $0xf1] sm:$0xff]
      %v2823 = vld [vmem:[#allocation2 + $0x109] sm:$0xff]
      %v2824 = vld [vmem:[#allocation2 + $0x111] sm:$0xff]
      %v2825 = vld [vmem:[#allocation2 + $0x129] sm:$0xff]
      %v2826 = vld [vmem:[#allocation2 + $0x131] sm:$0xff]
      %v2827 = vld [vmem:[#allocation2 + $0x149] sm:$0xff]
      %v2828 = vld [vmem:[#allocation2 + $0x151] sm:$0xff]
      %v2829 = vld [vmem:[#allocation2 + $0x169] sm:$0xff]
      %v2830 = vld [vmem:[#allocation2 + $0x171] sm:$0xff]
      %v2831 = vld [vmem:[#allocation2 + $0x189] sm:$0xff]
      %v2832 = vld [vmem:[#allocation2 + $0x191] sm:$0xff]
      %v2833 = vld [vmem:[#allocation2 + $0x1a9] sm:$0xff]
      %v2834 = vld [vmem:[#allocation2 + $0x1b1] sm:$0xff]
      %v2835 = vld [vmem:[#allocation2 + $0x1c9] sm:$0xff]
      %v2836 = vld [vmem:[#allocation2 + $0x1d1] sm:$0xff]
      %v2837 = vld [vmem:[#allocation2 + $0x1e9] sm:$0xff]
      %v2838 = vld [vmem:[#allocation2 + $0x1f1] sm:$0xff]
      %2839 = vst.msk [vmem:[#allocation3 + $0x8] sm:$0xff] %vm281, %v2807
      %2840 = vst.msk [vmem:[#allocation3 + $0x30] sm:$0xff] %vm281, %v2808
      %2841 = vst.msk [vmem:[#allocation3 + $0x58] sm:$0xff] %vm281, %v2809
      %2842 = vst.msk [vmem:[#allocation3 + $0x80] sm:$0xff] %vm281, %v2810
      %2843 = vst.msk [vmem:[#allocation3 + $0xa8] sm:$0xff] %vm281, %v2811
      %2844 = vst.msk [vmem:[#allocation3 + $0xd0] sm:$0xff] %vm281, %v2812
      %2845 = vst.msk [vmem:[#allocation3 + $0xf8] sm:$0xff] %vm281, %v2813
      %2846 = vst.msk [vmem:[#allocation3 + $0x120] sm:$0xff] %vm281, %v2814
      %2847 = vst.msk [vmem:[#allocation3 + $0x148] sm:$0xff] %vm281, %v2815
      %2848 = vst.msk [vmem:[#allocation3 + $0x170] sm:$0xff] %vm281, %v2816
      %2849 = vst.msk [vmem:[#allocation3 + $0x198] sm:$0xff] %vm281, %v2817
      %2850 = vst.msk [vmem:[#allocation3 + $0x1c0] sm:$0xff] %vm281, %v2818
      %2851 = vst.msk [vmem:[#allocation3 + $0x1e8] sm:$0xff] %vm281, %v2819
      %2852 = vst.msk [vmem:[#allocation3 + $0x210] sm:$0xff] %vm281, %v2820
      %2853 = vst.msk [vmem:[#allocation3 + $0x238] sm:$0xff] %vm281, %v2821
      %2854 = vst.msk [vmem:[#allocation3 + $0x260] sm:$0xff] %vm281, %v2822
      %2855 = vst.msk [vmem:[#allocation3 + $0x288] sm:$0xff] %vm281, %v2823
      %2856 = vst.msk [vmem:[#allocation3 + $0x2b0] sm:$0xff] %vm281, %v2824
      %2857 = vst.msk [vmem:[#allocation3 + $0x2d8] sm:$0xff] %vm281, %v2825
      %2858 = vst.msk [vmem:[#allocation3 + $0x300] sm:$0xff] %vm281, %v2826
      %2859 = vst.msk [vmem:[#allocation3 + $0x328] sm:$0xff] %vm281, %v2827
      %2860 = vst.msk [vmem:[#allocation3 + $0x350] sm:$0xff] %vm281, %v2828
      %2861 = vst.msk [vmem:[#allocation3 + $0x378] sm:$0xff] %vm281, %v2829
      %2862 = vst.msk [vmem:[#allocation3 + $0x3a0] sm:$0xff] %vm281, %v2830
      %2863 = vst.msk [vmem:[#allocation3 + $0x3c8] sm:$0xff] %vm281, %v2831
      %2864 = vst.msk [vmem:[#allocation3 + $0x3f0] sm:$0xff] %vm281, %v2832
      %2865 = vst.msk [vmem:[#allocation3 + $0x418] sm:$0xff] %vm281, %v2833
      %2866 = vst.msk [vmem:[#allocation3 + $0x440] sm:$0xff] %vm281, %v2834
      %2867 = vst.msk [vmem:[#allocation3 + $0x468] sm:$0xff] %vm281, %v2835
      %2868 = vst.msk [vmem:[#allocation3 + $0x490] sm:$0xff] %vm281, %v2836
      %2869 = vst.msk [vmem:[#allocation3 + $0x4b8] sm:$0xff] %vm281, %v2837
      %2870 = vst.msk [vmem:[#allocation3 + $0x4e0] sm:$0xff] %vm281, %v2838
      %v2871 = vld [vmem:[%s386 + $0x7] sm:$0xff]
      %v2872 = vld [vmem:[%s386 + $0xf] sm:$0xff]
      %v2873 = vld [vmem:[%s386 + $0x27] sm:$0xff]
      %v2874 = vld [vmem:[%s386 + $0x2f] sm:$0xff]
      %v2875 = vld [vmem:[%s386 + $0x47] sm:$0xff]
      %v2876 = vld [vmem:[%s386 + $0x4f] sm:$0xff]
      %v2877 = vld [vmem:[%s386 + $0x67] sm:$0xff]
      %v2878 = vld [vmem:[%s386 + $0x6f] sm:$0xff]
      %v2879 = vld [vmem:[%s386 + $0x87] sm:$0xff]
      %v2880 = vld [vmem:[%s386 + $0x8f] sm:$0xff]
      %v2881 = vld [vmem:[%s386 + $0xa7] sm:$0xff]
      %v2882 = vld [vmem:[%s386 + $0xaf] sm:$0xff]
      %v2883 = vld [vmem:[%s386 + $0xc7] sm:$0xff]
      %v2884 = vld [vmem:[%s386 + $0xcf] sm:$0xff]
      %v2885 = vld [vmem:[%s386 + $0xe7] sm:$0xff]
      %v2886 = vld [vmem:[%s386 + $0xef] sm:$0xff]
      %v2887 = vld [vmem:[%s386 + $0x107] sm:$0xff]
      %v2888 = vld [vmem:[%s386 + $0x10f] sm:$0xff]
      %v2889 = vld [vmem:[%s386 + $0x127] sm:$0xff]
      %v2890 = vld [vmem:[%s386 + $0x12f] sm:$0xff]
      %v2891 = vld [vmem:[%s386 + $0x147] sm:$0xff]
      %v2892 = vld [vmem:[%s386 + $0x14f] sm:$0xff]
      %v2893 = vld [vmem:[%s386 + $0x167] sm:$0xff]
      %v2894 = vld [vmem:[%s386 + $0x16f] sm:$0xff]
      %v2895 = vld [vmem:[%s386 + $0x187] sm:$0xff]
      %v2896 = vld [vmem:[%s386 + $0x18f] sm:$0xff]
      %v2897 = vld [vmem:[%s386 + $0x1a7] sm:$0xff]
      %v2898 = vld [vmem:[%s386 + $0x1af] sm:$0xff]
      %v2899 = vld [vmem:[%s386 + $0x1c7] sm:$0xff]
      %v2900 = vld [vmem:[%s386 + $0x1cf] sm:$0xff]
      %v2901 = vld [vmem:[%s386 + $0x1e7] sm:$0xff]
      %v2902 = vld [vmem:[%s386 + $0x1ef] sm:$0xff]
      %2935 = vrot.lane.b32.xlu0 %v2871, 64
      %v2936 = vpop.permute.xlu0 %2935
      %2937 = vrot.lane.b32.xlu0 %v2872, 64
      %v2938 = vpop.permute.xlu0 %2937
      %2939 = vrot.lane.b32.xlu0 %v2873, 64
      %v2940 = vpop.permute.xlu0 %2939
      %2941 = vrot.lane.b32.xlu0 %v2874, 64
      %v2942 = vpop.permute.xlu0 %2941
      %2943 = vrot.lane.b32.xlu0 %v2875, 64
      %v2944 = vpop.permute.xlu0 %2943
      %2945 = vrot.lane.b32.xlu0 %v2876, 64
      %v2946 = vpop.permute.xlu0 %2945
      %2947 = vrot.lane.b32.xlu0 %v2877, 64
      %v2948 = vpop.permute.xlu0 %2947
      %2949 = vrot.lane.b32.xlu0 %v2878, 64
      %v2950 = vpop.permute.xlu0 %2949
      %2951 = vrot.lane.b32.xlu0 %v2879, 64
      %v2952 = vpop.permute.xlu0 %2951
      %2953 = vrot.lane.b32.xlu0 %v2880, 64
      %v2954 = vpop.permute.xlu0 %2953
      %2955 = vrot.lane.b32.xlu0 %v2881, 64
      %v2956 = vpop.permute.xlu0 %2955
      %2957 = vrot.lane.b32.xlu0 %v2882, 64
      %v2958 = vpop.permute.xlu0 %2957
      %2959 = vrot.lane.b32.xlu0 %v2883, 64
      %v2960 = vpop.permute.xlu0 %2959
      %2961 = vrot.lane.b32.xlu0 %v2884, 64
      %v2962 = vpop.permute.xlu0 %2961
      %2963 = vrot.lane.b32.xlu0 %v2885, 64
      %v2964 = vpop.permute.xlu0 %2963
      %2965 = vrot.lane.b32.xlu0 %v2886, 64
      %v2966 = vpop.permute.xlu0 %2965
      %2967 = vrot.lane.b32.xlu0 %v2887, 64
      %v2968 = vpop.permute.xlu0 %2967
      %2969 = vrot.lane.b32.xlu0 %v2888, 64
      %v2970 = vpop.permute.xlu0 %2969
      %2971 = vrot.lane.b32.xlu0 %v2889, 64
      %v2972 = vpop.permute.xlu0 %2971
      %2973 = vrot.lane.b32.xlu0 %v2890, 64
      %v2974 = vpop.permute.xlu0 %2973
      %2975 = vrot.lane.b32.xlu0 %v2891, 64
      %v2976 = vpop.permute.xlu0 %2975
      %2977 = vrot.lane.b32.xlu0 %v2892, 64
      %v2978 = vpop.permute.xlu0 %2977
      %2979 = vrot.lane.b32.xlu0 %v2893, 64
      %v2980 = vpop.permute.xlu0 %2979
      %2981 = vrot.lane.b32.xlu0 %v2894, 64
      %v2982 = vpop.permute.xlu0 %2981
      %2983 = vrot.lane.b32.xlu0 %v2895, 64
      %v2984 = vpop.permute.xlu0 %2983
      %2985 = vrot.lane.b32.xlu0 %v2896, 64
      %v2986 = vpop.permute.xlu0 %2985
      %2987 = vrot.lane.b32.xlu0 %v2897, 64
      %v2988 = vpop.permute.xlu0 %2987
      %2989 = vrot.lane.b32.xlu0 %v2898, 64
      %v2990 = vpop.permute.xlu0 %2989
      %2991 = vrot.lane.b32.xlu0 %v2899, 64
      %v2992 = vpop.permute.xlu0 %2991
      %2993 = vrot.lane.b32.xlu0 %v2900, 64
      %v2994 = vpop.permute.xlu0 %2993
      %2995 = vrot.lane.b32.xlu0 %v2901, 64
      %v2996 = vpop.permute.xlu0 %2995
      %2997 = vrot.lane.b32.xlu0 %v2902, 64
      %v2998 = vpop.permute.xlu0 %2997
      %3031 = vst.msk [vmem:[#allocation3 + $0x8] sm:$0xff] %vm643, %v2936
      %3032 = vst.msk [vmem:[#allocation3 + $0x30] sm:$0xff] %vm643, %v2938
      %3033 = vst.msk [vmem:[#allocation3 + $0x58] sm:$0xff] %vm643, %v2940
      %3034 = vst.msk [vmem:[#allocation3 + $0x80] sm:$0xff] %vm643, %v2942
      %3035 = vst.msk [vmem:[#allocation3 + $0xa8] sm:$0xff] %vm643, %v2944
      %3036 = vst.msk [vmem:[#allocation3 + $0xd0] sm:$0xff] %vm643, %v2946
      %3037 = vst.msk [vmem:[#allocation3 + $0xf8] sm:$0xff] %vm643, %v2948
      %3038 = vst.msk [vmem:[#allocation3 + $0x120] sm:$0xff] %vm643, %v2950
      %3039 = vst.msk [vmem:[#allocation3 + $0x148] sm:$0xff] %vm643, %v2952
      %3040 = vst.msk [vmem:[#allocation3 + $0x170] sm:$0xff] %vm643, %v2954
      %3041 = vst.msk [vmem:[#allocation3 + $0x198] sm:$0xff] %vm643, %v2956
      %3042 = vst.msk [vmem:[#allocation3 + $0x1c0] sm:$0xff] %vm643, %v2958
      %3043 = vst.msk [vmem:[#allocation3 + $0x1e8] sm:$0xff] %vm643, %v2960
      %3044 = vst.msk [vmem:[#allocation3 + $0x210] sm:$0xff] %vm643, %v2962
      %3045 = vst.msk [vmem:[#allocation3 + $0x238] sm:$0xff] %vm643, %v2964
      %3046 = vst.msk [vmem:[#allocation3 + $0x260] sm:$0xff] %vm643, %v2966
      %3047 = vst.msk [vmem:[#allocation3 + $0x288] sm:$0xff] %vm643, %v2968
      %3048 = vst.msk [vmem:[#allocation3 + $0x2b0] sm:$0xff] %vm643, %v2970
      %3049 = vst.msk [vmem:[#allocation3 + $0x2d8] sm:$0xff] %vm643, %v2972
      %3050 = vst.msk [vmem:[#allocation3 + $0x300] sm:$0xff] %vm643, %v2974
      %3051 = vst.msk [vmem:[#allocation3 + $0x328] sm:$0xff] %vm643, %v2976
      %3052 = vst.msk [vmem:[#allocation3 + $0x350] sm:$0xff] %vm643, %v2978
      %3053 = vst.msk [vmem:[#allocation3 + $0x378] sm:$0xff] %vm643, %v2980
      %3054 = vst.msk [vmem:[#allocation3 + $0x3a0] sm:$0xff] %vm643, %v2982
      %3055 = vst.msk [vmem:[#allocation3 + $0x3c8] sm:$0xff] %vm643, %v2984
      %3056 = vst.msk [vmem:[#allocation3 + $0x3f0] sm:$0xff] %vm643, %v2986
      %3057 = vst.msk [vmem:[#allocation3 + $0x418] sm:$0xff] %vm643, %v2988
      %3058 = vst.msk [vmem:[#allocation3 + $0x440] sm:$0xff] %vm643, %v2990
      %3059 = vst.msk [vmem:[#allocation3 + $0x468] sm:$0xff] %vm643, %v2992
      %3060 = vst.msk [vmem:[#allocation3 + $0x490] sm:$0xff] %vm643, %v2994
      %3061 = vst.msk [vmem:[#allocation3 + $0x4b8] sm:$0xff] %vm643, %v2996
      %3062 = vst.msk [vmem:[#allocation3 + $0x4e0] sm:$0xff] %vm643, %v2998
      %v3063 = vld [vmem:[%s386 + $0x8] sm:$0xff]
      %v3064 = vld [vmem:[%s386 + $0x10] sm:$0xff]
      %v3065 = vld [vmem:[%s386 + $0x28] sm:$0xff]
      %v3066 = vld [vmem:[%s386 + $0x30] sm:$0xff]
      %v3067 = vld [vmem:[%s386 + $0x48] sm:$0xff]
      %v3068 = vld [vmem:[%s386 + $0x50] sm:$0xff]
      %v3069 = vld [vmem:[%s386 + $0x68] sm:$0xff]
      %v3070 = vld [vmem:[%s386 + $0x70] sm:$0xff]
      %v3071 = vld [vmem:[%s386 + $0x88] sm:$0xff]
      %v3072 = vld [vmem:[%s386 + $0x90] sm:$0xff]
      %v3073 = vld [vmem:[%s386 + $0xa8] sm:$0xff]
      %v3074 = vld [vmem:[%s386 + $0xb0] sm:$0xff]
      %v3075 = vld [vmem:[%s386 + $0xc8] sm:$0xff]
      %v3076 = vld [vmem:[%s386 + $0xd0] sm:$0xff]
      %v3077 = vld [vmem:[%s386 + $0xe8] sm:$0xff]
      %v3078 = vld [vmem:[%s386 + $0xf0] sm:$0xff]
      %v3079 = vld [vmem:[%s386 + $0x108] sm:$0xff]
      %v3080 = vld [vmem:[%s386 + $0x110] sm:$0xff]
      %v3081 = vld [vmem:[%s386 + $0x128] sm:$0xff]
      %v3082 = vld [vmem:[%s386 + $0x130] sm:$0xff]
      %v3083 = vld [vmem:[%s386 + $0x148] sm:$0xff]
      %v3084 = vld [vmem:[%s386 + $0x150] sm:$0xff]
      %v3085 = vld [vmem:[%s386 + $0x168] sm:$0xff]
      %v3086 = vld [vmem:[%s386 + $0x170] sm:$0xff]
      %v3087 = vld [vmem:[%s386 + $0x188] sm:$0xff]
      %v3088 = vld [vmem:[%s386 + $0x190] sm:$0xff]
      %v3089 = vld [vmem:[%s386 + $0x1a8] sm:$0xff]
      %v3090 = vld [vmem:[%s386 + $0x1b0] sm:$0xff]
      %v3091 = vld [vmem:[%s386 + $0x1c8] sm:$0xff]
      %v3092 = vld [vmem:[%s386 + $0x1d0] sm:$0xff]
      %v3093 = vld [vmem:[%s386 + $0x1e8] sm:$0xff]
      %v3094 = vld [vmem:[%s386 + $0x1f0] sm:$0xff]
      %3095 = vst.msk [vmem:[#allocation3 + $0x10] sm:$0xff] %vm281, %v3063
      %3096 = vst.msk [vmem:[#allocation3 + $0x38] sm:$0xff] %vm281, %v3064
      %3097 = vst.msk [vmem:[#allocation3 + $0x60] sm:$0xff] %vm281, %v3065
      %3098 = vst.msk [vmem:[#allocation3 + $0x88] sm:$0xff] %vm281, %v3066
      %3099 = vst.msk [vmem:[#allocation3 + $0xb0] sm:$0xff] %vm281, %v3067
      %3100 = vst.msk [vmem:[#allocation3 + $0xd8] sm:$0xff] %vm281, %v3068
      %3101 = vst.msk [vmem:[#allocation3 + $0x100] sm:$0xff] %vm281, %v3069
      %3102 = vst.msk [vmem:[#allocation3 + $0x128] sm:$0xff] %vm281, %v3070
      %3103 = vst.msk [vmem:[#allocation3 + $0x150] sm:$0xff] %vm281, %v3071
      %3104 = vst.msk [vmem:[#allocation3 + $0x178] sm:$0xff] %vm281, %v3072
      %3105 = vst.msk [vmem:[#allocation3 + $0x1a0] sm:$0xff] %vm281, %v3073
      %3106 = vst.msk [vmem:[#allocation3 + $0x1c8] sm:$0xff] %vm281, %v3074
      %3107 = vst.msk [vmem:[#allocation3 + $0x1f0] sm:$0xff] %vm281, %v3075
      %3108 = vst.msk [vmem:[#allocation3 + $0x218] sm:$0xff] %vm281, %v3076
      %3109 = vst.msk [vmem:[#allocation3 + $0x240] sm:$0xff] %vm281, %v3077
      %3110 = vst.msk [vmem:[#allocation3 + $0x268] sm:$0xff] %vm281, %v3078
      %3111 = vst.msk [vmem:[#allocation3 + $0x290] sm:$0xff] %vm281, %v3079
      %3112 = vst.msk [vmem:[#allocation3 + $0x2b8] sm:$0xff] %vm281, %v3080
      %3113 = vst.msk [vmem:[#allocation3 + $0x2e0] sm:$0xff] %vm281, %v3081
      %3114 = vst.msk [vmem:[#allocation3 + $0x308] sm:$0xff] %vm281, %v3082
      %3115 = vst.msk [vmem:[#allocation3 + $0x330] sm:$0xff] %vm281, %v3083
      %3116 = vst.msk [vmem:[#allocation3 + $0x358] sm:$0xff] %vm281, %v3084
      %3117 = vst.msk [vmem:[#allocation3 + $0x380] sm:$0xff] %vm281, %v3085
      %3118 = vst.msk [vmem:[#allocation3 + $0x3a8] sm:$0xff] %vm281, %v3086
      %3119 = vst.msk [vmem:[#allocation3 + $0x3d0] sm:$0xff] %vm281, %v3087
      %3120 = vst.msk [vmem:[#allocation3 + $0x3f8] sm:$0xff] %vm281, %v3088
      %3121 = vst.msk [vmem:[#allocation3 + $0x420] sm:$0xff] %vm281, %v3089
      %3122 = vst.msk [vmem:[#allocation3 + $0x448] sm:$0xff] %vm281, %v3090
      %3123 = vst.msk [vmem:[#allocation3 + $0x470] sm:$0xff] %vm281, %v3091
      %3124 = vst.msk [vmem:[#allocation3 + $0x498] sm:$0xff] %vm281, %v3092
      %3125 = vst.msk [vmem:[#allocation3 + $0x4c0] sm:$0xff] %vm281, %v3093
      %3126 = vst.msk [vmem:[#allocation3 + $0x4e8] sm:$0xff] %vm281, %v3094
      %v3127 = vld [vmem:[%s386 + $0x9] sm:$0xff]
      %v3128 = vld [vmem:[%s386 + $0x11] sm:$0xff]
      %v3129 = vld [vmem:[%s386 + $0x29] sm:$0xff]
      %v3130 = vld [vmem:[%s386 + $0x31] sm:$0xff]
      %v3131 = vld [vmem:[%s386 + $0x49] sm:$0xff]
      %v3132 = vld [vmem:[%s386 + $0x51] sm:$0xff]
      %v3133 = vld [vmem:[%s386 + $0x69] sm:$0xff]
      %v3134 = vld [vmem:[%s386 + $0x71] sm:$0xff]
      %v3135 = vld [vmem:[%s386 + $0x89] sm:$0xff]
      %v3136 = vld [vmem:[%s386 + $0x91] sm:$0xff]
      %v3137 = vld [vmem:[%s386 + $0xa9] sm:$0xff]
      %v3138 = vld [vmem:[%s386 + $0xb1] sm:$0xff]
      %v3139 = vld [vmem:[%s386 + $0xc9] sm:$0xff]
      %v3140 = vld [vmem:[%s386 + $0xd1] sm:$0xff]
      %v3141 = vld [vmem:[%s386 + $0xe9] sm:$0xff]
      %v3142 = vld [vmem:[%s386 + $0xf1] sm:$0xff]
      %v3143 = vld [vmem:[%s386 + $0x109] sm:$0xff]
      %v3144 = vld [vmem:[%s386 + $0x111] sm:$0xff]
      %v3145 = vld [vmem:[%s386 + $0x129] sm:$0xff]
      %v3146 = vld [vmem:[%s386 + $0x131] sm:$0xff]
      %v3147 = vld [vmem:[%s386 + $0x149] sm:$0xff]
      %v3148 = vld [vmem:[%s386 + $0x151] sm:$0xff]
      %v3149 = vld [vmem:[%s386 + $0x169] sm:$0xff]
      %v3150 = vld [vmem:[%s386 + $0x171] sm:$0xff]
      %v3151 = vld [vmem:[%s386 + $0x189] sm:$0xff]
      %v3152 = vld [vmem:[%s386 + $0x191] sm:$0xff]
      %v3153 = vld [vmem:[%s386 + $0x1a9] sm:$0xff]
      %v3154 = vld [vmem:[%s386 + $0x1b1] sm:$0xff]
      %v3155 = vld [vmem:[%s386 + $0x1c9] sm:$0xff]
      %v3156 = vld [vmem:[%s386 + $0x1d1] sm:$0xff]
      %v3157 = vld [vmem:[%s386 + $0x1e9] sm:$0xff]
      %v3158 = vld [vmem:[%s386 + $0x1f1] sm:$0xff]
      %3191 = vrot.lane.b32.xlu0 %v3127, 64
      %v3192 = vpop.permute.xlu0 %3191
      %3193 = vrot.lane.b32.xlu0 %v3128, 64
      %v3194 = vpop.permute.xlu0 %3193
      %3195 = vrot.lane.b32.xlu0 %v3129, 64
      %v3196 = vpop.permute.xlu0 %3195
      %3197 = vrot.lane.b32.xlu0 %v3130, 64
      %v3198 = vpop.permute.xlu0 %3197
      %3199 = vrot.lane.b32.xlu0 %v3131, 64
      %v3200 = vpop.permute.xlu0 %3199
      %3201 = vrot.lane.b32.xlu0 %v3132, 64
      %v3202 = vpop.permute.xlu0 %3201
      %3203 = vrot.lane.b32.xlu0 %v3133, 64
      %v3204 = vpop.permute.xlu0 %3203
      %3205 = vrot.lane.b32.xlu0 %v3134, 64
      %v3206 = vpop.permute.xlu0 %3205
      %3207 = vrot.lane.b32.xlu0 %v3135, 64
      %v3208 = vpop.permute.xlu0 %3207
      %3209 = vrot.lane.b32.xlu0 %v3136, 64
      %v3210 = vpop.permute.xlu0 %3209
      %3211 = vrot.lane.b32.xlu0 %v3137, 64
      %v3212 = vpop.permute.xlu0 %3211
      %3213 = vrot.lane.b32.xlu0 %v3138, 64
      %v3214 = vpop.permute.xlu0 %3213
      %3215 = vrot.lane.b32.xlu0 %v3139, 64
      %v3216 = vpop.permute.xlu0 %3215
      %3217 = vrot.lane.b32.xlu0 %v3140, 64
      %v3218 = vpop.permute.xlu0 %3217
      %3219 = vrot.lane.b32.xlu0 %v3141, 64
      %v3220 = vpop.permute.xlu0 %3219
      %3221 = vrot.lane.b32.xlu0 %v3142, 64
      %v3222 = vpop.permute.xlu0 %3221
      %3223 = vrot.lane.b32.xlu0 %v3143, 64
      %v3224 = vpop.permute.xlu0 %3223
      %3225 = vrot.lane.b32.xlu0 %v3144, 64
      %v3226 = vpop.permute.xlu0 %3225
      %3227 = vrot.lane.b32.xlu0 %v3145, 64
      %v3228 = vpop.permute.xlu0 %3227
      %3229 = vrot.lane.b32.xlu0 %v3146, 64
      %v3230 = vpop.permute.xlu0 %3229
      %3231 = vrot.lane.b32.xlu0 %v3147, 64
      %v3232 = vpop.permute.xlu0 %3231
      %3233 = vrot.lane.b32.xlu0 %v3148, 64
      %v3234 = vpop.permute.xlu0 %3233
      %3235 = vrot.lane.b32.xlu0 %v3149, 64
      %v3236 = vpop.permute.xlu0 %3235
      %3237 = vrot.lane.b32.xlu0 %v3150, 64
      %v3238 = vpop.permute.xlu0 %3237
      %3239 = vrot.lane.b32.xlu0 %v3151, 64
      %v3240 = vpop.permute.xlu0 %3239
      %3241 = vrot.lane.b32.xlu0 %v3152, 64
      %v3242 = vpop.permute.xlu0 %3241
      %3243 = vrot.lane.b32.xlu0 %v3153, 64
      %v3244 = vpop.permute.xlu0 %3243
      %3245 = vrot.lane.b32.xlu0 %v3154, 64
      %v3246 = vpop.permute.xlu0 %3245
      %3247 = vrot.lane.b32.xlu0 %v3155, 64
      %v3248 = vpop.permute.xlu0 %3247
      %3249 = vrot.lane.b32.xlu0 %v3156, 64
      %v3250 = vpop.permute.xlu0 %3249
      %3251 = vrot.lane.b32.xlu0 %v3157, 64
      %v3252 = vpop.permute.xlu0 %3251
      %3253 = vrot.lane.b32.xlu0 %v3158, 64
      %v3254 = vpop.permute.xlu0 %3253
      %3287 = vst.msk [vmem:[#allocation3 + $0x10] sm:$0xff] %vm643, %v3192
      %3288 = vst.msk [vmem:[#allocation3 + $0x38] sm:$0xff] %vm643, %v3194
      %3289 = vst.msk [vmem:[#allocation3 + $0x60] sm:$0xff] %vm643, %v3196
      %3290 = vst.msk [vmem:[#allocation3 + $0x88] sm:$0xff] %vm643, %v3198
      %3291 = vst.msk [vmem:[#allocation3 + $0xb0] sm:$0xff] %vm643, %v3200
      %3292 = vst.msk [vmem:[#allocation3 + $0xd8] sm:$0xff] %vm643, %v3202
      %3293 = vst.msk [vmem:[#allocation3 + $0x100] sm:$0xff] %vm643, %v3204
      %3294 = vst.msk [vmem:[#allocation3 + $0x128] sm:$0xff] %vm643, %v3206
      %3295 = vst.msk [vmem:[#allocation3 + $0x150] sm:$0xff] %vm643, %v3208
      %3296 = vst.msk [vmem:[#allocation3 + $0x178] sm:$0xff] %vm643, %v3210
      %3297 = vst.msk [vmem:[#allocation3 + $0x1a0] sm:$0xff] %vm643, %v3212
      %3298 = vst.msk [vmem:[#allocation3 + $0x1c8] sm:$0xff] %vm643, %v3214
      %3299 = vst.msk [vmem:[#allocation3 + $0x1f0] sm:$0xff] %vm643, %v3216
      %3300 = vst.msk [vmem:[#allocation3 + $0x218] sm:$0xff] %vm643, %v3218
      %3301 = vst.msk [vmem:[#allocation3 + $0x240] sm:$0xff] %vm643, %v3220
      %3302 = vst.msk [vmem:[#allocation3 + $0x268] sm:$0xff] %vm643, %v3222
      %3303 = vst.msk [vmem:[#allocation3 + $0x290] sm:$0xff] %vm643, %v3224
      %3304 = vst.msk [vmem:[#allocation3 + $0x2b8] sm:$0xff] %vm643, %v3226
      %3305 = vst.msk [vmem:[#allocation3 + $0x2e0] sm:$0xff] %vm643, %v3228
      %3306 = vst.msk [vmem:[#allocation3 + $0x308] sm:$0xff] %vm643, %v3230
      %3307 = vst.msk [vmem:[#allocation3 + $0x330] sm:$0xff] %vm643, %v3232
      %3308 = vst.msk [vmem:[#allocation3 + $0x358] sm:$0xff] %vm643, %v3234
      %3309 = vst.msk [vmem:[#allocation3 + $0x380] sm:$0xff] %vm643, %v3236
      %3310 = vst.msk [vmem:[#allocation3 + $0x3a8] sm:$0xff] %vm643, %v3238
      %3311 = vst.msk [vmem:[#allocation3 + $0x3d0] sm:$0xff] %vm643, %v3240
      %3312 = vst.msk [vmem:[#allocation3 + $0x3f8] sm:$0xff] %vm643, %v3242
      %3313 = vst.msk [vmem:[#allocation3 + $0x420] sm:$0xff] %vm643, %v3244
      %3314 = vst.msk [vmem:[#allocation3 + $0x448] sm:$0xff] %vm643, %v3246
      %3315 = vst.msk [vmem:[#allocation3 + $0x470] sm:$0xff] %vm643, %v3248
      %3316 = vst.msk [vmem:[#allocation3 + $0x498] sm:$0xff] %vm643, %v3250
      %3317 = vst.msk [vmem:[#allocation3 + $0x4c0] sm:$0xff] %vm643, %v3252
      %3318 = vst.msk [vmem:[#allocation3 + $0x4e8] sm:$0xff] %vm643, %v3254
      %v3319 = vld [vmem:[%s1188 + $0x7] sm:$0xff]
      %v3320 = vld [vmem:[%s1188 + $0xf] sm:$0xff]
      %v3321 = vld [vmem:[%s1188 + $0x27] sm:$0xff]
      %v3322 = vld [vmem:[%s1188 + $0x2f] sm:$0xff]
      %v3323 = vld [vmem:[%s1188 + $0x47] sm:$0xff]
      %v3324 = vld [vmem:[%s1188 + $0x4f] sm:$0xff]
      %v3325 = vld [vmem:[%s1188 + $0x67] sm:$0xff]
      %v3326 = vld [vmem:[%s1188 + $0x6f] sm:$0xff]
      %v3327 = vld [vmem:[%s1188 + $0x87] sm:$0xff]
      %v3328 = vld [vmem:[%s1188 + $0x8f] sm:$0xff]
      %v3329 = vld [vmem:[%s1188 + $0xa7] sm:$0xff]
      %v3330 = vld [vmem:[%s1188 + $0xaf] sm:$0xff]
      %v3331 = vld [vmem:[%s1188 + $0xc7] sm:$0xff]
      %v3332 = vld [vmem:[%s1188 + $0xcf] sm:$0xff]
      %v3333 = vld [vmem:[%s1188 + $0xe7] sm:$0xff]
      %v3334 = vld [vmem:[%s1188 + $0xef] sm:$0xff]
      %v3335 = vld [vmem:[%s1188 + $0x107] sm:$0xff]
      %v3336 = vld [vmem:[%s1188 + $0x10f] sm:$0xff]
      %v3337 = vld [vmem:[%s1188 + $0x127] sm:$0xff]
      %v3338 = vld [vmem:[%s1188 + $0x12f] sm:$0xff]
      %v3339 = vld [vmem:[%s1188 + $0x147] sm:$0xff]
      %v3340 = vld [vmem:[%s1188 + $0x14f] sm:$0xff]
      %v3341 = vld [vmem:[%s1188 + $0x167] sm:$0xff]
      %v3342 = vld [vmem:[%s1188 + $0x16f] sm:$0xff]
      %v3343 = vld [vmem:[%s1188 + $0x187] sm:$0xff]
      %v3344 = vld [vmem:[%s1188 + $0x18f] sm:$0xff]
      %v3345 = vld [vmem:[%s1188 + $0x1a7] sm:$0xff]
      %v3346 = vld [vmem:[%s1188 + $0x1af] sm:$0xff]
      %v3347 = vld [vmem:[%s1188 + $0x1c7] sm:$0xff]
      %v3348 = vld [vmem:[%s1188 + $0x1cf] sm:$0xff]
      %v3349 = vld [vmem:[%s1188 + $0x1e7] sm:$0xff]
      %v3350 = vld [vmem:[%s1188 + $0x1ef] sm:$0xff]
      %3351 = vst.msk [vmem:[#allocation3 + $0x18] sm:$0xff] %vm281, %v3319
      %3352 = vst.msk [vmem:[#allocation3 + $0x40] sm:$0xff] %vm281, %v3320
      %3353 = vst.msk [vmem:[#allocation3 + $0x68] sm:$0xff] %vm281, %v3321
      %3354 = vst.msk [vmem:[#allocation3 + $0x90] sm:$0xff] %vm281, %v3322
      %3355 = vst.msk [vmem:[#allocation3 + $0xb8] sm:$0xff] %vm281, %v3323
      %3356 = vst.msk [vmem:[#allocation3 + $0xe0] sm:$0xff] %vm281, %v3324
      %3357 = vst.msk [vmem:[#allocation3 + $0x108] sm:$0xff] %vm281, %v3325
      %3358 = vst.msk [vmem:[#allocation3 + $0x130] sm:$0xff] %vm281, %v3326
      %3359 = vst.msk [vmem:[#allocation3 + $0x158] sm:$0xff] %vm281, %v3327
      %3360 = vst.msk [vmem:[#allocation3 + $0x180] sm:$0xff] %vm281, %v3328
      %3361 = vst.msk [vmem:[#allocation3 + $0x1a8] sm:$0xff] %vm281, %v3329
      %3362 = vst.msk [vmem:[#allocation3 + $0x1d0] sm:$0xff] %vm281, %v3330
      %3363 = vst.msk [vmem:[#allocation3 + $0x1f8] sm:$0xff] %vm281, %v3331
      %3364 = vst.msk [vmem:[#allocation3 + $0x220] sm:$0xff] %vm281, %v3332
      %3365 = vst.msk [vmem:[#allocation3 + $0x248] sm:$0xff] %vm281, %v3333
      %3366 = vst.msk [vmem:[#allocation3 + $0x270] sm:$0xff] %vm281, %v3334
      %3367 = vst.msk [vmem:[#allocation3 + $0x298] sm:$0xff] %vm281, %v3335
      %3368 = vst.msk [vmem:[#allocation3 + $0x2c0] sm:$0xff] %vm281, %v3336
      %3369 = vst.msk [vmem:[#allocation3 + $0x2e8] sm:$0xff] %vm281, %v3337
      %3370 = vst.msk [vmem:[#allocation3 + $0x310] sm:$0xff] %vm281, %v3338
      %3371 = vst.msk [vmem:[#allocation3 + $0x338] sm:$0xff] %vm281, %v3339
      %3372 = vst.msk [vmem:[#allocation3 + $0x360] sm:$0xff] %vm281, %v3340
      %3373 = vst.msk [vmem:[#allocation3 + $0x388] sm:$0xff] %vm281, %v3341
      %3374 = vst.msk [vmem:[#allocation3 + $0x3b0] sm:$0xff] %vm281, %v3342
      %3375 = vst.msk [vmem:[#allocation3 + $0x3d8] sm:$0xff] %vm281, %v3343
      %3376 = vst.msk [vmem:[#allocation3 + $0x400] sm:$0xff] %vm281, %v3344
      %3377 = vst.msk [vmem:[#allocation3 + $0x428] sm:$0xff] %vm281, %v3345
      %3378 = vst.msk [vmem:[#allocation3 + $0x450] sm:$0xff] %vm281, %v3346
      %3379 = vst.msk [vmem:[#allocation3 + $0x478] sm:$0xff] %vm281, %v3347
      %3380 = vst.msk [vmem:[#allocation3 + $0x4a0] sm:$0xff] %vm281, %v3348
      %3381 = vst.msk [vmem:[#allocation3 + $0x4c8] sm:$0xff] %vm281, %v3349
      %3382 = vst.msk [vmem:[#allocation3 + $0x4f0] sm:$0xff] %vm281, %v3350
      %v3383 = vld [vmem:[%s1188 + $0x8] sm:$0xff]
      %v3384 = vld [vmem:[%s1188 + $0x10] sm:$0xff]
      %v3385 = vld [vmem:[%s1188 + $0x28] sm:$0xff]
      %v3386 = vld [vmem:[%s1188 + $0x30] sm:$0xff]
      %v3387 = vld [vmem:[%s1188 + $0x48] sm:$0xff]
      %v3388 = vld [vmem:[%s1188 + $0x50] sm:$0xff]
      %v3389 = vld [vmem:[%s1188 + $0x68] sm:$0xff]
      %v3390 = vld [vmem:[%s1188 + $0x70] sm:$0xff]
      %v3391 = vld [vmem:[%s1188 + $0x88] sm:$0xff]
      %v3392 = vld [vmem:[%s1188 + $0x90] sm:$0xff]
      %v3393 = vld [vmem:[%s1188 + $0xa8] sm:$0xff]
      %v3394 = vld [vmem:[%s1188 + $0xb0] sm:$0xff]
      %v3395 = vld [vmem:[%s1188 + $0xc8] sm:$0xff]
      %v3396 = vld [vmem:[%s1188 + $0xd0] sm:$0xff]
      %v3397 = vld [vmem:[%s1188 + $0xe8] sm:$0xff]
      %v3398 = vld [vmem:[%s1188 + $0xf0] sm:$0xff]
      %v3399 = vld [vmem:[%s1188 + $0x108] sm:$0xff]
      %v3400 = vld [vmem:[%s1188 + $0x110] sm:$0xff]
      %v3401 = vld [vmem:[%s1188 + $0x128] sm:$0xff]
      %v3402 = vld [vmem:[%s1188 + $0x130] sm:$0xff]
      %v3403 = vld [vmem:[%s1188 + $0x148] sm:$0xff]
      %v3404 = vld [vmem:[%s1188 + $0x150] sm:$0xff]
      %v3405 = vld [vmem:[%s1188 + $0x168] sm:$0xff]
      %v3406 = vld [vmem:[%s1188 + $0x170] sm:$0xff]
      %v3407 = vld [vmem:[%s1188 + $0x188] sm:$0xff]
      %v3408 = vld [vmem:[%s1188 + $0x190] sm:$0xff]
      %v3409 = vld [vmem:[%s1188 + $0x1a8] sm:$0xff]
      %v3410 = vld [vmem:[%s1188 + $0x1b0] sm:$0xff]
      %v3411 = vld [vmem:[%s1188 + $0x1c8] sm:$0xff]
      %v3412 = vld [vmem:[%s1188 + $0x1d0] sm:$0xff]
      %v3413 = vld [vmem:[%s1188 + $0x1e8] sm:$0xff]
      %v3414 = vld [vmem:[%s1188 + $0x1f0] sm:$0xff]
      %3447 = vrot.lane.b32.xlu0 %v3383, 64
      %v3448 = vpop.permute.xlu0 %3447
      %3449 = vrot.lane.b32.xlu0 %v3384, 64
      %v3450 = vpop.permute.xlu0 %3449
      %3451 = vrot.lane.b32.xlu0 %v3385, 64
      %v3452 = vpop.permute.xlu0 %3451
      %3453 = vrot.lane.b32.xlu0 %v3386, 64
      %v3454 = vpop.permute.xlu0 %3453
      %3455 = vrot.lane.b32.xlu0 %v3387, 64
      %v3456 = vpop.permute.xlu0 %3455
      %3457 = vrot.lane.b32.xlu0 %v3388, 64
      %v3458 = vpop.permute.xlu0 %3457
      %3459 = vrot.lane.b32.xlu0 %v3389, 64
      %v3460 = vpop.permute.xlu0 %3459
      %3461 = vrot.lane.b32.xlu0 %v3390, 64
      %v3462 = vpop.permute.xlu0 %3461
      %3463 = vrot.lane.b32.xlu0 %v3391, 64
      %v3464 = vpop.permute.xlu0 %3463
      %3465 = vrot.lane.b32.xlu0 %v3392, 64
      %v3466 = vpop.permute.xlu0 %3465
      %3467 = vrot.lane.b32.xlu0 %v3393, 64
      %v3468 = vpop.permute.xlu0 %3467
      %3469 = vrot.lane.b32.xlu0 %v3394, 64
      %v3470 = vpop.permute.xlu0 %3469
      %3471 = vrot.lane.b32.xlu0 %v3395, 64
      %v3472 = vpop.permute.xlu0 %3471
      %3473 = vrot.lane.b32.xlu0 %v3396, 64
      %v3474 = vpop.permute.xlu0 %3473
      %3475 = vrot.lane.b32.xlu0 %v3397, 64
      %v3476 = vpop.permute.xlu0 %3475
      %3477 = vrot.lane.b32.xlu0 %v3398, 64
      %v3478 = vpop.permute.xlu0 %3477
      %3479 = vrot.lane.b32.xlu0 %v3399, 64
      %v3480 = vpop.permute.xlu0 %3479
      %3481 = vrot.lane.b32.xlu0 %v3400, 64
      %v3482 = vpop.permute.xlu0 %3481
      %3483 = vrot.lane.b32.xlu0 %v3401, 64
      %v3484 = vpop.permute.xlu0 %3483
      %3485 = vrot.lane.b32.xlu0 %v3402, 64
      %v3486 = vpop.permute.xlu0 %3485
      %3487 = vrot.lane.b32.xlu0 %v3403, 64
      %v3488 = vpop.permute.xlu0 %3487
      %3489 = vrot.lane.b32.xlu0 %v3404, 64
      %v3490 = vpop.permute.xlu0 %3489
      %3491 = vrot.lane.b32.xlu0 %v3405, 64
      %v3492 = vpop.permute.xlu0 %3491
      %3493 = vrot.lane.b32.xlu0 %v3406, 64
      %v3494 = vpop.permute.xlu0 %3493
      %3495 = vrot.lane.b32.xlu0 %v3407, 64
      %v3496 = vpop.permute.xlu0 %3495
      %3497 = vrot.lane.b32.xlu0 %v3408, 64
      %v3498 = vpop.permute.xlu0 %3497
      %3499 = vrot.lane.b32.xlu0 %v3409, 64
      %v3500 = vpop.permute.xlu0 %3499
      %3501 = vrot.lane.b32.xlu0 %v3410, 64
      %v3502 = vpop.permute.xlu0 %3501
      %3503 = vrot.lane.b32.xlu0 %v3411, 64
      %v3504 = vpop.permute.xlu0 %3503
      %3505 = vrot.lane.b32.xlu0 %v3412, 64
      %v3506 = vpop.permute.xlu0 %3505
      %3507 = vrot.lane.b32.xlu0 %v3413, 64
      %v3508 = vpop.permute.xlu0 %3507
      %3509 = vrot.lane.b32.xlu0 %v3414, 64
      %v3510 = vpop.permute.xlu0 %3509
      %3543 = vst.msk [vmem:[#allocation3 + $0x18] sm:$0xff] %vm643, %v3448
      %3544 = vst.msk [vmem:[#allocation3 + $0x40] sm:$0xff] %vm643, %v3450
      %3545 = vst.msk [vmem:[#allocation3 + $0x68] sm:$0xff] %vm643, %v3452
      %3546 = vst.msk [vmem:[#allocation3 + $0x90] sm:$0xff] %vm643, %v3454
      %3547 = vst.msk [vmem:[#allocation3 + $0xb8] sm:$0xff] %vm643, %v3456
      %3548 = vst.msk [vmem:[#allocation3 + $0xe0] sm:$0xff] %vm643, %v3458
      %3549 = vst.msk [vmem:[#allocation3 + $0x108] sm:$0xff] %vm643, %v3460
      %3550 = vst.msk [vmem:[#allocation3 + $0x130] sm:$0xff] %vm643, %v3462
      %3551 = vst.msk [vmem:[#allocation3 + $0x158] sm:$0xff] %vm643, %v3464
      %3552 = vst.msk [vmem:[#allocation3 + $0x180] sm:$0xff] %vm643, %v3466
      %3553 = vst.msk [vmem:[#allocation3 + $0x1a8] sm:$0xff] %vm643, %v3468
      %3554 = vst.msk [vmem:[#allocation3 + $0x1d0] sm:$0xff] %vm643, %v3470
      %3555 = vst.msk [vmem:[#allocation3 + $0x1f8] sm:$0xff] %vm643, %v3472
      %3556 = vst.msk [vmem:[#allocation3 + $0x220] sm:$0xff] %vm643, %v3474
      %3557 = vst.msk [vmem:[#allocation3 + $0x248] sm:$0xff] %vm643, %v3476
      %3558 = vst.msk [vmem:[#allocation3 + $0x270] sm:$0xff] %vm643, %v3478
      %3559 = vst.msk [vmem:[#allocation3 + $0x298] sm:$0xff] %vm643, %v3480
      %3560 = vst.msk [vmem:[#allocation3 + $0x2c0] sm:$0xff] %vm643, %v3482
      %3561 = vst.msk [vmem:[#allocation3 + $0x2e8] sm:$0xff] %vm643, %v3484
      %3562 = vst.msk [vmem:[#allocation3 + $0x310] sm:$0xff] %vm643, %v3486
      %3563 = vst.msk [vmem:[#allocation3 + $0x338] sm:$0xff] %vm643, %v3488
      %3564 = vst.msk [vmem:[#allocation3 + $0x360] sm:$0xff] %vm643, %v3490
      %3565 = vst.msk [vmem:[#allocation3 + $0x388] sm:$0xff] %vm643, %v3492
      %3566 = vst.msk [vmem:[#allocation3 + $0x3b0] sm:$0xff] %vm643, %v3494
      %3567 = vst.msk [vmem:[#allocation3 + $0x3d8] sm:$0xff] %vm643, %v3496
      %3568 = vst.msk [vmem:[#allocation3 + $0x400] sm:$0xff] %vm643, %v3498
      %3569 = vst.msk [vmem:[#allocation3 + $0x428] sm:$0xff] %vm643, %v3500
      %3570 = vst.msk [vmem:[#allocation3 + $0x450] sm:$0xff] %vm643, %v3502
      %3571 = vst.msk [vmem:[#allocation3 + $0x478] sm:$0xff] %vm643, %v3504
      %3572 = vst.msk [vmem:[#allocation3 + $0x4a0] sm:$0xff] %vm643, %v3506
      %3573 = vst.msk [vmem:[#allocation3 + $0x4c8] sm:$0xff] %vm643, %v3508
      %3574 = vst.msk [vmem:[#allocation3 + $0x4f0] sm:$0xff] %vm643, %v3510
      %v3575 = vld [vmem:[%s1188 + $0x9] sm:$0xff]
      %v3576 = vld [vmem:[%s1188 + $0x11] sm:$0xff]
      %v3577 = vld [vmem:[%s1188 + $0x29] sm:$0xff]
      %v3578 = vld [vmem:[%s1188 + $0x31] sm:$0xff]
      %v3579 = vld [vmem:[%s1188 + $0x49] sm:$0xff]
      %v3580 = vld [vmem:[%s1188 + $0x51] sm:$0xff]
      %v3581 = vld [vmem:[%s1188 + $0x69] sm:$0xff]
      %v3582 = vld [vmem:[%s1188 + $0x71] sm:$0xff]
      %v3583 = vld [vmem:[%s1188 + $0x89] sm:$0xff]
      %v3584 = vld [vmem:[%s1188 + $0x91] sm:$0xff]
      %v3585 = vld [vmem:[%s1188 + $0xa9] sm:$0xff]
      %v3586 = vld [vmem:[%s1188 + $0xb1] sm:$0xff]
      %v3587 = vld [vmem:[%s1188 + $0xc9] sm:$0xff]
      %v3588 = vld [vmem:[%s1188 + $0xd1] sm:$0xff]
      %v3589 = vld [vmem:[%s1188 + $0xe9] sm:$0xff]
      %v3590 = vld [vmem:[%s1188 + $0xf1] sm:$0xff]
      %v3591 = vld [vmem:[%s1188 + $0x109] sm:$0xff]
      %v3592 = vld [vmem:[%s1188 + $0x111] sm:$0xff]
      %v3593 = vld [vmem:[%s1188 + $0x129] sm:$0xff]
      %v3594 = vld [vmem:[%s1188 + $0x131] sm:$0xff]
      %v3595 = vld [vmem:[%s1188 + $0x149] sm:$0xff]
      %v3596 = vld [vmem:[%s1188 + $0x151] sm:$0xff]
      %v3597 = vld [vmem:[%s1188 + $0x169] sm:$0xff]
      %v3598 = vld [vmem:[%s1188 + $0x171] sm:$0xff]
      %v3599 = vld [vmem:[%s1188 + $0x189] sm:$0xff]
      %v3600 = vld [vmem:[%s1188 + $0x191] sm:$0xff]
      %v3601 = vld [vmem:[%s1188 + $0x1a9] sm:$0xff]
      %v3602 = vld [vmem:[%s1188 + $0x1b1] sm:$0xff]
      %v3603 = vld [vmem:[%s1188 + $0x1c9] sm:$0xff]
      %v3604 = vld [vmem:[%s1188 + $0x1d1] sm:$0xff]
      %v3605 = vld [vmem:[%s1188 + $0x1e9] sm:$0xff]
      %v3606 = vld [vmem:[%s1188 + $0x1f1] sm:$0xff]
      %3607 = vst.msk [vmem:[#allocation3 + $0x20] sm:$0xff] %vm281, %v3575
      %3608 = vst.msk [vmem:[#allocation3 + $0x48] sm:$0xff] %vm281, %v3576
      %3609 = vst.msk [vmem:[#allocation3 + $0x70] sm:$0xff] %vm281, %v3577
      %3610 = vst.msk [vmem:[#allocation3 + $0x98] sm:$0xff] %vm281, %v3578
      %3611 = vst.msk [vmem:[#allocation3 + $0xc0] sm:$0xff] %vm281, %v3579
      %3612 = vst.msk [vmem:[#allocation3 + $0xe8] sm:$0xff] %vm281, %v3580
      %3613 = vst.msk [vmem:[#allocation3 + $0x110] sm:$0xff] %vm281, %v3581
      %3614 = vst.msk [vmem:[#allocation3 + $0x138] sm:$0xff] %vm281, %v3582
      %3615 = vst.msk [vmem:[#allocation3 + $0x160] sm:$0xff] %vm281, %v3583
      %3616 = vst.msk [vmem:[#allocation3 + $0x188] sm:$0xff] %vm281, %v3584
      %3617 = vst.msk [vmem:[#allocation3 + $0x1b0] sm:$0xff] %vm281, %v3585
      %3618 = vst.msk [vmem:[#allocation3 + $0x1d8] sm:$0xff] %vm281, %v3586
      %3619 = vst.msk [vmem:[#allocation3 + $0x200] sm:$0xff] %vm281, %v3587
      %3620 = vst.msk [vmem:[#allocation3 + $0x228] sm:$0xff] %vm281, %v3588
      %3621 = vst.msk [vmem:[#allocation3 + $0x250] sm:$0xff] %vm281, %v3589
      %3622 = vst.msk [vmem:[#allocation3 + $0x278] sm:$0xff] %vm281, %v3590
      %3623 = vst.msk [vmem:[#allocation3 + $0x2a0] sm:$0xff] %vm281, %v3591
      %3624 = vst.msk [vmem:[#allocation3 + $0x2c8] sm:$0xff] %vm281, %v3592
      %3625 = vst.msk [vmem:[#allocation3 + $0x2f0] sm:$0xff] %vm281, %v3593
      %3626 = vst.msk [vmem:[#allocation3 + $0x318] sm:$0xff] %vm281, %v3594
      %3627 = vst.msk [vmem:[#allocation3 + $0x340] sm:$0xff] %vm281, %v3595
      %3628 = vst.msk [vmem:[#allocation3 + $0x368] sm:$0xff] %vm281, %v3596
      %3629 = vst.msk [vmem:[#allocation3 + $0x390] sm:$0xff] %vm281, %v3597
      %3630 = vst.msk [vmem:[#allocation3 + $0x3b8] sm:$0xff] %vm281, %v3598
      %3631 = vst.msk [vmem:[#allocation3 + $0x3e0] sm:$0xff] %vm281, %v3599
      %3632 = vst.msk [vmem:[#allocation3 + $0x408] sm:$0xff] %vm281, %v3600
      %3633 = vst.msk [vmem:[#allocation3 + $0x430] sm:$0xff] %vm281, %v3601
      %3634 = vst.msk [vmem:[#allocation3 + $0x458] sm:$0xff] %vm281, %v3602
      %3635 = vst.msk [vmem:[#allocation3 + $0x480] sm:$0xff] %vm281, %v3603
      %3636 = vst.msk [vmem:[#allocation3 + $0x4a8] sm:$0xff] %vm281, %v3604
      %3637 = vst.msk [vmem:[#allocation3 + $0x4d0] sm:$0xff] %vm281, %v3605
      %3638 = vst.msk [vmem:[#allocation3 + $0x4f8] sm:$0xff] %vm281, %v3606
      %v3639 = vld [vmem:[#allocation3] sm:$0xff]
      %v3640 = vld [vmem:[#allocation3 + $0x8] sm:$0xff]
      %v3641 = vld [vmem:[#allocation3 + $0x10] sm:$0xff]
      %v3642 = vld [vmem:[#allocation3 + $0x18] sm:$0xff]
      %v3643 = vld [vmem:[#allocation3 + $0x20] sm:$0xff]
      %v3644 = vld [vmem:[#allocation3 + $0x28] sm:$0xff]
      %v3645 = vld [vmem:[#allocation3 + $0x30] sm:$0xff]
      %v3646 = vld [vmem:[#allocation3 + $0x38] sm:$0xff]
      %v3647 = vld [vmem:[#allocation3 + $0x40] sm:$0xff]
      %v3648 = vld [vmem:[#allocation3 + $0x48] sm:$0xff]
      %v3649 = vld [vmem:[#allocation3 + $0x50] sm:$0xff]
      %v3650 = vld [vmem:[#allocation3 + $0x58] sm:$0xff]
      %v3651 = vld [vmem:[#allocation3 + $0x60] sm:$0xff]
      %v3652 = vld [vmem:[#allocation3 + $0x68] sm:$0xff]
      %v3653 = vld [vmem:[#allocation3 + $0x70] sm:$0xff]
      %v3654 = vld [vmem:[#allocation3 + $0x78] sm:$0xff]
      %v3655 = vld [vmem:[#allocation3 + $0x80] sm:$0xff]
      %v3656 = vld [vmem:[#allocation3 + $0x88] sm:$0xff]
      %v3657 = vld [vmem:[#allocation3 + $0x90] sm:$0xff]
      %v3658 = vld [vmem:[#allocation3 + $0x98] sm:$0xff]
      %v3659 = vld [vmem:[#allocation3 + $0xa0] sm:$0xff]
      %v3660 = vld [vmem:[#allocation3 + $0xa8] sm:$0xff]
      %v3661 = vld [vmem:[#allocation3 + $0xb0] sm:$0xff]
      %v3662 = vld [vmem:[#allocation3 + $0xb8] sm:$0xff]
      %v3663 = vld [vmem:[#allocation3 + $0xc0] sm:$0xff]
      %v3664 = vld [vmem:[#allocation3 + $0xc8] sm:$0xff]
      %v3665 = vld [vmem:[#allocation3 + $0xd0] sm:$0xff]
      %v3666 = vld [vmem:[#allocation3 + $0xd8] sm:$0xff]
      %v3667 = vld [vmem:[#allocation3 + $0xe0] sm:$0xff]
      %v3668 = vld [vmem:[#allocation3 + $0xe8] sm:$0xff]
      %v3669 = vld [vmem:[#allocation3 + $0xf0] sm:$0xff]
      %v3670 = vld [vmem:[#allocation3 + $0xf8] sm:$0xff]
      %v3671 = vld [vmem:[#allocation3 + $0x100] sm:$0xff]
      %v3672 = vld [vmem:[#allocation3 + $0x108] sm:$0xff]
      %v3673 = vld [vmem:[#allocation3 + $0x110] sm:$0xff]
      %v3674 = vld [vmem:[#allocation3 + $0x118] sm:$0xff]
      %v3675 = vld [vmem:[#allocation3 + $0x120] sm:$0xff]
      %v3676 = vld [vmem:[#allocation3 + $0x128] sm:$0xff]
      %v3677 = vld [vmem:[#allocation3 + $0x130] sm:$0xff]
      %v3678 = vld [vmem:[#allocation3 + $0x138] sm:$0xff]
      %v3679 = vld [vmem:[#allocation3 + $0x140] sm:$0xff]
      %v3680 = vld [vmem:[#allocation3 + $0x148] sm:$0xff]
      %v3681 = vld [vmem:[#allocation3 + $0x150] sm:$0xff]
      %v3682 = vld [vmem:[#allocation3 + $0x158] sm:$0xff]
      %v3683 = vld [vmem:[#allocation3 + $0x160] sm:$0xff]
      %v3684 = vld [vmem:[#allocation3 + $0x168] sm:$0xff]
      %v3685 = vld [vmem:[#allocation3 + $0x170] sm:$0xff]
      %v3686 = vld [vmem:[#allocation3 + $0x178] sm:$0xff]
      %v3687 = vld [vmem:[#allocation3 + $0x180] sm:$0xff]
      %v3688 = vld [vmem:[#allocation3 + $0x188] sm:$0xff]
      %v3689 = vld [vmem:[#allocation3 + $0x190] sm:$0xff]
      %v3690 = vld [vmem:[#allocation3 + $0x198] sm:$0xff]
      %v3691 = vld [vmem:[#allocation3 + $0x1a0] sm:$0xff]
      %v3692 = vld [vmem:[#allocation3 + $0x1a8] sm:$0xff]
      %v3693 = vld [vmem:[#allocation3 + $0x1b0] sm:$0xff]
      %v3694 = vld [vmem:[#allocation3 + $0x1b8] sm:$0xff]
      %v3695 = vld [vmem:[#allocation3 + $0x1c0] sm:$0xff]
      %v3696 = vld [vmem:[#allocation3 + $0x1c8] sm:$0xff]
      %v3697 = vld [vmem:[#allocation3 + $0x1d0] sm:$0xff]
      %v3698 = vld [vmem:[#allocation3 + $0x1d8] sm:$0xff]
      %v3699 = vld [vmem:[#allocation3 + $0x1e0] sm:$0xff]
      %v3700 = vld [vmem:[#allocation3 + $0x1e8] sm:$0xff]
      %v3701 = vld [vmem:[#allocation3 + $0x1f0] sm:$0xff]
      %v3702 = vld [vmem:[#allocation3 + $0x1f8] sm:$0xff]
      %v3703 = vld [vmem:[#allocation3 + $0x200] sm:$0xff]
      %v3704 = vld [vmem:[#allocation3 + $0x208] sm:$0xff]
      %v3705 = vld [vmem:[#allocation3 + $0x210] sm:$0xff]
      %v3706 = vld [vmem:[#allocation3 + $0x218] sm:$0xff]
      %v3707 = vld [vmem:[#allocation3 + $0x220] sm:$0xff]
      %v3708 = vld [vmem:[#allocation3 + $0x228] sm:$0xff]
      %v3709 = vld [vmem:[#allocation3 + $0x230] sm:$0xff]
      %v3710 = vld [vmem:[#allocation3 + $0x238] sm:$0xff]
      %v3711 = vld [vmem:[#allocation3 + $0x240] sm:$0xff]
      %v3712 = vld [vmem:[#allocation3 + $0x248] sm:$0xff]
      %v3713 = vld [vmem:[#allocation3 + $0x250] sm:$0xff]
      %v3714 = vld [vmem:[#allocation3 + $0x258] sm:$0xff]
      %v3715 = vld [vmem:[#allocation3 + $0x260] sm:$0xff]
      %v3716 = vld [vmem:[#allocation3 + $0x268] sm:$0xff]
      %v3717 = vld [vmem:[#allocation3 + $0x270] sm:$0xff]
      %v3718 = vld [vmem:[#allocation3 + $0x278] sm:$0xff]
      %v3719 = vld [vmem:[#allocation3 + $0x280] sm:$0xff]
      %v3720 = vld [vmem:[#allocation3 + $0x288] sm:$0xff]
      %v3721 = vld [vmem:[#allocation3 + $0x290] sm:$0xff]
      %v3722 = vld [vmem:[#allocation3 + $0x298] sm:$0xff]
      %v3723 = vld [vmem:[#allocation3 + $0x2a0] sm:$0xff]
      %v3724 = vld [vmem:[#allocation3 + $0x2a8] sm:$0xff]
      %v3725 = vld [vmem:[#allocation3 + $0x2b0] sm:$0xff]
      %v3726 = vld [vmem:[#allocation3 + $0x2b8] sm:$0xff]
      %v3727 = vld [vmem:[#allocation3 + $0x2c0] sm:$0xff]
      %v3728 = vld [vmem:[#allocation3 + $0x2c8] sm:$0xff]
      %v3729 = vld [vmem:[#allocation3 + $0x2d0] sm:$0xff]
      %v3730 = vld [vmem:[#allocation3 + $0x2d8] sm:$0xff]
      %v3731 = vld [vmem:[#allocation3 + $0x2e0] sm:$0xff]
      %v3732 = vld [vmem:[#allocation3 + $0x2e8] sm:$0xff]
      %v3733 = vld [vmem:[#allocation3 + $0x2f0] sm:$0xff]
      %v3734 = vld [vmem:[#allocation3 + $0x2f8] sm:$0xff]
      %v3735 = vld [vmem:[#allocation3 + $0x300] sm:$0xff]
      %v3736 = vld [vmem:[#allocation3 + $0x308] sm:$0xff]
      %v3737 = vld [vmem:[#allocation3 + $0x310] sm:$0xff]
      %v3738 = vld [vmem:[#allocation3 + $0x318] sm:$0xff]
      %v3739 = vld [vmem:[#allocation3 + $0x320] sm:$0xff]
      %v3740 = vld [vmem:[#allocation3 + $0x328] sm:$0xff]
      %v3741 = vld [vmem:[#allocation3 + $0x330] sm:$0xff]
      %v3742 = vld [vmem:[#allocation3 + $0x338] sm:$0xff]
      %v3743 = vld [vmem:[#allocation3 + $0x340] sm:$0xff]
      %v3744 = vld [vmem:[#allocation3 + $0x348] sm:$0xff]
      %v3745 = vld [vmem:[#allocation3 + $0x350] sm:$0xff]
      %v3746 = vld [vmem:[#allocation3 + $0x358] sm:$0xff]
      %v3747 = vld [vmem:[#allocation3 + $0x360] sm:$0xff]
      %v3748 = vld [vmem:[#allocation3 + $0x368] sm:$0xff]
      %v3749 = vld [vmem:[#allocation3 + $0x370] sm:$0xff]
      %v3750 = vld [vmem:[#allocation3 + $0x378] sm:$0xff]
      %v3751 = vld [vmem:[#allocation3 + $0x380] sm:$0xff]
      %v3752 = vld [vmem:[#allocation3 + $0x388] sm:$0xff]
      %v3753 = vld [vmem:[#allocation3 + $0x390] sm:$0xff]
      %v3754 = vld [vmem:[#allocation3 + $0x398] sm:$0xff]
      %v3755 = vld [vmem:[#allocation3 + $0x3a0] sm:$0xff]
      %v3756 = vld [vmem:[#allocation3 + $0x3a8] sm:$0xff]
      %v3757 = vld [vmem:[#allocation3 + $0x3b0] sm:$0xff]
      %v3758 = vld [vmem:[#allocation3 + $0x3b8] sm:$0xff]
      %v3759 = vld [vmem:[#allocation3 + $0x3c0] sm:$0xff]
      %v3760 = vld [vmem:[#allocation3 + $0x3c8] sm:$0xff]
      %v3761 = vld [vmem:[#allocation3 + $0x3d0] sm:$0xff]
      %v3762 = vld [vmem:[#allocation3 + $0x3d8] sm:$0xff]
      %v3763 = vld [vmem:[#allocation3 + $0x3e0] sm:$0xff]
      %v3764 = vld [vmem:[#allocation3 + $0x3e8] sm:$0xff]
      %v3765 = vld [vmem:[#allocation3 + $0x3f0] sm:$0xff]
      %v3766 = vld [vmem:[#allocation3 + $0x3f8] sm:$0xff]
      %v3767 = vld [vmem:[#allocation3 + $0x400] sm:$0xff]
      %v3768 = vld [vmem:[#allocation3 + $0x408] sm:$0xff]
      %v3769 = vld [vmem:[#allocation3 + $0x410] sm:$0xff]
      %v3770 = vld [vmem:[#allocation3 + $0x418] sm:$0xff]
      %v3771 = vld [vmem:[#allocation3 + $0x420] sm:$0xff]
      %v3772 = vld [vmem:[#allocation3 + $0x428] sm:$0xff]
      %v3773 = vld [vmem:[#allocation3 + $0x430] sm:$0xff]
      %v3774 = vld [vmem:[#allocation3 + $0x438] sm:$0xff]
      %v3775 = vld [vmem:[#allocation3 + $0x440] sm:$0xff]
      %v3776 = vld [vmem:[#allocation3 + $0x448] sm:$0xff]
      %v3777 = vld [vmem:[#allocation3 + $0x450] sm:$0xff]
      %v3778 = vld [vmem:[#allocation3 + $0x458] sm:$0xff]
      %v3779 = vld [vmem:[#allocation3 + $0x460] sm:$0xff]
      %v3780 = vld [vmem:[#allocation3 + $0x468] sm:$0xff]
      %v3781 = vld [vmem:[#allocation3 + $0x470] sm:$0xff]
      %v3782 = vld [vmem:[#allocation3 + $0x478] sm:$0xff]
      %v3783 = vld [vmem:[#allocation3 + $0x480] sm:$0xff]
      %v3784 = vld [vmem:[#allocation3 + $0x488] sm:$0xff]
      %v3785 = vld [vmem:[#allocation3 + $0x490] sm:$0xff]
      %v3786 = vld [vmem:[#allocation3 + $0x498] sm:$0xff]
      %v3787 = vld [vmem:[#allocation3 + $0x4a0] sm:$0xff]
      %v3788 = vld [vmem:[#allocation3 + $0x4a8] sm:$0xff]
      %v3789 = vld [vmem:[#allocation3 + $0x4b0] sm:$0xff]
      %v3790 = vld [vmem:[#allocation3 + $0x4b8] sm:$0xff]
      %v3791 = vld [vmem:[#allocation3 + $0x4c0] sm:$0xff]
      %v3792 = vld [vmem:[#allocation3 + $0x4c8] sm:$0xff]
      %v3793 = vld [vmem:[#allocation3 + $0x4d0] sm:$0xff]
      %v3794 = vld [vmem:[#allocation3 + $0x4d8] sm:$0xff]
      %v3795 = vld [vmem:[#allocation3 + $0x4e0] sm:$0xff]
      %v3796 = vld [vmem:[#allocation3 + $0x4e8] sm:$0xff]
      %v3797 = vld [vmem:[#allocation3 + $0x4f0] sm:$0xff]
      %v3798 = vld [vmem:[#allocation3 + $0x4f8] sm:$0xff]
      %v3799 = vld [vmem:[%s3] sm:$0xff]
      %v3800 = vld [vmem:[%s3 + $0x8] sm:$0xff]
      %v3801 = vld [vmem:[%s3 + $0x10] sm:$0xff]
      %v3802 = vld [vmem:[%s3 + $0x18] sm:$0xff]
      %v3803 = vld [vmem:[%s3 + $0x20] sm:$0xff]
      %v3804 = vld [vmem:[%s3 + $0x28] sm:$0xff]
      %v3805 = vld [vmem:[%s3 + $0x30] sm:$0xff]
      %v3806 = vld [vmem:[%s3 + $0x38] sm:$0xff]
      %v3807 = vld [vmem:[%s3 + $0x40] sm:$0xff]
      %v3808 = vld [vmem:[%s3 + $0x48] sm:$0xff]
      %v3809 = vld [vmem:[%s3 + $0x50] sm:$0xff]
      %v3810 = vld [vmem:[%s3 + $0x58] sm:$0xff]
      %v3811 = vld [vmem:[%s3 + $0x60] sm:$0xff]
      %v3812 = vld [vmem:[%s3 + $0x68] sm:$0xff]
      %v3813 = vld [vmem:[%s3 + $0x70] sm:$0xff]
      %v3814 = vld [vmem:[%s3 + $0x78] sm:$0xff]
      %v3815 = vld [vmem:[%s3 + $0x80] sm:$0xff]
      %v3816 = vld [vmem:[%s3 + $0x88] sm:$0xff]
      %v3817 = vld [vmem:[%s3 + $0x90] sm:$0xff]
      %v3818 = vld [vmem:[%s3 + $0x98] sm:$0xff]
      %v3819 = vld [vmem:[%s3 + $0xa0] sm:$0xff]
      %v3820 = vld [vmem:[%s3 + $0xa8] sm:$0xff]
      %v3821 = vld [vmem:[%s3 + $0xb0] sm:$0xff]
      %v3822 = vld [vmem:[%s3 + $0xb8] sm:$0xff]
      %v3823 = vld [vmem:[%s3 + $0xc0] sm:$0xff]
      %v3824 = vld [vmem:[%s3 + $0xc8] sm:$0xff]
      %v3825 = vld [vmem:[%s3 + $0xd0] sm:$0xff]
      %v3826 = vld [vmem:[%s3 + $0xd8] sm:$0xff]
      %v3827 = vld [vmem:[%s3 + $0xe0] sm:$0xff]
      %v3828 = vld [vmem:[%s3 + $0xe8] sm:$0xff]
      %v3829 = vld [vmem:[%s3 + $0xf0] sm:$0xff]
      %v3830 = vld [vmem:[%s3 + $0xf8] sm:$0xff]
      %v3831 = vld [vmem:[%s3 + $0x100] sm:$0xff]
      %v3832 = vld [vmem:[%s3 + $0x108] sm:$0xff]
      %v3833 = vld [vmem:[%s3 + $0x110] sm:$0xff]
      %v3834 = vld [vmem:[%s3 + $0x118] sm:$0xff]
      %v3835 = vld [vmem:[%s3 + $0x120] sm:$0xff]
      %v3836 = vld [vmem:[%s3 + $0x128] sm:$0xff]
      %v3837 = vld [vmem:[%s3 + $0x130] sm:$0xff]
      %v3838 = vld [vmem:[%s3 + $0x138] sm:$0xff]
      %v3839 = vld [vmem:[%s3 + $0x140] sm:$0xff]
      %v3840 = vld [vmem:[%s3 + $0x148] sm:$0xff]
      %v3841 = vld [vmem:[%s3 + $0x150] sm:$0xff]
      %v3842 = vld [vmem:[%s3 + $0x158] sm:$0xff]
      %v3843 = vld [vmem:[%s3 + $0x160] sm:$0xff]
      %v3844 = vld [vmem:[%s3 + $0x168] sm:$0xff]
      %v3845 = vld [vmem:[%s3 + $0x170] sm:$0xff]
      %v3846 = vld [vmem:[%s3 + $0x178] sm:$0xff]
      %v3847 = vld [vmem:[%s3 + $0x180] sm:$0xff]
      %v3848 = vld [vmem:[%s3 + $0x188] sm:$0xff]
      %v3849 = vld [vmem:[%s3 + $0x190] sm:$0xff]
      %v3850 = vld [vmem:[%s3 + $0x198] sm:$0xff]
      %v3851 = vld [vmem:[%s3 + $0x1a0] sm:$0xff]
      %v3852 = vld [vmem:[%s3 + $0x1a8] sm:$0xff]
      %v3853 = vld [vmem:[%s3 + $0x1b0] sm:$0xff]
      %v3854 = vld [vmem:[%s3 + $0x1b8] sm:$0xff]
      %v3855 = vld [vmem:[%s3 + $0x1c0] sm:$0xff]
      %v3856 = vld [vmem:[%s3 + $0x1c8] sm:$0xff]
      %v3857 = vld [vmem:[%s3 + $0x1d0] sm:$0xff]
      %v3858 = vld [vmem:[%s3 + $0x1d8] sm:$0xff]
      %v3859 = vld [vmem:[%s3 + $0x1e0] sm:$0xff]
      %v3860 = vld [vmem:[%s3 + $0x1e8] sm:$0xff]
      %v3861 = vld [vmem:[%s3 + $0x1f0] sm:$0xff]
      %v3862 = vld [vmem:[%s3 + $0x1f8] sm:$0xff]
      %v3863 = vld [vmem:[%s3 + $0x200] sm:$0xff]
      %v3864 = vld [vmem:[%s3 + $0x208] sm:$0xff]
      %v3865 = vld [vmem:[%s3 + $0x210] sm:$0xff]
      %v3866 = vld [vmem:[%s3 + $0x218] sm:$0xff]
      %v3867 = vld [vmem:[%s3 + $0x220] sm:$0xff]
      %v3868 = vld [vmem:[%s3 + $0x228] sm:$0xff]
      %v3869 = vld [vmem:[%s3 + $0x230] sm:$0xff]
      %v3870 = vld [vmem:[%s3 + $0x238] sm:$0xff]
      %v3871 = vld [vmem:[%s4] sm:$0x1]
      %v3873 = vlaneseq
      %v3874 = vshrl.u32 %v3873, 7
      %v3875 = vsub.s32 0, %v3874
      %v3876 = vrot.slane %v3871, %v3875
      %v3879 = vsel %vm281, %v3643, 0
      %v3882 = vsel %vm281, %v3648, 0
      %v3885 = vsel %vm281, %v3653, 0
      %v3888 = vsel %vm281, %v3658, 0
      %v3891 = vsel %vm281, %v3663, 0
      %v3894 = vsel %vm281, %v3668, 0
      %v3897 = vsel %vm281, %v3673, 0
      %v3900 = vsel %vm281, %v3678, 0
      %v3903 = vsel %vm281, %v3683, 0
      %v3906 = vsel %vm281, %v3688, 0
      %v3909 = vsel %vm281, %v3693, 0
      %v3912 = vsel %vm281, %v3698, 0
      %v3915 = vsel %vm281, %v3703, 0
      %v3918 = vsel %vm281, %v3708, 0
      %v3921 = vsel %vm281, %v3713, 0
      %v3924 = vsel %vm281, %v3718, 0
      %v3927 = vsel %vm281, %v3723, 0
      %v3930 = vsel %vm281, %v3728, 0
      %v3933 = vsel %vm281, %v3733, 0
      %v3936 = vsel %vm281, %v3738, 0
      %v3939 = vsel %vm281, %v3743, 0
      %v3942 = vsel %vm281, %v3748, 0
      %v3945 = vsel %vm281, %v3753, 0
      %v3948 = vsel %vm281, %v3758, 0
      %v3951 = vsel %vm281, %v3763, 0
      %v3954 = vsel %vm281, %v3768, 0
      %v3957 = vsel %vm281, %v3773, 0
      %v3960 = vsel %vm281, %v3778, 0
      %v3963 = vsel %vm281, %v3783, 0
      %v3966 = vsel %vm281, %v3788, 0
      %v3969 = vsel %vm281, %v3793, 0
      %v3972 = vsel %vm281, %v3798, 0
      %3974 = vmatprep.subr.mxu0 0.0
      %3975 = vmatpush1.msra.mxu0 %v3799
      %3976 = vmatprep.subr.mxu0 0.0
      %3977 = vmatpush1.msra.mxu0 %v3800
      %3978 = vmatprep.subr.mxu0 0.0
      %3979 = vmatpush1.msra.mxu0 %v3801
      %3980 = vmatprep.subr.mxu0 0.0
      %3981 = vmatpush1.msra.mxu0 %v3802
      %3982 = vmatprep.subr.mxu0 0.0
      %3983 = vmatpush1.msra.mxu0 %v3803
      %3984 = vmatprep.subr.mxu0 0.0
      %3985 = vmatpush1.msra.mxu0 %v3804
      %3986 = vmatprep.subr.mxu0 0.0
      %3987 = vmatpush1.msra.mxu0 %v3805
      %3988 = vmatprep.subr.mxu0 0.0
      %3989 = vmatpush1.msra.mxu0 %v3806
      %3990 = vmatprep.subr.mxu0 0.0
      %3991 = vmatpush1.msra.mxu0 %v3807
      %3992 = vmatprep.subr.mxu0 0.0
      %3993 = vmatpush1.msra.mxu0 %v3808
      %3994 = vmatprep.subr.mxu0 0.0
      %3995 = vmatpush1.msra.mxu0 %v3809
      %3996 = vmatprep.subr.mxu0 0.0
      %3997 = vmatpush1.msra.mxu0 %v3810
      %3998 = vmatprep.subr.mxu0 0.0
      %3999 = vmatpush1.msra.mxu0 %v3811
      %4000 = vmatprep.subr.mxu0 0.0
      %4001 = vmatpush1.msra.mxu0 %v3812
      %4002 = vmatprep.subr.mxu0 0.0
      %4003 = vmatpush1.msra.mxu0 %v3813
      %4004 = vmatprep.subr.mxu0 0.0
      %4005 = vmatpush1.msra.mxu0 %v3814
      %4006 = vmatprep.subr.mxu0 0.0
      %4007 = vmatpush1.msra.mxu0 %v3815
      %4008 = vmatprep.subr.mxu0 0.0
      %4009 = vmatpush1.msra.mxu0 %v3816
      %4010 = vmatprep.subr.mxu0 0.0
      %4011 = vmatpush1.msra.mxu0 %v3817
      %4012 = vmatprep.subr.mxu0 0.0
      %4013 = vmatpush1.msra.mxu0 %v3818
      %4014 = vmatprep.subr.mxu0 0.0
      %4015 = vmatpush1.msra.mxu0 %v3819
      %4016 = vmatprep.subr.mxu0 0.0
      %4017 = vmatpush1.msra.mxu0 %v3820
      %4018 = vmatprep.subr.mxu0 0.0
      %4019 = vmatpush1.msra.mxu0 %v3821
      %4020 = vmatprep.subr.mxu0 0.0
      %4021 = vmatpush1.msra.mxu0 %v3822
      %4022 = vmatprep.subr.mxu0 0.0
      %4023 = vmatpush1.msra.mxu0 %v3823
      %4024 = vmatprep.subr.mxu0 0.0
      %4025 = vmatpush1.msra.mxu0 %v3824
      %4026 = vmatprep.subr.mxu0 0.0
      %4027 = vmatpush1.msra.mxu0 %v3825
      %4028 = vmatprep.subr.mxu0 0.0
      %4029 = vmatpush1.msra.mxu0 %v3826
      %4030 = vmatprep.subr.mxu0 0.0
      %4031 = vmatpush1.msra.mxu0 %v3827
      %4032 = vmatprep.subr.mxu0 0.0
      %4033 = vmatpush1.msra.mxu0 %v3828
      %4034 = vmatprep.subr.mxu0 0.0
      %4035 = vmatpush1.msra.mxu0 %v3829
      %4036 = vmatprep.subr.mxu0 0.0
      %4037 = vmatpush1.msra.mxu0 %v3830
      %4038 = vmatprep.mubr.f32.mxu0 %v3640
      %4039 = vmatmul.mubr.f32.gmra.mrb[0].mxu0 %v3639
      %v4040 = vpop.f32.mrb[0].mxu0
      %v4041 = vadd.f32 %v3876, %v4040
      %v4042 = vpop.f32.mrb[0].mxu0
      %4043 = vmatprep.mubr.f32.mxu0 %v3645
      %4044 = vmatmul.mubr.f32.gmra.mrb[0].mxu0 %v3644
      %v4045 = vpop.f32.mrb[0].mxu0
      %v4046 = vadd.f32 %v3876, %v4045
      %v4047 = vpop.f32.mrb[0].mxu0
      %4048 = vmatprep.mubr.f32.mxu0 %v3650
      %4049 = vmatmul.mubr.f32.gmra.mrb[0].mxu0 %v3649
      %v4050 = vpop.f32.mrb[0].mxu0
      %v4051 = vadd.f32 %v3876, %v4050
      %v4052 = vpop.f32.mrb[0].mxu0
      %4053 = vmatprep.mubr.f32.mxu0 %v3655
      %4054 = vmatmul.mubr.f32.gmra.mrb[0].mxu0 %v3654
      %v4055 = vpop.f32.mrb[0].mxu0
      %v4056 = vadd.f32 %v3876, %v4055
      %v4057 = vpop.f32.mrb[0].mxu0
      %4058 = vmatprep.mubr.f32.mxu0 %v3660
      %4059 = vmatmul.mubr.f32.gmra.mrb[0].mxu0 %v3659
      %v4060 = vpop.f32.mrb[0].mxu0
      %v4061 = vadd.f32 %v3876, %v4060
      %v4062 = vpop.f32.mrb[0].mxu0
      %4063 = vmatprep.mubr.f32.mxu0 %v3665
      %4064 = vmatmul.mubr.f32.gmra.mrb[0].mxu0 %v3664
      %v4065 = vpop.f32.mrb[0].mxu0
      %v4066 = vadd.f32 %v3876, %v4065
      %v4067 = vpop.f32.mrb[0].mxu0
      %4068 = vmatprep.mubr.f32.mxu0 %v3670
      %4069 = vmatmul.mubr.f32.gmra.mrb[0].mxu0 %v3669
      %v4070 = vpop.f32.mrb[0].mxu0
      %v4071 = vadd.f32 %v3876, %v4070
      %v4072 = vpop.f32.mrb[0].mxu0
      %4073 = vmatprep.mubr.f32.mxu0 %v3675
      %4074 = vmatmul.mubr.f32.gmra.mrb[0].mxu0 %v3674
      %v4075 = vpop.f32.mrb[0].mxu0
      %v4076 = vadd.f32 %v3876, %v4075
      %v4077 = vpop.f32.mrb[0].mxu0
      %4078 = vmatprep.mubr.f32.mxu0 %v3680
      %4079 = vmatmul.mubr.f32.gmra.mrb[0].mxu0 %v3679
      %v4080 = vpop.f32.mrb[0].mxu0
      %v4081 = vadd.f32 %v3876, %v4080
      %v4082 = vpop.f32.mrb[0].mxu0
      %4083 = vmatprep.mubr.f32.mxu0 %v3685
      %4084 = vmatmul.mubr.f32.gmra.mrb[0].mxu0 %v3684
      %v4085 = vpop.f32.mrb[0].mxu0
      %v4086 = vadd.f32 %v3876, %v4085
      %v4087 = vpop.f32.mrb[0].mxu0
      %4088 = vmatprep.mubr.f32.mxu0 %v3690
      %4089 = vmatmul.mubr.f32.gmra.mrb[0].mxu0 %v3689
      %v4090 = vpop.f32.mrb[0].mxu0
      %v4091 = vadd.f32 %v3876, %v4090
      %v4092 = vpop.f32.mrb[0].mxu0
      %4093 = vmatprep.mubr.f32.mxu0 %v3695
      %4094 = vmatmul.mubr.f32.gmra.mrb[0].mxu0 %v3694
      %v4095 = vpop.f32.mrb[0].mxu0
      %v4096 = vadd.f32 %v3876, %v4095
      %v4097 = vpop.f32.mrb[0].mxu0
      %4098 = vmatprep.mubr.f32.mxu0 %v3700
      %4099 = vmatmul.mubr.f32.gmra.mrb[0].mxu0 %v3699
      %v4100 = vpop.f32.mrb[0].mxu0
      %v4101 = vadd.f32 %v3876, %v4100
      %v4102 = vpop.f32.mrb[0].mxu0
      %4103 = vmatprep.mubr.f32.mxu0 %v3705
      %4104 = vmatmul.mubr.f32.gmra.mrb[0].mxu0 %v3704
      %v4105 = vpop.f32.mrb[0].mxu0
      %v4106 = vadd.f32 %v3876, %v4105
      %v4107 = vpop.f32.mrb[0].mxu0
      %4108 = vmatprep.mubr.f32.mxu0 %v3710
      %4109 = vmatmul.mubr.f32.gmra.mrb[0].mxu0 %v3709
      %v4110 = vpop.f32.mrb[0].mxu0
      %v4111 = vadd.f32 %v3876, %v4110
      %v4112 = vpop.f32.mrb[0].mxu0
      %4113 = vmatprep.mubr.f32.mxu0 %v3715
      %4114 = vmatmul.mubr.f32.gmra.mrb[0].mxu0 %v3714
      %v4115 = vpop.f32.mrb[0].mxu0
      %v4116 = vadd.f32 %v3876, %v4115
      %v4117 = vpop.f32.mrb[0].mxu0
      %4118 = vmatprep.mubr.f32.mxu0 %v3720
      %4119 = vmatmul.mubr.f32.gmra.mrb[0].mxu0 %v3719
      %v4120 = vpop.f32.mrb[0].mxu0
      %v4121 = vadd.f32 %v3876, %v4120
      %v4122 = vpop.f32.mrb[0].mxu0
      %4123 = vmatprep.mubr.f32.mxu0 %v3725
      %4124 = vmatmul.mubr.f32.gmra.mrb[0].mxu0 %v3724
      %v4125 = vpop.f32.mrb[0].mxu0
      %v4126 = vadd.f32 %v3876, %v4125
      %v4127 = vpop.f32.mrb[0].mxu0
      %4128 = vmatprep.mubr.f32.mxu0 %v3730
      %4129 = vmatmul.mubr.f32.gmra.mrb[0].mxu0 %v3729
      %v4130 = vpop.f32.mrb[0].mxu0
      %v4131 = vadd.f32 %v3876, %v4130
      %v4132 = vpop.f32.mrb[0].mxu0
      %4133 = vmatprep.mubr.f32.mxu0 %v3735
      %4134 = vmatmul.mubr.f32.gmra.mrb[0].mxu0 %v3734
      %v4135 = vpop.f32.mrb[0].mxu0
      %v4136 = vadd.f32 %v3876, %v4135
      %v4137 = vpop.f32.mrb[0].mxu0
      %4138 = vmatprep.mubr.f32.mxu0 %v3740
      %4139 = vmatmul.mubr.f32.gmra.mrb[0].mxu0 %v3739
      %v4140 = vpop.f32.mrb[0].mxu0
      %v4141 = vadd.f32 %v3876, %v4140
      %v4142 = vpop.f32.mrb[0].mxu0
      %4143 = vmatprep.mubr.f32.mxu0 %v3745
      %4144 = vmatmul.mubr.f32.gmra.mrb[0].mxu0 %v3744
      %v4145 = vpop.f32.mrb[0].mxu0
      %v4146 = vadd.f32 %v3876, %v4145
      %v4147 = vpop.f32.mrb[0].mxu0
      %4148 = vmatprep.mubr.f32.mxu0 %v3750
      %4149 = vmatmul.mubr.f32.gmra.mrb[0].mxu0 %v3749
      %v4150 = vpop.f32.mrb[0].mxu0
      %v4151 = vadd.f32 %v3876, %v4150
      %v4152 = vpop.f32.mrb[0].mxu0
      %4153 = vmatprep.mubr.f32.mxu0 %v3755
      %4154 = vmatmul.mubr.f32.gmra.mrb[0].mxu0 %v3754
      %v4155 = vpop.f32.mrb[0].mxu0
      %v4156 = vadd.f32 %v3876, %v4155
      %v4157 = vpop.f32.mrb[0].mxu0
      %4158 = vmatprep.mubr.f32.mxu0 %v3760
      %4159 = vmatmul.mubr.f32.gmra.mrb[0].mxu0 %v3759
      %v4160 = vpop.f32.mrb[0].mxu0
      %v4161 = vadd.f32 %v3876, %v4160
      %v4162 = vpop.f32.mrb[0].mxu0
      %4163 = vmatprep.mubr.f32.mxu0 %v3765
      %4164 = vmatmul.mubr.f32.gmra.mrb[0].mxu0 %v3764
      %v4165 = vpop.f32.mrb[0].mxu0
      %v4166 = vadd.f32 %v3876, %v4165
      %v4167 = vpop.f32.mrb[0].mxu0
      %4168 = vmatprep.mubr.f32.mxu0 %v3770
      %4169 = vmatmul.mubr.f32.gmra.mrb[0].mxu0 %v3769
      %v4170 = vpop.f32.mrb[0].mxu0
      %v4171 = vadd.f32 %v3876, %v4170
      %v4172 = vpop.f32.mrb[0].mxu0
      %4173 = vmatprep.mubr.f32.mxu0 %v3775
      %4174 = vmatmul.mubr.f32.gmra.mrb[0].mxu0 %v3774
      %v4175 = vpop.f32.mrb[0].mxu0
      %v4176 = vadd.f32 %v3876, %v4175
      %v4177 = vpop.f32.mrb[0].mxu0
      %4178 = vmatprep.mubr.f32.mxu0 %v3780
      %4179 = vmatmul.mubr.f32.gmra.mrb[0].mxu0 %v3779
      %v4180 = vpop.f32.mrb[0].mxu0
      %v4181 = vadd.f32 %v3876, %v4180
      %v4182 = vpop.f32.mrb[0].mxu0
      %4183 = vmatprep.mubr.f32.mxu0 %v3785
      %4184 = vmatmul.mubr.f32.gmra.mrb[0].mxu0 %v3784
      %v4185 = vpop.f32.mrb[0].mxu0
      %v4186 = vadd.f32 %v3876, %v4185
      %v4187 = vpop.f32.mrb[0].mxu0
      %4188 = vmatprep.mubr.f32.mxu0 %v3790
      %4189 = vmatmul.mubr.f32.gmra.mrb[0].mxu0 %v3789
      %v4190 = vpop.f32.mrb[0].mxu0
      %v4191 = vadd.f32 %v3876, %v4190
      %v4192 = vpop.f32.mrb[0].mxu0
      %4193 = vmatprep.mubr.f32.mxu0 %v3795
      %4194 = vmatmul.mubr.f32.gmra.mrb[0].mxu0 %v3794
      %v4195 = vpop.f32.mrb[0].mxu0
      %v4196 = vadd.f32 %v3876, %v4195
      %v4197 = vpop.f32.mrb[0].mxu0
      %4198 = vdwg.mxu0
      %4199 = vmatprep.subr.mxu0 0.0
      %4200 = vmatpush1.msra.mxu0 %v3831
      %4201 = vmatprep.subr.mxu0 0.0
      %4202 = vmatpush1.msra.mxu0 %v3832
      %4203 = vmatprep.subr.mxu0 0.0
      %4204 = vmatpush1.msra.mxu0 %v3833
      %4205 = vmatprep.subr.mxu0 0.0
      %4206 = vmatpush1.msra.mxu0 %v3834
      %4207 = vmatprep.subr.mxu0 0.0
      %4208 = vmatpush1.msra.mxu0 %v3835
      %4209 = vmatprep.subr.mxu0 0.0
      %4210 = vmatpush1.msra.mxu0 %v3836
      %4211 = vmatprep.subr.mxu0 0.0
      %4212 = vmatpush1.msra.mxu0 %v3837
      %4213 = vmatprep.subr.mxu0 0.0
      %4214 = vmatpush1.msra.mxu0 %v3838
      %4215 = vmatprep.subr.mxu0 0.0
      %4216 = vmatpush1.msra.mxu0 %v3839
      %4217 = vmatprep.subr.mxu0 0.0
      %4218 = vmatpush1.msra.mxu0 %v3840
      %4219 = vmatprep.subr.mxu0 0.0
      %4220 = vmatpush1.msra.mxu0 %v3841
      %4221 = vmatprep.subr.mxu0 0.0
      %4222 = vmatpush1.msra.mxu0 %v3842
      %4223 = vmatprep.subr.mxu0 0.0
      %4224 = vmatpush1.msra.mxu0 %v3843
      %4225 = vmatprep.subr.mxu0 0.0
      %4226 = vmatpush1.msra.mxu0 %v3844
      %4227 = vmatprep.subr.mxu0 0.0
      %4228 = vmatpush1.msra.mxu0 %v3845
      %4229 = vmatprep.subr.mxu0 0.0
      %4230 = vmatpush1.msra.mxu0 %v3846
      %4231 = vmatprep.subr.mxu0 0.0
      %4232 = vmatpush1.msra.mxu0 %v3847
      %4233 = vmatprep.subr.mxu0 0.0
      %4234 = vmatpush1.msra.mxu0 %v3848
      %4235 = vmatprep.subr.mxu0 0.0
      %4236 = vmatpush1.msra.mxu0 %v3849
      %4237 = vmatprep.subr.mxu0 0.0
      %4238 = vmatpush1.msra.mxu0 %v3850
      %4239 = vmatprep.subr.mxu0 0.0
      %4240 = vmatpush1.msra.mxu0 %v3851
      %4241 = vmatprep.subr.mxu0 0.0
      %4242 = vmatpush1.msra.mxu0 %v3852
      %4243 = vmatprep.subr.mxu0 0.0
      %4244 = vmatpush1.msra.mxu0 %v3853
      %4245 = vmatprep.subr.mxu0 0.0
      %4246 = vmatpush1.msra.mxu0 %v3854
      %4247 = vmatprep.subr.mxu0 0.0
      %4248 = vmatpush1.msra.mxu0 %v3855
      %4249 = vmatprep.subr.mxu0 0.0
      %4250 = vmatpush1.msra.mxu0 %v3856
      %4251 = vmatprep.subr.mxu0 0.0
      %4252 = vmatpush1.msra.mxu0 %v3857
      %4253 = vmatprep.subr.mxu0 0.0
      %4254 = vmatpush1.msra.mxu0 %v3858
      %4255 = vmatprep.subr.mxu0 0.0
      %4256 = vmatpush1.msra.mxu0 %v3859
      %4257 = vmatprep.subr.mxu0 0.0
      %4258 = vmatpush1.msra.mxu0 %v3860
      %4259 = vmatprep.subr.mxu0 0.0
      %4260 = vmatpush1.msra.mxu0 %v3861
      %4261 = vmatprep.subr.mxu0 0.0
      %4262 = vmatpush1.msra.mxu0 %v3862
      %4263 = vmatprep.mubr.f32.mxu0 %v3642
      %4264 = vmatmul.mubr.f32.gmra.mrb[0].mxu0 %v3641
      %v4265 = vpop.f32.mrb[0].mxu0
      %v4266 = vadd.f32 %v4041, %v4265
      %v4267 = vpop.f32.mrb[0].mxu0
      %4268 = vmatprep.mubr.f32.mxu0 %v3647
      %4269 = vmatmul.mubr.f32.gmra.mrb[0].mxu0 %v3646
      %v4270 = vpop.f32.mrb[0].mxu0
      %v4271 = vadd.f32 %v4046, %v4270
      %v4272 = vpop.f32.mrb[0].mxu0
      %4273 = vmatprep.mubr.f32.mxu0 %v3652
      %4274 = vmatmul.mubr.f32.gmra.mrb[0].mxu0 %v3651
      %v4275 = vpop.f32.mrb[0].mxu0
      %v4276 = vadd.f32 %v4051, %v4275
      %v4277 = vpop.f32.mrb[0].mxu0
      %4278 = vmatprep.mubr.f32.mxu0 %v3657
      %4279 = vmatmul.mubr.f32.gmra.mrb[0].mxu0 %v3656
      %v4280 = vpop.f32.mrb[0].mxu0
      %v4281 = vadd.f32 %v4056, %v4280
      %v4282 = vpop.f32.mrb[0].mxu0
      %4283 = vmatprep.mubr.f32.mxu0 %v3662
      %4284 = vmatmul.mubr.f32.gmra.mrb[0].mxu0 %v3661
      %v4285 = vpop.f32.mrb[0].mxu0
      %v4286 = vadd.f32 %v4061, %v4285
      %v4287 = vpop.f32.mrb[0].mxu0
      %4288 = vmatprep.mubr.f32.mxu0 %v3667
      %4289 = vmatmul.mubr.f32.gmra.mrb[0].mxu0 %v3666
      %v4290 = vpop.f32.mrb[0].mxu0
      %v4291 = vadd.f32 %v4066, %v4290
      %v4292 = vpop.f32.mrb[0].mxu0
      %4293 = vmatprep.mubr.f32.mxu0 %v3672
      %4294 = vmatmul.mubr.f32.gmra.mrb[0].mxu0 %v3671
      %v4295 = vpop.f32.mrb[0].mxu0
      %v4296 = vadd.f32 %v4071, %v4295
      %v4297 = vpop.f32.mrb[0].mxu0
      %4298 = vmatprep.mubr.f32.mxu0 %v3677
      %4299 = vmatmul.mubr.f32.gmra.mrb[0].mxu0 %v3676
      %v4300 = vpop.f32.mrb[0].mxu0
      %v4301 = vadd.f32 %v4076, %v4300
      %v4302 = vpop.f32.mrb[0].mxu0
      %4303 = vmatprep.mubr.f32.mxu0 %v3682
      %4304 = vmatmul.mubr.f32.gmra.mrb[0].mxu0 %v3681
      %v4305 = vpop.f32.mrb[0].mxu0
      %v4306 = vadd.f32 %v4081, %v4305
      %v4307 = vpop.f32.mrb[0].mxu0
      %4308 = vmatprep.mubr.f32.mxu0 %v3687
      %4309 = vmatmul.mubr.f32.gmra.mrb[0].mxu0 %v3686
      %v4310 = vpop.f32.mrb[0].mxu0
      %v4311 = vadd.f32 %v4086, %v4310
      %v4312 = vpop.f32.mrb[0].mxu0
      %4313 = vmatprep.mubr.f32.mxu0 %v3692
      %4314 = vmatmul.mubr.f32.gmra.mrb[0].mxu0 %v3691
      %v4315 = vpop.f32.mrb[0].mxu0
      %v4316 = vadd.f32 %v4091, %v4315
      %v4317 = vpop.f32.mrb[0].mxu0
      %4318 = vmatprep.mubr.f32.mxu0 %v3697
      %4319 = vmatmul.mubr.f32.gmra.mrb[0].mxu0 %v3696
      %v4320 = vpop.f32.mrb[0].mxu0
      %v4321 = vadd.f32 %v4096, %v4320
      %v4322 = vpop.f32.mrb[0].mxu0
      %4323 = vmatprep.mubr.f32.mxu0 %v3702
      %4324 = vmatmul.mubr.f32.gmra.mrb[0].mxu0 %v3701
      %v4325 = vpop.f32.mrb[0].mxu0
      %v4326 = vadd.f32 %v4101, %v4325
      %v4327 = vpop.f32.mrb[0].mxu0
      %4328 = vmatprep.mubr.f32.mxu0 %v3707
      %4329 = vmatmul.mubr.f32.gmra.mrb[0].mxu0 %v3706
      %v4330 = vpop.f32.mrb[0].mxu0
      %v4331 = vadd.f32 %v4106, %v4330
      %v4332 = vpop.f32.mrb[0].mxu0
      %4333 = vmatprep.mubr.f32.mxu0 %v3712
      %4334 = vmatmul.mubr.f32.gmra.mrb[0].mxu0 %v3711
      %v4335 = vpop.f32.mrb[0].mxu0
      %v4336 = vadd.f32 %v4111, %v4335
      %v4337 = vpop.f32.mrb[0].mxu0
      %4338 = vmatprep.mubr.f32.mxu0 %v3717
      %4339 = vmatmul.mubr.f32.gmra.mrb[0].mxu0 %v3716
      %v4340 = vpop.f32.mrb[0].mxu0
      %v4341 = vadd.f32 %v4116, %v4340
      %v4342 = vpop.f32.mrb[0].mxu0
      %4343 = vmatprep.mubr.f32.mxu0 %v3722
      %4344 = vmatmul.mubr.f32.gmra.mrb[0].mxu0 %v3721
      %v4345 = vpop.f32.mrb[0].mxu0
      %v4346 = vadd.f32 %v4121, %v4345
      %v4347 = vpop.f32.mrb[0].mxu0
      %4348 = vmatprep.mubr.f32.mxu0 %v3727
      %4349 = vmatmul.mubr.f32.gmra.mrb[0].mxu0 %v3726
      %v4350 = vpop.f32.mrb[0].mxu0
      %v4351 = vadd.f32 %v4126, %v4350
      %v4352 = vpop.f32.mrb[0].mxu0
      %4353 = vmatprep.mubr.f32.mxu0 %v3732
      %4354 = vmatmul.mubr.f32.gmra.mrb[0].mxu0 %v3731
      %v4355 = vpop.f32.mrb[0].mxu0
      %v4356 = vadd.f32 %v4131, %v4355
      %v4357 = vpop.f32.mrb[0].mxu0
      %4358 = vmatprep.mubr.f32.mxu0 %v3737
      %4359 = vmatmul.mubr.f32.gmra.mrb[0].mxu0 %v3736
      %v4360 = vpop.f32.mrb[0].mxu0
      %v4361 = vadd.f32 %v4136, %v4360
      %v4362 = vpop.f32.mrb[0].mxu0
      %4363 = vmatprep.mubr.f32.mxu0 %v3742
      %4364 = vmatmul.mubr.f32.gmra.mrb[0].mxu0 %v3741
      %v4365 = vpop.f32.mrb[0].mxu0
      %v4366 = vadd.f32 %v4141, %v4365
      %v4367 = vpop.f32.mrb[0].mxu0
      %4368 = vmatprep.mubr.f32.mxu0 %v3747
      %4369 = vmatmul.mubr.f32.gmra.mrb[0].mxu0 %v3746
      %v4370 = vpop.f32.mrb[0].mxu0
      %v4371 = vadd.f32 %v4146, %v4370
      %v4372 = vpop.f32.mrb[0].mxu0
      %4373 = vmatprep.mubr.f32.mxu0 %v3752
      %4374 = vmatmul.mubr.f32.gmra.mrb[0].mxu0 %v3751
      %v4375 = vpop.f32.mrb[0].mxu0
      %v4376 = vadd.f32 %v4151, %v4375
      %v4377 = vpop.f32.mrb[0].mxu0
      %4378 = vmatprep.mubr.f32.mxu0 %v3757
      %4379 = vmatmul.mubr.f32.gmra.mrb[0].mxu0 %v3756
      %v4380 = vpop.f32.mrb[0].mxu0
      %v4381 = vadd.f32 %v4156, %v4380
      %v4382 = vpop.f32.mrb[0].mxu0
      %4383 = vmatprep.mubr.f32.mxu0 %v3762
      %4384 = vmatmul.mubr.f32.gmra.mrb[0].mxu0 %v3761
      %v4385 = vpop.f32.mrb[0].mxu0
      %v4386 = vadd.f32 %v4161, %v4385
      %v4387 = vpop.f32.mrb[0].mxu0
      %4388 = vmatprep.mubr.f32.mxu0 %v3767
      %4389 = vmatmul.mubr.f32.gmra.mrb[0].mxu0 %v3766
      %v4390 = vpop.f32.mrb[0].mxu0
      %v4391 = vadd.f32 %v4166, %v4390
      %v4392 = vpop.f32.mrb[0].mxu0
      %4393 = vmatprep.mubr.f32.mxu0 %v3772
      %4394 = vmatmul.mubr.f32.gmra.mrb[0].mxu0 %v3771
      %v4395 = vpop.f32.mrb[0].mxu0
      %v4396 = vadd.f32 %v4171, %v4395
      %v4397 = vpop.f32.mrb[0].mxu0
      %4398 = vmatprep.mubr.f32.mxu0 %v3777
      %4399 = vmatmul.mubr.f32.gmra.mrb[0].mxu0 %v3776
      %v4400 = vpop.f32.mrb[0].mxu0
      %v4401 = vadd.f32 %v4176, %v4400
      %v4402 = vpop.f32.mrb[0].mxu0
      %4403 = vmatprep.mubr.f32.mxu0 %v3782
      %4404 = vmatmul.mubr.f32.gmra.mrb[0].mxu0 %v3781
      %v4405 = vpop.f32.mrb[0].mxu0
      %v4406 = vadd.f32 %v4181, %v4405
      %v4407 = vpop.f32.mrb[0].mxu0
      %4408 = vmatprep.mubr.f32.mxu0 %v3787
      %4409 = vmatmul.mubr.f32.gmra.mrb[0].mxu0 %v3786
      %v4410 = vpop.f32.mrb[0].mxu0
      %v4411 = vadd.f32 %v4186, %v4410
      %v4412 = vpop.f32.mrb[0].mxu0
      %4413 = vmatprep.mubr.f32.mxu0 %v3792
      %4414 = vmatmul.mubr.f32.gmra.mrb[0].mxu0 %v3791
      %v4415 = vpop.f32.mrb[0].mxu0
      %v4416 = vadd.f32 %v4191, %v4415
      %v4417 = vpop.f32.mrb[0].mxu0
      %4418 = vmatprep.mubr.f32.mxu0 %v3797
      %4419 = vmatmul.mubr.f32.gmra.mrb[0].mxu0 %v3796
      %v4420 = vpop.f32.mrb[0].mxu0
      %v4421 = vadd.f32 %v4196, %v4420
      %v4422 = vpop.f32.mrb[0].mxu0
      %4423 = vdwg.mxu0
      %4424 = vmatprep.subr.mxu0 0.0
      %4425 = vmatpush1.msra.mxu0 %v3863
      %4426 = vmatprep.subr.mxu0 0.0
      %4427 = vmatpush1.msra.mxu0 %v3864
      %4428 = vmatprep.subr.mxu0 0.0
      %4429 = vmatpush1.msra.mxu0 %v3865
      %4430 = vmatprep.subr.mxu0 0.0
      %4431 = vmatpush1.msra.mxu0 %v3866
      %4432 = vmatprep.subr.mxu0 0.0
      %4433 = vmatpush1.msra.mxu0 %v3867
      %4434 = vmatprep.subr.mxu0 0.0
      %4435 = vmatpush1.msra.mxu0 %v3868
      %4436 = vmatprep.subr.mxu0 0.0
      %4437 = vmatpush1.msra.mxu0 %v3869
      %4438 = vmatprep.subr.mxu0 0.0
      %4439 = vmatpush1.msra.mxu0 %v3870
      %4440 = vmatprep.subr.mxu0 0.0
      %4441 = vmatpush1.msra.mxu0 0.0
      %4442 = vmatprep.subr.mxu0 0.0
      %4443 = vmatpush1.msra.mxu0 0.0
      %4444 = vmatprep.subr.mxu0 0.0
      %4445 = vmatpush1.msra.mxu0 0.0
      %4446 = vmatprep.subr.mxu0 0.0
      %4447 = vmatpush1.msra.mxu0 0.0
      %4448 = vmatprep.subr.mxu0 0.0
      %4449 = vmatpush1.msra.mxu0 0.0
      %4450 = vmatprep.subr.mxu0 0.0
      %4451 = vmatpush1.msra.mxu0 0.0
      %4452 = vmatprep.subr.mxu0 0.0
      %4453 = vmatpush1.msra.mxu0 0.0
      %4454 = vmatprep.subr.mxu0 0.0
      %4455 = vmatpush1.msra.mxu0 0.0
      %4456 = vmatprep.subr.mxu0 0.0
      %4457 = vmatpush1.msra.mxu0 0.0
      %4458 = vmatprep.subr.mxu0 0.0
      %4459 = vmatpush1.msra.mxu0 0.0
      %4460 = vmatprep.subr.mxu0 0.0
      %4461 = vmatpush1.msra.mxu0 0.0
      %4462 = vmatprep.subr.mxu0 0.0
      %4463 = vmatpush1.msra.mxu0 0.0
      %4464 = vmatprep.subr.mxu0 0.0
      %4465 = vmatpush1.msra.mxu0 0.0
      %4466 = vmatprep.subr.mxu0 0.0
      %4467 = vmatpush1.msra.mxu0 0.0
      %4468 = vmatprep.subr.mxu0 0.0
      %4469 = vmatpush1.msra.mxu0 0.0
      %4470 = vmatprep.subr.mxu0 0.0
      %4471 = vmatpush1.msra.mxu0 0.0
      %4472 = vmatprep.subr.mxu0 0.0
      %4473 = vmatpush1.msra.mxu0 0.0
      %4474 = vmatprep.subr.mxu0 0.0
      %4475 = vmatpush1.msra.mxu0 0.0
      %4476 = vmatprep.subr.mxu0 0.0
      %4477 = vmatpush1.msra.mxu0 0.0
      %4478 = vmatprep.subr.mxu0 0.0
      %4479 = vmatpush1.msra.mxu0 0.0
      %4480 = vmatprep.subr.mxu0 0.0
      %4481 = vmatpush1.msra.mxu0 0.0
      %4482 = vmatprep.subr.mxu0 0.0
      %4483 = vmatpush1.msra.mxu0 0.0
      %4484 = vmatprep.subr.mxu0 0.0
      %4485 = vmatpush1.msra.mxu0 0.0
      %4486 = vmatprep.subr.mxu0 0.0
      %4487 = vmatpush1.msra.mxu0 0.0
      %4488 = vmatprep.mubr.f32.mxu0 0.0
      %4489 = vmatmul.mubr.f32.gmra.mrb[0].mxu0 %v3879
      %v4490 = vpop.f32.mrb[0].mxu0
      %v4491 = vadd.f32 %v4266, %v4490
      %v4492 = vpop.f32.mrb[0].mxu0
      %4493 = vmatprep.mubr.f32.mxu0 0.0
      %4494 = vmatmul.mubr.f32.gmra.mrb[0].mxu0 %v3882
      %v4495 = vpop.f32.mrb[0].mxu0
      %v4496 = vadd.f32 %v4271, %v4495
      %v4497 = vpop.f32.mrb[0].mxu0
      %4498 = vmatprep.mubr.f32.mxu0 0.0
      %4499 = vmatmul.mubr.f32.gmra.mrb[0].mxu0 %v3885
      %v4500 = vpop.f32.mrb[0].mxu0
      %v4501 = vadd.f32 %v4276, %v4500
      %v4502 = vpop.f32.mrb[0].mxu0
      %4503 = vmatprep.mubr.f32.mxu0 0.0
      %4504 = vmatmul.mubr.f32.gmra.mrb[0].mxu0 %v3888
      %v4505 = vpop.f32.mrb[0].mxu0
      %v4506 = vadd.f32 %v4281, %v4505
      %v4507 = vpop.f32.mrb[0].mxu0
      %4508 = vmatprep.mubr.f32.mxu0 0.0
      %4509 = vmatmul.mubr.f32.gmra.mrb[0].mxu0 %v3891
      %v4510 = vpop.f32.mrb[0].mxu0
      %v4511 = vadd.f32 %v4286, %v4510
      %v4512 = vpop.f32.mrb[0].mxu0
      %4513 = vmatprep.mubr.f32.mxu0 0.0
      %4514 = vmatmul.mubr.f32.gmra.mrb[0].mxu0 %v3894
      %v4515 = vpop.f32.mrb[0].mxu0
      %v4516 = vadd.f32 %v4291, %v4515
      %v4517 = vpop.f32.mrb[0].mxu0
      %4518 = vmatprep.mubr.f32.mxu0 0.0
      %4519 = vmatmul.mubr.f32.gmra.mrb[0].mxu0 %v3897
      %v4520 = vpop.f32.mrb[0].mxu0
      %v4521 = vadd.f32 %v4296, %v4520
      %v4522 = vpop.f32.mrb[0].mxu0
      %4523 = vmatprep.mubr.f32.mxu0 0.0
      %4524 = vmatmul.mubr.f32.gmra.mrb[0].mxu0 %v3900
      %v4525 = vpop.f32.mrb[0].mxu0
      %v4526 = vadd.f32 %v4301, %v4525
      %v4527 = vpop.f32.mrb[0].mxu0
      %4528 = vmatprep.mubr.f32.mxu0 0.0
      %4529 = vmatmul.mubr.f32.gmra.mrb[0].mxu0 %v3903
      %v4530 = vpop.f32.mrb[0].mxu0
      %v4531 = vadd.f32 %v4306, %v4530
      %v4532 = vpop.f32.mrb[0].mxu0
      %4533 = vmatprep.mubr.f32.mxu0 0.0
      %4534 = vmatmul.mubr.f32.gmra.mrb[0].mxu0 %v3906
      %v4535 = vpop.f32.mrb[0].mxu0
      %v4536 = vadd.f32 %v4311, %v4535
      %v4537 = vpop.f32.mrb[0].mxu0
      %4538 = vmatprep.mubr.f32.mxu0 0.0
      %4539 = vmatmul.mubr.f32.gmra.mrb[0].mxu0 %v3909
      %v4540 = vpop.f32.mrb[0].mxu0
      %v4541 = vadd.f32 %v4316, %v4540
      %v4542 = vpop.f32.mrb[0].mxu0
      %4543 = vmatprep.mubr.f32.mxu0 0.0
      %4544 = vmatmul.mubr.f32.gmra.mrb[0].mxu0 %v3912
      %v4545 = vpop.f32.mrb[0].mxu0
      %v4546 = vadd.f32 %v4321, %v4545
      %v4547 = vpop.f32.mrb[0].mxu0
      %4548 = vmatprep.mubr.f32.mxu0 0.0
      %4549 = vmatmul.mubr.f32.gmra.mrb[0].mxu0 %v3915
      %v4550 = vpop.f32.mrb[0].mxu0
      %v4551 = vadd.f32 %v4326, %v4550
      %v4552 = vpop.f32.mrb[0].mxu0
      %4553 = vmatprep.mubr.f32.mxu0 0.0
      %4554 = vmatmul.mubr.f32.gmra.mrb[0].mxu0 %v3918
      %v4555 = vpop.f32.mrb[0].mxu0
      %v4556 = vadd.f32 %v4331, %v4555
      %v4557 = vpop.f32.mrb[0].mxu0
      %4558 = vmatprep.mubr.f32.mxu0 0.0
      %4559 = vmatmul.mubr.f32.gmra.mrb[0].mxu0 %v3921
      %v4560 = vpop.f32.mrb[0].mxu0
      %v4561 = vadd.f32 %v4336, %v4560
      %v4562 = vpop.f32.mrb[0].mxu0
      %4563 = vmatprep.mubr.f32.mxu0 0.0
      %4564 = vmatmul.mubr.f32.gmra.mrb[0].mxu0 %v3924
      %v4565 = vpop.f32.mrb[0].mxu0
      %v4566 = vadd.f32 %v4341, %v4565
      %v4567 = vpop.f32.mrb[0].mxu0
      %4568 = vmatprep.mubr.f32.mxu0 0.0
      %4569 = vmatmul.mubr.f32.gmra.mrb[0].mxu0 %v3927
      %v4570 = vpop.f32.mrb[0].mxu0
      %v4571 = vadd.f32 %v4346, %v4570
      %v4572 = vpop.f32.mrb[0].mxu0
      %4573 = vmatprep.mubr.f32.mxu0 0.0
      %4574 = vmatmul.mubr.f32.gmra.mrb[0].mxu0 %v3930
      %v4575 = vpop.f32.mrb[0].mxu0
      %v4576 = vadd.f32 %v4351, %v4575
      %v4577 = vpop.f32.mrb[0].mxu0
      %4578 = vmatprep.mubr.f32.mxu0 0.0
      %4579 = vmatmul.mubr.f32.gmra.mrb[0].mxu0 %v3933
      %v4580 = vpop.f32.mrb[0].mxu0
      %v4581 = vadd.f32 %v4356, %v4580
      %v4582 = vpop.f32.mrb[0].mxu0
      %4583 = vmatprep.mubr.f32.mxu0 0.0
      %4584 = vmatmul.mubr.f32.gmra.mrb[0].mxu0 %v3936
      %v4585 = vpop.f32.mrb[0].mxu0
      %v4586 = vadd.f32 %v4361, %v4585
      %v4587 = vpop.f32.mrb[0].mxu0
      %4588 = vmatprep.mubr.f32.mxu0 0.0
      %4589 = vmatmul.mubr.f32.gmra.mrb[0].mxu0 %v3939
      %v4590 = vpop.f32.mrb[0].mxu0
      %v4591 = vadd.f32 %v4366, %v4590
      %v4592 = vpop.f32.mrb[0].mxu0
      %4593 = vmatprep.mubr.f32.mxu0 0.0
      %4594 = vmatmul.mubr.f32.gmra.mrb[0].mxu0 %v3942
      %v4595 = vpop.f32.mrb[0].mxu0
      %v4596 = vadd.f32 %v4371, %v4595
      %v4597 = vpop.f32.mrb[0].mxu0
      %4598 = vmatprep.mubr.f32.mxu0 0.0
      %4599 = vmatmul.mubr.f32.gmra.mrb[0].mxu0 %v3945
      %v4600 = vpop.f32.mrb[0].mxu0
      %v4601 = vadd.f32 %v4376, %v4600
      %v4602 = vpop.f32.mrb[0].mxu0
      %4603 = vmatprep.mubr.f32.mxu0 0.0
      %4604 = vmatmul.mubr.f32.gmra.mrb[0].mxu0 %v3948
      %v4605 = vpop.f32.mrb[0].mxu0
      %v4606 = vadd.f32 %v4381, %v4605
      %v4607 = vpop.f32.mrb[0].mxu0
      %4608 = vmatprep.mubr.f32.mxu0 0.0
      %4609 = vmatmul.mubr.f32.gmra.mrb[0].mxu0 %v3951
      %v4610 = vpop.f32.mrb[0].mxu0
      %v4611 = vadd.f32 %v4386, %v4610
      %v4612 = vpop.f32.mrb[0].mxu0
      %4613 = vmatprep.mubr.f32.mxu0 0.0
      %4614 = vmatmul.mubr.f32.gmra.mrb[0].mxu0 %v3954
      %v4615 = vpop.f32.mrb[0].mxu0
      %v4616 = vadd.f32 %v4391, %v4615
      %v4617 = vpop.f32.mrb[0].mxu0
      %4618 = vmatprep.mubr.f32.mxu0 0.0
      %4619 = vmatmul.mubr.f32.gmra.mrb[0].mxu0 %v3957
      %v4620 = vpop.f32.mrb[0].mxu0
      %v4621 = vadd.f32 %v4396, %v4620
      %v4622 = vpop.f32.mrb[0].mxu0
      %4623 = vmatprep.mubr.f32.mxu0 0.0
      %4624 = vmatmul.mubr.f32.gmra.mrb[0].mxu0 %v3960
      %v4625 = vpop.f32.mrb[0].mxu0
      %v4626 = vadd.f32 %v4401, %v4625
      %v4627 = vpop.f32.mrb[0].mxu0
      %4628 = vmatprep.mubr.f32.mxu0 0.0
      %4629 = vmatmul.mubr.f32.gmra.mrb[0].mxu0 %v3963
      %v4630 = vpop.f32.mrb[0].mxu0
      %v4631 = vadd.f32 %v4406, %v4630
      %v4632 = vpop.f32.mrb[0].mxu0
      %4633 = vmatprep.mubr.f32.mxu0 0.0
      %4634 = vmatmul.mubr.f32.gmra.mrb[0].mxu0 %v3966
      %v4635 = vpop.f32.mrb[0].mxu0
      %v4636 = vadd.f32 %v4411, %v4635
      %v4637 = vpop.f32.mrb[0].mxu0
      %4638 = vmatprep.mubr.f32.mxu0 0.0
      %4639 = vmatmul.mubr.f32.gmra.mrb[0].mxu0 %v3969
      %v4640 = vpop.f32.mrb[0].mxu0
      %v4641 = vadd.f32 %v4416, %v4640
      %v4642 = vpop.f32.mrb[0].mxu0
      %4643 = vmatprep.mubr.f32.mxu0 0.0
      %4644 = vmatmul.mubr.f32.gmra.mrb[0].mxu0 %v3972
      %v4645 = vpop.f32.mrb[0].mxu0
      %v4646 = vadd.f32 %v4421, %v4645
      %v4647 = vpop.f32.mrb[0].mxu0
      %4648 = vdwg.mxu0
      %v4649 = vld [vmem:[%s5] sm:$0xff]
      %v4650 = vld [vmem:[%s5 + $0x8] sm:$0xff]
      %v4651 = vld [vmem:[%s5 + $0x10] sm:$0xff]
      %v4652 = vld [vmem:[%s5 + $0x18] sm:$0xff]
      %v4653 = vld [vmem:[#allocation4] sm:$0x1]
      %v4655 = vlaneseq
      %v4656 = vshrl.u32 %v4655, 7
      %v4657 = vsub.s32 0, %v4656
      %v4658 = vrot.slane %v4653, %v4657
      %vm4660 = vcmask 261120
      %v4662 = vsel %vm4660, %v4491, 0
      %v4665 = vsel %vm4660, %v4496, 0
      %v4668 = vsel %vm4660, %v4501, 0
      %v4671 = vsel %vm4660, %v4506, 0
      %v4674 = vsel %vm4660, %v4511, 0
      %v4677 = vsel %vm4660, %v4516, 0
      %v4680 = vsel %vm4660, %v4521, 0
      %v4683 = vsel %vm4660, %v4526, 0
      %v4686 = vsel %vm4660, %v4531, 0
      %v4689 = vsel %vm4660, %v4536, 0
      %v4692 = vsel %vm4660, %v4541, 0
      %v4695 = vsel %vm4660, %v4546, 0
      %v4698 = vsel %vm4660, %v4551, 0
      %v4701 = vsel %vm4660, %v4556, 0
      %v4704 = vsel %vm4660, %v4561, 0
      %v4707 = vsel %vm4660, %v4566, 0
      %v4710 = vsel %vm4660, %v4571, 0
      %v4713 = vsel %vm4660, %v4576, 0
      %v4716 = vsel %vm4660, %v4581, 0
      %v4719 = vsel %vm4660, %v4586, 0
      %v4722 = vsel %vm4660, %v4591, 0
      %v4725 = vsel %vm4660, %v4596, 0
      %v4728 = vsel %vm4660, %v4601, 0
      %v4731 = vsel %vm4660, %v4606, 0
      %v4734 = vsel %vm4660, %v4611, 0
      %v4737 = vsel %vm4660, %v4616, 0
      %v4740 = vsel %vm4660, %v4621, 0
      %v4743 = vsel %vm4660, %v4626, 0
      %v4746 = vsel %vm4660, %v4631, 0
      %v4749 = vsel %vm4660, %v4636, 0
      %v4752 = vsel %vm4660, %v4641, 0
      %v4755 = vsel %vm4660, %v4646, 0
      %4757 = vmatprep.subr.mxu0 0.0
      %4758 = vmatpush1.msra.mxu0 %v4649
      %4759 = vmatprep.subr.mxu0 0.0
      %4760 = vmatpush1.msra.mxu0 %v4650
      %4761 = vmatprep.subr.mxu0 0.0
      %4762 = vmatpush1.msra.mxu0 %v4651
      %4763 = vmatprep.subr.mxu0 0.0
      %4764 = vmatpush1.msra.mxu0 %v4652
      %4765 = vmatprep.subr.mxu0 0.0
      %4766 = vmatpush1.msra.mxu0 0.0
      %4767 = vmatprep.subr.mxu0 0.0
      %4768 = vmatpush1.msra.mxu0 0.0
      %4769 = vmatprep.subr.mxu0 0.0
      %4770 = vmatpush1.msra.mxu0 0.0
      %4771 = vmatprep.subr.mxu0 0.0
      %4772 = vmatpush1.msra.mxu0 0.0
      %4773 = vmatprep.subr.mxu0 0.0
      %4774 = vmatpush1.msra.mxu0 0.0
      %4775 = vmatprep.subr.mxu0 0.0
      %4776 = vmatpush1.msra.mxu0 0.0
      %4777 = vmatprep.subr.mxu0 0.0
      %4778 = vmatpush1.msra.mxu0 0.0
      %4779 = vmatprep.subr.mxu0 0.0
      %4780 = vmatpush1.msra.mxu0 0.0
      %4781 = vmatprep.subr.mxu0 0.0
      %4782 = vmatpush1.msra.mxu0 0.0
      %4783 = vmatprep.subr.mxu0 0.0
      %4784 = vmatpush1.msra.mxu0 0.0
      %4785 = vmatprep.subr.mxu0 0.0
      %4786 = vmatpush1.msra.mxu0 0.0
      %4787 = vmatprep.subr.mxu0 0.0
      %4788 = vmatpush1.msra.mxu0 0.0
      %4789 = vmatprep.subr.mxu0 0.0
      %4790 = vmatpush1.msra.mxu0 0.0
      %4791 = vmatprep.subr.mxu0 0.0
      %4792 = vmatpush1.msra.mxu0 0.0
      %4793 = vmatprep.subr.mxu0 0.0
      %4794 = vmatpush1.msra.mxu0 0.0
      %4795 = vmatprep.subr.mxu0 0.0
      %4796 = vmatpush1.msra.mxu0 0.0
      %4797 = vmatprep.subr.mxu0 0.0
      %4798 = vmatpush1.msra.mxu0 0.0
      %4799 = vmatprep.subr.mxu0 0.0
      %4800 = vmatpush1.msra.mxu0 0.0
      %4801 = vmatprep.subr.mxu0 0.0
      %4802 = vmatpush1.msra.mxu0 0.0
      %4803 = vmatprep.subr.mxu0 0.0
      %4804 = vmatpush1.msra.mxu0 0.0
      %4805 = vmatprep.subr.mxu0 0.0
      %4806 = vmatpush1.msra.mxu0 0.0
      %4807 = vmatprep.subr.mxu0 0.0
      %4808 = vmatpush1.msra.mxu0 0.0
      %4809 = vmatprep.subr.mxu0 0.0
      %4810 = vmatpush1.msra.mxu0 0.0
      %4811 = vmatprep.subr.mxu0 0.0
      %4812 = vmatpush1.msra.mxu0 0.0
      %4813 = vmatprep.subr.mxu0 0.0
      %4814 = vmatpush1.msra.mxu0 0.0
      %4815 = vmatprep.subr.mxu0 0.0
      %4816 = vmatpush1.msra.mxu0 0.0
      %4817 = vmatprep.subr.mxu0 0.0
      %4818 = vmatpush1.msra.mxu0 0.0
      %4819 = vmatprep.subr.mxu0 0.0
      %4820 = vmatpush1.msra.mxu0 0.0
      %4821 = vmatprep.mubr.f32.mxu0 0.0
      %4822 = vmatmul.mubr.f32.gmra.mrb[0].mxu0 %v4662
      %v4823 = vpop.f32.mrb[0].mxu0
      %v4824 = vadd.f32 %v4658, %v4823
      %v4825 = vpop.f32.mrb[0].mxu0
      %4826 = vmatprep.mubr.f32.mxu0 0.0
      %4827 = vmatmul.mubr.f32.gmra.mrb[0].mxu0 %v4665
      %v4828 = vpop.f32.mrb[0].mxu0
      %v4829 = vadd.f32 %v4658, %v4828
      %v4830 = vpop.f32.mrb[0].mxu0
      %4831 = vmatprep.mubr.f32.mxu0 0.0
      %4832 = vmatmul.mubr.f32.gmra.mrb[0].mxu0 %v4668
      %v4833 = vpop.f32.mrb[0].mxu0
      %v4834 = vadd.f32 %v4658, %v4833
      %v4835 = vpop.f32.mrb[0].mxu0
      %4836 = vmatprep.mubr.f32.mxu0 0.0
      %4837 = vmatmul.mubr.f32.gmra.mrb[0].mxu0 %v4671
      %v4838 = vpop.f32.mrb[0].mxu0
      %v4839 = vadd.f32 %v4658, %v4838
      %v4840 = vpop.f32.mrb[0].mxu0
      %4841 = vmatprep.mubr.f32.mxu0 0.0
      %4842 = vmatmul.mubr.f32.gmra.mrb[0].mxu0 %v4674
      %v4843 = vpop.f32.mrb[0].mxu0
      %v4844 = vadd.f32 %v4658, %v4843
      %v4845 = vpop.f32.mrb[0].mxu0
      %4846 = vmatprep.mubr.f32.mxu0 0.0
      %4847 = vmatmul.mubr.f32.gmra.mrb[0].mxu0 %v4677
      %v4848 = vpop.f32.mrb[0].mxu0
      %v4849 = vadd.f32 %v4658, %v4848
      %v4850 = vpop.f32.mrb[0].mxu0
      %4851 = vmatprep.mubr.f32.mxu0 0.0
      %4852 = vmatmul.mubr.f32.gmra.mrb[0].mxu0 %v4680
      %v4853 = vpop.f32.mrb[0].mxu0
      %v4854 = vadd.f32 %v4658, %v4853
      %v4855 = vpop.f32.mrb[0].mxu0
      %4856 = vmatprep.mubr.f32.mxu0 0.0
      %4857 = vmatmul.mubr.f32.gmra.mrb[0].mxu0 %v4683
      %v4858 = vpop.f32.mrb[0].mxu0
      %v4859 = vadd.f32 %v4658, %v4858
      %v4860 = vpop.f32.mrb[0].mxu0
      %4861 = vmatprep.mubr.f32.mxu0 0.0
      %4862 = vmatmul.mubr.f32.gmra.mrb[0].mxu0 %v4686
      %v4863 = vpop.f32.mrb[0].mxu0
      %v4864 = vadd.f32 %v4658, %v4863
      %v4865 = vpop.f32.mrb[0].mxu0
      %4866 = vmatprep.mubr.f32.mxu0 0.0
      %4867 = vmatmul.mubr.f32.gmra.mrb[0].mxu0 %v4689
      %v4868 = vpop.f32.mrb[0].mxu0
      %v4869 = vadd.f32 %v4658, %v4868
      %v4870 = vpop.f32.mrb[0].mxu0
      %4871 = vmatprep.mubr.f32.mxu0 0.0
      %4872 = vmatmul.mubr.f32.gmra.mrb[0].mxu0 %v4692
      %v4873 = vpop.f32.mrb[0].mxu0
      %v4874 = vadd.f32 %v4658, %v4873
      %v4875 = vpop.f32.mrb[0].mxu0
      %4876 = vmatprep.mubr.f32.mxu0 0.0
      %4877 = vmatmul.mubr.f32.gmra.mrb[0].mxu0 %v4695
      %v4878 = vpop.f32.mrb[0].mxu0
      %v4879 = vadd.f32 %v4658, %v4878
      %v4880 = vpop.f32.mrb[0].mxu0
      %4881 = vmatprep.mubr.f32.mxu0 0.0
      %4882 = vmatmul.mubr.f32.gmra.mrb[0].mxu0 %v4698
      %v4883 = vpop.f32.mrb[0].mxu0
      %v4884 = vadd.f32 %v4658, %v4883
      %v4885 = vpop.f32.mrb[0].mxu0
      %4886 = vmatprep.mubr.f32.mxu0 0.0
      %4887 = vmatmul.mubr.f32.gmra.mrb[0].mxu0 %v4701
      %v4888 = vpop.f32.mrb[0].mxu0
      %v4889 = vadd.f32 %v4658, %v4888
      %v4890 = vpop.f32.mrb[0].mxu0
      %4891 = vmatprep.mubr.f32.mxu0 0.0
      %4892 = vmatmul.mubr.f32.gmra.mrb[0].mxu0 %v4704
      %v4893 = vpop.f32.mrb[0].mxu0
      %v4894 = vadd.f32 %v4658, %v4893
      %v4895 = vpop.f32.mrb[0].mxu0
      %4896 = vmatprep.mubr.f32.mxu0 0.0
      %4897 = vmatmul.mubr.f32.gmra.mrb[0].mxu0 %v4707
      %v4898 = vpop.f32.mrb[0].mxu0
      %v4899 = vadd.f32 %v4658, %v4898
      %v4900 = vpop.f32.mrb[0].mxu0
      %4901 = vmatprep.mubr.f32.mxu0 0.0
      %4902 = vmatmul.mubr.f32.gmra.mrb[0].mxu0 %v4710
      %v4903 = vpop.f32.mrb[0].mxu0
      %v4904 = vadd.f32 %v4658, %v4903
      %v4905 = vpop.f32.mrb[0].mxu0
      %4906 = vmatprep.mubr.f32.mxu0 0.0
      %4907 = vmatmul.mubr.f32.gmra.mrb[0].mxu0 %v4713
      %v4908 = vpop.f32.mrb[0].mxu0
      %v4909 = vadd.f32 %v4658, %v4908
      %v4910 = vpop.f32.mrb[0].mxu0
      %4911 = vmatprep.mubr.f32.mxu0 0.0
      %4912 = vmatmul.mubr.f32.gmra.mrb[0].mxu0 %v4716
      %v4913 = vpop.f32.mrb[0].mxu0
      %v4914 = vadd.f32 %v4658, %v4913
      %v4915 = vpop.f32.mrb[0].mxu0
      %4916 = vmatprep.mubr.f32.mxu0 0.0
      %4917 = vmatmul.mubr.f32.gmra.mrb[0].mxu0 %v4719
      %v4918 = vpop.f32.mrb[0].mxu0
      %v4919 = vadd.f32 %v4658, %v4918
      %v4920 = vpop.f32.mrb[0].mxu0
      %4921 = vmatprep.mubr.f32.mxu0 0.0
      %4922 = vmatmul.mubr.f32.gmra.mrb[0].mxu0 %v4722
      %v4923 = vpop.f32.mrb[0].mxu0
      %v4924 = vadd.f32 %v4658, %v4923
      %v4925 = vpop.f32.mrb[0].mxu0
      %4926 = vmatprep.mubr.f32.mxu0 0.0
      %4927 = vmatmul.mubr.f32.gmra.mrb[0].mxu0 %v4725
      %v4928 = vpop.f32.mrb[0].mxu0
      %v4929 = vadd.f32 %v4658, %v4928
      %v4930 = vpop.f32.mrb[0].mxu0
      %4931 = vmatprep.mubr.f32.mxu0 0.0
      %4932 = vmatmul.mubr.f32.gmra.mrb[0].mxu0 %v4728
      %v4933 = vpop.f32.mrb[0].mxu0
      %v4934 = vadd.f32 %v4658, %v4933
      %v4935 = vpop.f32.mrb[0].mxu0
      %4936 = vmatprep.mubr.f32.mxu0 0.0
      %4937 = vmatmul.mubr.f32.gmra.mrb[0].mxu0 %v4731
      %v4938 = vpop.f32.mrb[0].mxu0
      %v4939 = vadd.f32 %v4658, %v4938
      %v4940 = vpop.f32.mrb[0].mxu0
      %4941 = vmatprep.mubr.f32.mxu0 0.0
      %4942 = vmatmul.mubr.f32.gmra.mrb[0].mxu0 %v4734
      %v4943 = vpop.f32.mrb[0].mxu0
      %v4944 = vadd.f32 %v4658, %v4943
      %v4945 = vpop.f32.mrb[0].mxu0
      %4946 = vmatprep.mubr.f32.mxu0 0.0
      %4947 = vmatmul.mubr.f32.gmra.mrb[0].mxu0 %v4737
      %v4948 = vpop.f32.mrb[0].mxu0
      %v4949 = vadd.f32 %v4658, %v4948
      %v4950 = vpop.f32.mrb[0].mxu0
      %4951 = vmatprep.mubr.f32.mxu0 0.0
      %4952 = vmatmul.mubr.f32.gmra.mrb[0].mxu0 %v4740
      %v4953 = vpop.f32.mrb[0].mxu0
      %v4954 = vadd.f32 %v4658, %v4953
      %v4955 = vpop.f32.mrb[0].mxu0
      %4956 = vmatprep.mubr.f32.mxu0 0.0
      %4957 = vmatmul.mubr.f32.gmra.mrb[0].mxu0 %v4743
      %v4958 = vpop.f32.mrb[0].mxu0
      %v4959 = vadd.f32 %v4658, %v4958
      %v4960 = vpop.f32.mrb[0].mxu0
      %4961 = vmatprep.mubr.f32.mxu0 0.0
      %4962 = vmatmul.mubr.f32.gmra.mrb[0].mxu0 %v4746
      %v4963 = vpop.f32.mrb[0].mxu0
      %v4964 = vadd.f32 %v4658, %v4963
      %v4965 = vpop.f32.mrb[0].mxu0
      %4966 = vmatprep.mubr.f32.mxu0 0.0
      %4967 = vmatmul.mubr.f32.gmra.mrb[0].mxu0 %v4749
      %v4968 = vpop.f32.mrb[0].mxu0
      %v4969 = vadd.f32 %v4658, %v4968
      %v4970 = vpop.f32.mrb[0].mxu0
      %4971 = vmatprep.mubr.f32.mxu0 0.0
      %4972 = vmatmul.mubr.f32.gmra.mrb[0].mxu0 %v4752
      %v4973 = vpop.f32.mrb[0].mxu0
      %v4974 = vadd.f32 %v4658, %v4973
      %v4975 = vpop.f32.mrb[0].mxu0
      %4976 = vmatprep.mubr.f32.mxu0 0.0
      %4977 = vmatmul.mubr.f32.gmra.mrb[0].mxu0 %v4755
      %v4978 = vpop.f32.mrb[0].mxu0
      %v4979 = vadd.f32 %v4658, %v4978
      %v4980 = vpop.f32.mrb[0].mxu0
      %4981 = vdwg.mxu0
      %vm4982 = vcmask 7168
      %4983 = vst.msk [vmem:[%s280] sm:$0xff] %vm4982, %v4824
      %4984 = vst.msk [vmem:[%s280 + $0x8] sm:$0xff] %vm4982, %v4829
      %4985 = vst.msk [vmem:[%s280 + $0x10] sm:$0xff] %vm4982, %v4834
      %4986 = vst.msk [vmem:[%s280 + $0x18] sm:$0xff] %vm4982, %v4839
      %4987 = vst.msk [vmem:[%s280 + $0x20] sm:$0xff] %vm4982, %v4844
      %4988 = vst.msk [vmem:[%s280 + $0x28] sm:$0xff] %vm4982, %v4849
      %4989 = vst.msk [vmem:[%s280 + $0x30] sm:$0xff] %vm4982, %v4854
      %4990 = vst.msk [vmem:[%s280 + $0x38] sm:$0xff] %vm4982, %v4859
      %4991 = vst.msk [vmem:[%s280 + $0x40] sm:$0xff] %vm4982, %v4864
      %4992 = vst.msk [vmem:[%s280 + $0x48] sm:$0xff] %vm4982, %v4869
      %4993 = vst.msk [vmem:[%s280 + $0x50] sm:$0xff] %vm4982, %v4874
      %4994 = vst.msk [vmem:[%s280 + $0x58] sm:$0xff] %vm4982, %v4879
      %4995 = vst.msk [vmem:[%s280 + $0x60] sm:$0xff] %vm4982, %v4884
      %4996 = vst.msk [vmem:[%s280 + $0x68] sm:$0xff] %vm4982, %v4889
      %4997 = vst.msk [vmem:[%s280 + $0x70] sm:$0xff] %vm4982, %v4894
      %4998 = vst.msk [vmem:[%s280 + $0x78] sm:$0xff] %vm4982, %v4899
      %4999 = vst.msk [vmem:[%s280 + $0x80] sm:$0xff] %vm4982, %v4904
      %5000 = vst.msk [vmem:[%s280 + $0x88] sm:$0xff] %vm4982, %v4909
      %5001 = vst.msk [vmem:[%s280 + $0x90] sm:$0xff] %vm4982, %v4914
      %5002 = vst.msk [vmem:[%s280 + $0x98] sm:$0xff] %vm4982, %v4919
      %5003 = vst.msk [vmem:[%s280 + $0xa0] sm:$0xff] %vm4982, %v4924
      %5004 = vst.msk [vmem:[%s280 + $0xa8] sm:$0xff] %vm4982, %v4929
      %5005 = vst.msk [vmem:[%s280 + $0xb0] sm:$0xff] %vm4982, %v4934
      %5006 = vst.msk [vmem:[%s280 + $0xb8] sm:$0xff] %vm4982, %v4939
      %5007 = vst.msk [vmem:[%s280 + $0xc0] sm:$0xff] %vm4982, %v4944
      %5008 = vst.msk [vmem:[%s280 + $0xc8] sm:$0xff] %vm4982, %v4949
      %5009 = vst.msk [vmem:[%s280 + $0xd0] sm:$0xff] %vm4982, %v4954
      %5010 = vst.msk [vmem:[%s280 + $0xd8] sm:$0xff] %vm4982, %v4959
      %5011 = vst.msk [vmem:[%s280 + $0xe0] sm:$0xff] %vm4982, %v4964
      %5012 = vst.msk [vmem:[%s280 + $0xe8] sm:$0xff] %vm4982, %v4969
      %5013 = vst.msk [vmem:[%s280 + $0xf0] sm:$0xff] %vm4982, %v4974
      %5014 = vst.msk [vmem:[%s280 + $0xf8] sm:$0xff] %vm4982, %v4979
      %p5015 = scmp.lt.s32.totalorder %s20, 1
      %s5016 = scalar_select %p5015, %s20, 1
      %s5017 = smul.addr %s5016, 32
      %s5018 = smul.addr %s5017, 8
      %s5019 = scalar_lea.vmem %s7, %s5018
      // Predicated region
      $region49: #{tpu_custom_call.1} parent=47 // pred_check
        %p5020 = pneg %p190
      $region50: #{tpu_custom_call.1} parent=47 // pred_check_branch
        %5022 = sbr.rel (%p5020) target = $region52
      $region51: #{tpu_custom_call.1} parent=47 // pred_region
        _
      $region52: #{tpu_custom_call.1} parent=47 // pred_fallthru
        _
    $region48: #{tpu_custom_call.1} parent=5 // pred_fallthru
      _
    %p5023 = scmp.le.s32.totalorder 2, %s15
    // Predicated region
    $region53: #{tpu_custom_call.1} parent=5 // pred_check
      %p5024 = pneg %p5023
    $region54: #{tpu_custom_call.1} parent=5 // pred_check_branch
      %5026 = sbr.rel (%p5024) target = $region56
    $region55: #{tpu_custom_call.1} parent=5 // pred_region
      %s5027 = ssub.s32 %s15, 2
      // Predicated region
      $region57: #{tpu_custom_call.1} parent=55 // pred_check
        %p5028 = pneg %p196
      $region58: #{tpu_custom_call.1} parent=55 // pred_check_branch
        %5030 = sbr.rel (%p5028) target = $region60
      $region59: #{tpu_custom_call.1} parent=55 // pred_region
        %p5031 = scmp.lt.s32.totalorder %s21, 1
        %s5032 = scalar_select %p5031, %s21, 1
        %s5033 = smul.addr %s5032, 32
        %s5034 = smul.addr %s5033, 8
        %s5035 = scalar_lea.vmem %s7, %s5034
      $region60: #{tpu_custom_call.1} parent=55 // pred_fallthru
        _
    $region56: #{tpu_custom_call.1} parent=5 // pred_fallthru
      _
  $region6: #{tpu_custom_call.1} parent=0 // loop_footer
    %s19 = sadd.s32 1, %s15
  $region7: #{tpu_custom_call.1} parent=0 // loop_footer_branch
    %14 = sbr.rel target = $region3
  $region8: #{tpu_custom_call.1} parent=0 // loop_exit
    _

</llo_original>
